<compile_context>
chip_gen: v7x
topology: tpu7x:2x2x1
jax: 0.10.0
libtpu: 0.0.40
codegen_flags: <defaults>
</compile_context>

<pallas_src>
import math
from functools import partial

import jax
import jax.numpy as jnp
from jax.experimental import pallas as pl
from jax.experimental.pallas import tpu as pltpu

LOG2 = math.log(2.0)


def _ssp(x):
    # shifted softplus: softplus(x) - log(2), numerically stable; ssp(0) == 0
    return jnp.maximum(x, 0.0) + jnp.log1p(jnp.exp(-jnp.abs(x))) - LOG2


# ----------------------------------------------------------------------------
# Fused kernel: distances + Gaussian smearing + all interaction blocks
# ----------------------------------------------------------------------------
def _schnet_fused_kernel(x_ref, daug_ref, pstk_ref, oh_ref, mask_ref, off_ref,
                         ssum_ref, w_ref, b_ref, o_ref,
                         *, coeff, cutoff, n_interactions):
    # ---- AtomDistances + GaussianSmearing (f32; shared by all blocks) ----
    # dvec = pos_j - pos_i + cell_offset @ cell, via one indicator matmul.
    dvec = jnp.dot(daug_ref[...], pstk_ref[...],
                   preferred_element_type=jnp.float32)                  # (P, 3)
    # NOTE: sqrt(0) for padded pairs is fine in the forward pass; add an eps
    # before sqrt if this kernel is ever differentiated.
    dist = jnp.sqrt(jnp.sum(dvec * dvec, axis=-1, keepdims=True))       # (P, 1)
    mask = mask_ref[...]                                                # (P, 1)
    r = jnp.where(mask != 0.0, dist, 0.0)
    diff = r - off_ref[...]                                             # (P, Gp)
    f = jnp.exp(coeff * diff * diff)                                    # f32
    # HardCutoff * neighbor_mask, computed once and folded into the gather.
    cm = (r <= cutoff).astype(jnp.float32) * mask                       # (P, 1)
    ohm = (oh_ref[...] * cm).astype(jnp.bfloat16)                       # (P, A)
    ssum = ssum_ref[...].astype(jnp.bfloat16)                           # (A, P)
    f16 = f.astype(jnp.bfloat16)

    # ---- filter-generating networks: depend only on f_ij, hoisted out of ----
    # ---- the residual x-dependency chain ----
    W_filt = []
    for t in range(n_interactions):                                     # static unroll
        bt = b_ref[t]                                                   # (4, F)
        h = _ssp(jnp.dot(f16, w_ref[5 * t + 0],
                         preferred_element_type=jnp.float32) + bt[0:1])
        Wt = jnp.dot(h.astype(jnp.bfloat16), w_ref[5 * t + 1],
                     preferred_element_type=jnp.float32) + bt[1:2]      # (P, F) f32
        W_filt.append(Wt)

    # ---- interaction blocks (residual updates of x) ----
    x = x_ref[...]                                                      # (A, C) f32
    for t in range(n_interactions):                                     # static unroll
        bt = b_ref[t]
        # CFConv: in2f (no bias) -> masked neighbor gather -> filter -> sum
        y = jnp.dot(x.astype(jnp.bfloat16), w_ref[5 * t + 2],
                    preferred_element_type=jnp.float32)                 # (A, F)
        yg = jnp.dot(ohm, y.astype(jnp.bfloat16),
                     preferred_element_type=jnp.float32)                # (P, F)
        agg = jnp.dot(ssum, (yg * W_filt[t]).astype(jnp.bfloat16),
                      preferred_element_type=jnp.float32)               # (A, F)
        # f2out (ssp) + interaction output dense + residual update
        v = _ssp(jnp.dot(agg.astype(jnp.bfloat16), w_ref[5 * t + 3],
                         preferred_element_type=jnp.float32) + bt[2:3])
        v = jnp.dot(v.astype(jnp.bfloat16), w_ref[5 * t + 4],
                    preferred_element_type=jnp.float32) + bt[3:4]
        x = x + v
    o_ref[...] = x


def schnet_forward_fused(x0, D_aug, P_stack, oh, mask_flat, off_pad, ssum,
                         W_all, B_all, coeff, cutoff, n_interactions):
    A, C = x0.shape
    P, K = D_aug.shape
    Gp = off_pad.shape[1]
    kern = partial(_schnet_fused_kernel, coeff=coeff, cutoff=cutoff,
                   n_interactions=n_interactions)
    return pl.pallas_call(
        kern,
        grid=(1,),
        in_specs=[
            pl.BlockSpec((A, C), lambda i: (0, 0)),
            pl.BlockSpec((P, K), lambda i: (0, 0)),
            pl.BlockSpec(P_stack.shape, lambda i: (0, 0)),
            pl.BlockSpec((P, A), lambda i: (0, 0)),
            pl.BlockSpec((P, 1), lambda i: (0, 0)),
            pl.BlockSpec((1, Gp), lambda i: (0, 0)),
            pl.BlockSpec((A, P), lambda i: (0, 0)),
            pl.BlockSpec(W_all.shape, lambda i: (0, 0, 0)),
            pl.BlockSpec(B_all.shape, lambda i: (0, 0, 0)),
        ],
        out_specs=pl.BlockSpec((A, C), lambda i: (0, 0)),
        out_shape=jax.ShapeDtypeStruct((A, C), jnp.float32),
        compiler_params=pltpu.CompilerParams(
            dimension_semantics=("arbitrary",)),
    )(x0, D_aug, P_stack, oh, mask_flat, off_pad, ssum, W_all, B_all)


# ----------------------------------------------------------------------------
# Pure-JAX reference (mirrors the PyTorch forward, f32) for validation
# ----------------------------------------------------------------------------
def reference_forward(Z, positions, cell, cell_offset, neighbors, neighbor_mask,
                      emb, inter_params, offsets, coeff, cutoff):
    Nb, Na, Nnbh = neighbors.shape
    x = emb[Z]
    bidx = jnp.arange(Nb)[:, None, None]
    pos_j = positions[bidx, neighbors]                               # (Nb,Na,Nnbh,3)
    dvec = pos_j - positions[:, :, None, :]
    dvec = dvec + jnp.einsum("band,bde->bane", cell_offset, cell)
    dist = jnp.sqrt(jnp.sum(dvec ** 2, axis=-1))
    r = jnp.where(neighbor_mask != 0, dist, 0.0)
    f = jnp.exp(coeff * (r[..., None] - offsets[None, None, None, :]) ** 2)
    for p in inter_params:
        h = jnp.logaddexp(jnp.einsum("bang,gf->banf", f, p["w1"]) + p["b1"], 0.0) - LOG2
        W = jnp.einsum("banf,fk->bank", h, p["w2"]) + p["b2"]
        Cmask = (r <= cutoff).astype(jnp.float32) * neighbor_mask
        y = jnp.einsum("bac,cf->baf", x, p["win"])
        yg = y[bidx, neighbors]                                       # (Nb,Na,Nnbh,F)
        agg = jnp.sum(yg * W * Cmask[..., None], axis=2)              # (Nb,Na,F)
        v = jnp.logaddexp(jnp.einsum("baf,fc->bac", agg, p["wout"]) + p["bout"], 0.0) - LOG2
        v = jnp.einsum("bac,cd->bad", v, p["wd"]) + p["bd"]
        x = x + v
    return x


def dense_init(key, fan_in, fan_out, bias=True):
    k1, k2 = jax.random.split(key)
    w = jax.random.normal(k1, (fan_in, fan_out), jnp.float32) / math.sqrt(fan_in)
    b = jax.random.normal(k2, (fan_out,), jnp.float32) * 0.1 if bias else None
    return w, b


if __name__ == "__main__":
    key = jax.random.PRNGKey(0)
    Nb, Na = 2, 8
    Nnbh = Na - 1
    C = 32      # n_atom_basis
    F = 32      # n_filters
    G = 25      # n_gaussians
    n_interactions = 3
    cutoff = 5.0
    max_z = 100

    keys = jax.random.split(key, 8)
    Z = jax.random.randint(keys[0], (Nb, Na), 1, 10).astype(jnp.int32)
    positions = jax.random.normal(keys[1], (Nb, Na, 3), jnp.float32) * 2.0
    cell = jnp.zeros((Nb, 3, 3), jnp.float32)
    cell_offset = jnp.zeros((Nb, Na, Nnbh, 3), jnp.float32)

    idx = jnp.arange(Na)
    nbr_single = jnp.stack(
        [jnp.concatenate([idx[:i], idx[i + 1:]]) for i in range(Na)], axis=0
    ).astype(jnp.int32)                                             # (Na, Nnbh)
    neighbors = jnp.broadcast_to(nbr_single, (Nb, Na, Nnbh))
    neighbor_mask = jnp.ones((Nb, Na, Nnbh), jnp.float32)
    neighbor_mask = neighbor_mask.at[1, :, -1].set(0.0)             # padded neighbors

    # embedding table (nn.Embedding(max_z, C, padding_idx=0) -> zero row 0)
    emb = jax.random.normal(keys[2], (max_z, C), jnp.float32)
    emb = emb.at[0].set(0.0)

    # GaussianSmearing(0, cutoff, G) constants
    offsets = jnp.linspace(0.0, cutoff, G).astype(jnp.float32)
    width = cutoff / (G - 1)
    coeff = float(-0.5 / (width * width))

    # interaction parameters (3 uncoupled blocks)
    inter_params = []
    pk = jax.random.split(keys[3], n_interactions)
    for i in range(n_interactions):
        sk = jax.random.split(pk[i], 5)
        w1, b1 = dense_init(sk[0], G, F)              # filter net layer 1
        w2, b2 = dense_init(sk[1], F, F)              # filter net layer 2
        win, _ = dense_init(sk[2], C, F, bias=False)  # cfconv.in2f (no bias)
        wout, bout = dense_init(sk[3], F, C)          # cfconv.f2out (ssp)
        wd, bd = dense_init(sk[4], C, C)              # interaction dense
        inter_params.append(dict(w1=w1, b1=b1, w2=w2, b2=b2, win=win,
                                 wout=wout, bout=bout, wd=wd, bd=bd))

    # ---- glue: layout / index preprocessing only (no feature arithmetic) ----
    GP = 32                          # Gaussian basis padded 25 -> 32 (K dim)
    Nnbh_p = 8                       # pad neighbor slots to one sublane tile
    A = Nb * Na                      # collapsed atom rows     (= 16)
    P = Nb * Na * Nnbh_p             # collapsed pair rows     (= 128)

    pad_n = Nnbh_p - Nnbh
    nbr_p = jnp.concatenate([neighbors, jnp.zeros((Nb, Na, pad_n), jnp.int32)], axis=2)
    mask_p = jnp.concatenate([neighbor_mask, jnp.zeros((Nb, Na, pad_n), jnp.float32)], axis=2)
    coff_p = jnp.concatenate([cell_offset, jnp.zeros((Nb, Na, pad_n, 3), jnp.float32)], axis=2)

    # global (batch-collapsed) indices and one-hot gather / sum matrices
    g_j = (nbr_p + (jnp.arange(Nb) * Na)[:, None, None]).reshape(P)   # neighbor atom j
    g_i = jnp.repeat(jnp.arange(A), Nnbh_p)                           # center atom i
    oh = jax.nn.one_hot(g_j, A, dtype=jnp.float32)                    # (P, A)
    sexp = jax.nn.one_hot(g_i, A, dtype=jnp.float32)                  # (P, A)
    ssum = sexp.T                                                     # (A, P) neighbor-sum

    # fold (pos_j - pos_i) and the cell-offset term into one matrix so that
    # dvec = [oh - sexp | coff_wide] @ [positions ; cell]  (single matmul)
    b_row = jnp.repeat(jnp.arange(Nb), Na * Nnbh_p)                   # batch of each pair row
    bh = jax.nn.one_hot(b_row, Nb, dtype=jnp.float32)                 # (P, Nb)
    coff_flat = coff_p.reshape(P, 3)
    coff_wide = (bh[:, :, None] * coff_flat[:, None, :]).reshape(P, Nb * 3)
    D_aug = jnp.concatenate([oh - sexp, coff_wide], axis=1)           # (P, A + 3*Nb)
    P_stack = jnp.concatenate([positions.reshape(A, 3),
                               cell.reshape(Nb * 3, 3)], axis=0)      # (A + 3*Nb, 3)
    mask_flat = mask_p.reshape(P, 1)
    off_pad = jnp.zeros((1, GP), jnp.float32).at[0, :G].set(offsets)

    # embedding lookup (glue); C == 32, no lane padding of the feature axis
    x0 = emb[Z].reshape(A, C).astype(jnp.float32)

    # stack weights at their TRUE width (only w1 rows need 25->32 padding) and
    # store them in bf16 (halved DMA bytes; bf16 MXU operands, f32 accumulate)
    def pad_w1(w):
        return jnp.zeros((GP, F), jnp.float32).at[:w.shape[0], :].set(w)

    W_all = jnp.stack([w for p in inter_params
                       for w in (pad_w1(p["w1"]), p["w2"], p["win"],
                                 p["wout"], p["wd"])]).astype(jnp.bfloat16)   # (15,32,32)
    B_all = jnp.stack([jnp.stack([p["b1"], p["b2"], p["bout"], p["bd"]])
                       for p in inter_params]).astype(jnp.float32)            # (3,4,32)

    # ---- fused forward pass: one Pallas kernel ----
    out = schnet_forward_fused(x0, D_aug, P_stack, oh, mask_flat, off_pad,
                               ssum, W_all, B_all, coeff, cutoff,
                               n_interactions)
    out = jax.block_until_ready(out)
    x = out.reshape(Nb, Na, C)

    # ---- validate against pure-JAX f32 reference of the PyTorch semantics ----
    # Tolerance loosened vs. the previous f32 kernel because MXU operands are
    # now bf16 (f32 accumulate), as recommended by the perf review.
    x_ref = reference_forward(Z, positions, cell, cell_offset, neighbors,
                              neighbor_mask, emb, inter_params, offsets, coeff, cutoff)
    max_err = float(jnp.max(jnp.abs(x - x_ref)))
    assert jnp.allclose(x, x_ref, atol=5e-2, rtol=5e-2), max_err
    print("KERNEL_OK")
</pallas_src>

<mosaic_0001>
module attributes {stable_mosaic.version = 11 : i64} {
  func.func @_schnet_fused_kernel(%arg0: i32, %arg1: memref<16x32xf32, #tpu.memory_space<vmem>>, %arg2: memref<128x22xf32, #tpu.memory_space<vmem>>, %arg3: memref<22x3xf32, #tpu.memory_space<vmem>>, %arg4: memref<128x16xf32, #tpu.memory_space<vmem>>, %arg5: memref<128x1xf32, #tpu.memory_space<vmem>>, %arg6: memref<1x32xf32, #tpu.memory_space<vmem>>, %arg7: memref<16x128xf32, #tpu.memory_space<vmem>>, %arg8: memref<15x32x32xbf16, #tpu.memory_space<vmem>>, %arg9: memref<3x4x32xf32, #tpu.memory_space<vmem>>, %arg10: memref<16x32xf32, #tpu.memory_space<vmem>>) attributes {dimension_semantics = [#tpu.dimension_semantics<arbitrary>], iteration_bounds = array<i64: 1>, scalar_prefetch = 0 : i64, scratch_operands = 0 : i64, tpu.core_type = #tpu.core_type<tc>, window_params = [{pipeline_mode = #tpu.pipeline_mode<synchronous>, transform_indices = @transform_0, window_bounds = array<i64: 16, 32>}, {pipeline_mode = #tpu.pipeline_mode<synchronous>, transform_indices = @transform_1, window_bounds = array<i64: 128, 22>}, {pipeline_mode = #tpu.pipeline_mode<synchronous>, transform_indices = @transform_2, window_bounds = array<i64: 22, 3>}, {pipeline_mode = #tpu.pipeline_mode<synchronous>, transform_indices = @transform_3, window_bounds = array<i64: 128, 16>}, {pipeline_mode = #tpu.pipeline_mode<synchronous>, transform_indices = @transform_4, window_bounds = array<i64: 128, 1>}, {pipeline_mode = #tpu.pipeline_mode<synchronous>, transform_indices = @transform_5, window_bounds = array<i64: 1, 32>}, {pipeline_mode = #tpu.pipeline_mode<synchronous>, transform_indices = @transform_6, window_bounds = array<i64: 16, 128>}, {pipeline_mode = #tpu.pipeline_mode<synchronous>, transform_indices = @transform_7, window_bounds = array<i64: 15, 32, 32>}, {pipeline_mode = #tpu.pipeline_mode<synchronous>, transform_indices = @transform_8, window_bounds = array<i64: 3, 4, 32>}, {pipeline_mode = #tpu.pipeline_mode<synchronous>, transform_indices = @transform_9, window_bounds = array<i64: 16, 32>}]} {
    %c0 = arith.constant 0 : index
    %c0_0 = arith.constant 0 : index
    %0 = vector.load %arg2[%c0, %c0_0] : memref<128x22xf32, #tpu.memory_space<vmem>>, vector<128x22xf32>
    %c0_1 = arith.constant 0 : index
    %c0_2 = arith.constant 0 : index
    %1 = vector.load %arg3[%c0_1, %c0_2] : memref<22x3xf32, #tpu.memory_space<vmem>>, vector<22x3xf32>
    %cst = arith.constant dense<0.000000e+00> : vector<128x3xf32>
    %2 = tpu.matmul %0, %1, %cst {dimension_numbers = #tpu.dot_dimension_numbers<[1], [0], [0], [1], [0, 0, 1, 1], [], []>} : vector<128x22xf32>, vector<22x3xf32>, vector<128x3xf32> -> vector<128x3xf32>
    %3 = arith.mulf %2, %2 : vector<128x3xf32>
    %cst_3 = arith.constant dense<0.000000e+00> : vector<128xf32>
    %4 = vector.multi_reduction <add>, %3, %cst_3 [1] : vector<128x3xf32> to vector<128xf32>
    %5 = vector.shape_cast %4 : vector<128xf32> to vector<128x1xf32>
    %6 = math.sqrt %5 : vector<128x1xf32>
    %c0_4 = arith.constant 0 : index
    %c0_5 = arith.constant 0 : index
    %7 = vector.load %arg5[%c0_4, %c0_5] : memref<128x1xf32, #tpu.memory_space<vmem>>, vector<128x1xf32>
    %cst_6 = arith.constant 0.000000e+00 : f32
    %8 = vector.broadcast %cst_6 : f32 to vector<128x1xf32>
    %9 = arith.cmpf one, %7, %8 : vector<128x1xf32>
    %cst_7 = arith.constant 0.000000e+00 : f32
    %10 = vector.broadcast %cst_7 : f32 to vector<128x1xf32>
    %11 = arith.select %9, %6, %10 : vector<128x1xi1>, vector<128x1xf32>
    %c0_8 = arith.constant 0 : index
    %c0_9 = arith.constant 0 : index
    %12 = vector.load %arg6[%c0_8, %c0_9] : memref<1x32xf32, #tpu.memory_space<vmem>>, vector<1x32xf32>
    %13 = vector.broadcast %11 : vector<128x1xf32> to vector<128x32xf32>
    %14 = vector.broadcast %12 : vector<1x32xf32> to vector<128x32xf32>
    %15 = arith.subf %13, %14 : vector<128x32xf32>
    %cst_10 = arith.constant -1.152000e+01 : f32
    %16 = vector.broadcast %cst_10 : f32 to vector<128x32xf32>
    %17 = arith.mulf %16, %15 : vector<128x32xf32>
    %18 = arith.mulf %17, %15 : vector<128x32xf32>
    %19 = math.exp %18 : vector<128x32xf32>
    %cst_11 = arith.constant 5.000000e+00 : f32
    %20 = vector.broadcast %cst_11 : f32 to vector<128x1xf32>
    %21 = arith.cmpf ole, %11, %20 : vector<128x1xf32>
    %22 = arith.extui %21 : vector<128x1xi1> to vector<128x1xi32>
    %23 = arith.sitofp %22 : vector<128x1xi32> to vector<128x1xf32>
    %24 = arith.mulf %23, %7 : vector<128x1xf32>
    %c0_12 = arith.constant 0 : index
    %c0_13 = arith.constant 0 : index
    %25 = vector.load %arg4[%c0_12, %c0_13] : memref<128x16xf32, #tpu.memory_space<vmem>>, vector<128x16xf32>
    %26 = vector.broadcast %24 : vector<128x1xf32> to vector<128x16xf32>
    %27 = arith.mulf %25, %26 : vector<128x16xf32>
    %28 = arith.truncf %27 : vector<128x16xf32> to vector<128x16xbf16>
    %c0_14 = arith.constant 0 : index
    %c0_15 = arith.constant 0 : index
    %29 = vector.load %arg7[%c0_14, %c0_15] : memref<16x128xf32, #tpu.memory_space<vmem>>, vector<16x128xf32>
    %30 = arith.truncf %29 : vector<16x128xf32> to vector<16x128xbf16>
    %31 = arith.truncf %19 : vector<128x32xf32> to vector<128x32xbf16>
    %c0_16 = arith.constant 0 : index
    %c0_17 = arith.constant 0 : index
    %c0_18 = arith.constant 0 : index
    %32 = vector.load %arg9[%c0_16, %c0_17, %c0_18] : memref<3x4x32xf32, #tpu.memory_space<vmem>>, vector<1x4x32xf32>
    %33 = vector.shape_cast %32 : vector<1x4x32xf32> to vector<4x32xf32>
    %c0_19 = arith.constant 0 : index
    %c0_20 = arith.constant 0 : index
    %c0_21 = arith.constant 0 : index
    %34 = vector.load %arg8[%c0_19, %c0_20, %c0_21] : memref<15x32x32xbf16, #tpu.memory_space<vmem>>, vector<1x32x32xbf16>
    %35 = vector.shape_cast %34 : vector<1x32x32xbf16> to vector<32x32xbf16>
    %cst_22 = arith.constant dense<0.000000e+00> : vector<128x32xf32>
    %36 = tpu.matmul %31, %35, %cst_22 {dimension_numbers = #tpu.dot_dimension_numbers<[1], [0], [0], [1], [0, 0, 1, 1], [], []>} : vector<128x32xbf16>, vector<32x32xbf16>, vector<128x32xf32> -> vector<128x32xf32>
    %37 = vector.extract_strided_slice %33 {offsets = [0, 0], sizes = [1, 32], strides = [1, 1]} : vector<4x32xf32> to vector<1x32xf32>
    %38 = vector.broadcast %37 : vector<1x32xf32> to vector<128x32xf32>
    %39 = arith.addf %36, %38 : vector<128x32xf32>
    %cst_23 = arith.constant 0.000000e+00 : f32
    %40 = vector.broadcast %cst_23 : f32 to vector<128x32xf32>
    %41 = arith.maximumf %39, %40 : vector<128x32xf32>
    %42 = math.absf %39 : vector<128x32xf32>
    %cst_24 = arith.constant 0.000000e+00 : f32
    %43 = vector.broadcast %cst_24 : f32 to vector<128x32xf32>
    %44 = arith.subf %43, %42 : vector<128x32xf32>
    %45 = math.exp %44 : vector<128x32xf32>
    %46 = math.log1p %45 : vector<128x32xf32>
    %47 = arith.addf %41, %46 : vector<128x32xf32>
    %cst_25 = arith.constant 0.693147182 : f32
    %48 = vector.broadcast %cst_25 : f32 to vector<128x32xf32>
    %49 = arith.subf %47, %48 : vector<128x32xf32>
    %50 = arith.truncf %49 : vector<128x32xf32> to vector<128x32xbf16>
    %c1 = arith.constant 1 : index
    %c0_26 = arith.constant 0 : index
    %c0_27 = arith.constant 0 : index
    %51 = vector.load %arg8[%c1, %c0_26, %c0_27] : memref<15x32x32xbf16, #tpu.memory_space<vmem>>, vector<1x32x32xbf16>
    %52 = vector.shape_cast %51 : vector<1x32x32xbf16> to vector<32x32xbf16>
    %cst_28 = arith.constant dense<0.000000e+00> : vector<128x32xf32>
    %53 = tpu.matmul %50, %52, %cst_28 {dimension_numbers = #tpu.dot_dimension_numbers<[1], [0], [0], [1], [0, 0, 1, 1], [], []>} : vector<128x32xbf16>, vector<32x32xbf16>, vector<128x32xf32> -> vector<128x32xf32>
    %54 = vector.extract_strided_slice %33 {offsets = [1, 0], sizes = [1, 32], strides = [1, 1]} : vector<4x32xf32> to vector<1x32xf32>
    %55 = vector.broadcast %54 : vector<1x32xf32> to vector<128x32xf32>
    %56 = arith.addf %53, %55 : vector<128x32xf32>
    %c1_29 = arith.constant 1 : index
    %c0_30 = arith.constant 0 : index
    %c0_31 = arith.constant 0 : index
    %57 = vector.load %arg9[%c1_29, %c0_30, %c0_31] : memref<3x4x32xf32, #tpu.memory_space<vmem>>, vector<1x4x32xf32>
    %58 = vector.shape_cast %57 : vector<1x4x32xf32> to vector<4x32xf32>
    %c5 = arith.constant 5 : index
    %c0_32 = arith.constant 0 : index
    %c0_33 = arith.constant 0 : index
    %59 = vector.load %arg8[%c5, %c0_32, %c0_33] : memref<15x32x32xbf16, #tpu.memory_space<vmem>>, vector<1x32x32xbf16>
    %60 = vector.shape_cast %59 : vector<1x32x32xbf16> to vector<32x32xbf16>
    %cst_34 = arith.constant dense<0.000000e+00> : vector<128x32xf32>
    %61 = tpu.matmul %31, %60, %cst_34 {dimension_numbers = #tpu.dot_dimension_numbers<[1], [0], [0], [1], [0, 0, 1, 1], [], []>} : vector<128x32xbf16>, vector<32x32xbf16>, vector<128x32xf32> -> vector<128x32xf32>
    %62 = vector.extract_strided_slice %58 {offsets = [0, 0], sizes = [1, 32], strides = [1, 1]} : vector<4x32xf32> to vector<1x32xf32>
    %63 = vector.broadcast %62 : vector<1x32xf32> to vector<128x32xf32>
    %64 = arith.addf %61, %63 : vector<128x32xf32>
    %cst_35 = arith.constant 0.000000e+00 : f32
    %65 = vector.broadcast %cst_35 : f32 to vector<128x32xf32>
    %66 = arith.maximumf %64, %65 : vector<128x32xf32>
    %67 = math.absf %64 : vector<128x32xf32>
    %cst_36 = arith.constant 0.000000e+00 : f32
    %68 = vector.broadcast %cst_36 : f32 to vector<128x32xf32>
    %69 = arith.subf %68, %67 : vector<128x32xf32>
    %70 = math.exp %69 : vector<128x32xf32>
    %71 = math.log1p %70 : vector<128x32xf32>
    %72 = arith.addf %66, %71 : vector<128x32xf32>
    %cst_37 = arith.constant 0.693147182 : f32
    %73 = vector.broadcast %cst_37 : f32 to vector<128x32xf32>
    %74 = arith.subf %72, %73 : vector<128x32xf32>
    %75 = arith.truncf %74 : vector<128x32xf32> to vector<128x32xbf16>
    %c6 = arith.constant 6 : index
    %c0_38 = arith.constant 0 : index
    %c0_39 = arith.constant 0 : index
    %76 = vector.load %arg8[%c6, %c0_38, %c0_39] : memref<15x32x32xbf16, #tpu.memory_space<vmem>>, vector<1x32x32xbf16>
    %77 = vector.shape_cast %76 : vector<1x32x32xbf16> to vector<32x32xbf16>
    %cst_40 = arith.constant dense<0.000000e+00> : vector<128x32xf32>
    %78 = tpu.matmul %75, %77, %cst_40 {dimension_numbers = #tpu.dot_dimension_numbers<[1], [0], [0], [1], [0, 0, 1, 1], [], []>} : vector<128x32xbf16>, vector<32x32xbf16>, vector<128x32xf32> -> vector<128x32xf32>
    %79 = vector.extract_strided_slice %58 {offsets = [1, 0], sizes = [1, 32], strides = [1, 1]} : vector<4x32xf32> to vector<1x32xf32>
    %80 = vector.broadcast %79 : vector<1x32xf32> to vector<128x32xf32>
    %81 = arith.addf %78, %80 : vector<128x32xf32>
    %c2 = arith.constant 2 : index
    %c0_41 = arith.constant 0 : index
    %c0_42 = arith.constant 0 : index
    %82 = vector.load %arg9[%c2, %c0_41, %c0_42] : memref<3x4x32xf32, #tpu.memory_space<vmem>>, vector<1x4x32xf32>
    %83 = vector.shape_cast %82 : vector<1x4x32xf32> to vector<4x32xf32>
    %c10 = arith.constant 10 : index
    %c0_43 = arith.constant 0 : index
    %c0_44 = arith.constant 0 : index
    %84 = vector.load %arg8[%c10, %c0_43, %c0_44] : memref<15x32x32xbf16, #tpu.memory_space<vmem>>, vector<1x32x32xbf16>
    %85 = vector.shape_cast %84 : vector<1x32x32xbf16> to vector<32x32xbf16>
    %cst_45 = arith.constant dense<0.000000e+00> : vector<128x32xf32>
    %86 = tpu.matmul %31, %85, %cst_45 {dimension_numbers = #tpu.dot_dimension_numbers<[1], [0], [0], [1], [0, 0, 1, 1], [], []>} : vector<128x32xbf16>, vector<32x32xbf16>, vector<128x32xf32> -> vector<128x32xf32>
    %87 = vector.extract_strided_slice %83 {offsets = [0, 0], sizes = [1, 32], strides = [1, 1]} : vector<4x32xf32> to vector<1x32xf32>
    %88 = vector.broadcast %87 : vector<1x32xf32> to vector<128x32xf32>
    %89 = arith.addf %86, %88 : vector<128x32xf32>
    %cst_46 = arith.constant 0.000000e+00 : f32
    %90 = vector.broadcast %cst_46 : f32 to vector<128x32xf32>
    %91 = arith.maximumf %89, %90 : vector<128x32xf32>
    %92 = math.absf %89 : vector<128x32xf32>
    %cst_47 = arith.constant 0.000000e+00 : f32
    %93 = vector.broadcast %cst_47 : f32 to vector<128x32xf32>
    %94 = arith.subf %93, %92 : vector<128x32xf32>
    %95 = math.exp %94 : vector<128x32xf32>
    %96 = math.log1p %95 : vector<128x32xf32>
    %97 = arith.addf %91, %96 : vector<128x32xf32>
    %cst_48 = arith.constant 0.693147182 : f32
    %98 = vector.broadcast %cst_48 : f32 to vector<128x32xf32>
    %99 = arith.subf %97, %98 : vector<128x32xf32>
    %100 = arith.truncf %99 : vector<128x32xf32> to vector<128x32xbf16>
    %c11 = arith.constant 11 : index
    %c0_49 = arith.constant 0 : index
    %c0_50 = arith.constant 0 : index
    %101 = vector.load %arg8[%c11, %c0_49, %c0_50] : memref<15x32x32xbf16, #tpu.memory_space<vmem>>, vector<1x32x32xbf16>
    %102 = vector.shape_cast %101 : vector<1x32x32xbf16> to vector<32x32xbf16>
    %cst_51 = arith.constant dense<0.000000e+00> : vector<128x32xf32>
    %103 = tpu.matmul %100, %102, %cst_51 {dimension_numbers = #tpu.dot_dimension_numbers<[1], [0], [0], [1], [0, 0, 1, 1], [], []>} : vector<128x32xbf16>, vector<32x32xbf16>, vector<128x32xf32> -> vector<128x32xf32>
    %104 = vector.extract_strided_slice %83 {offsets = [1, 0], sizes = [1, 32], strides = [1, 1]} : vector<4x32xf32> to vector<1x32xf32>
    %105 = vector.broadcast %104 : vector<1x32xf32> to vector<128x32xf32>
    %106 = arith.addf %103, %105 : vector<128x32xf32>
    %c0_52 = arith.constant 0 : index
    %c0_53 = arith.constant 0 : index
    %107 = vector.load %arg1[%c0_52, %c0_53] : memref<16x32xf32, #tpu.memory_space<vmem>>, vector<16x32xf32>
    %c0_54 = arith.constant 0 : index
    %c0_55 = arith.constant 0 : index
    %c0_56 = arith.constant 0 : index
    %108 = vector.load %arg9[%c0_54, %c0_55, %c0_56] : memref<3x4x32xf32, #tpu.memory_space<vmem>>, vector<1x4x32xf32>
    %109 = vector.shape_cast %108 : vector<1x4x32xf32> to vector<4x32xf32>
    %110 = arith.truncf %107 : vector<16x32xf32> to vector<16x32xbf16>
    %c2_57 = arith.constant 2 : index
    %c0_58 = arith.constant 0 : index
    %c0_59 = arith.constant 0 : index
    %111 = vector.load %arg8[%c2_57, %c0_58, %c0_59] : memref<15x32x32xbf16, #tpu.memory_space<vmem>>, vector<1x32x32xbf16>
    %112 = vector.shape_cast %111 : vector<1x32x32xbf16> to vector<32x32xbf16>
    %cst_60 = arith.constant dense<0.000000e+00> : vector<16x32xf32>
    %113 = tpu.matmul %110, %112, %cst_60 {dimension_numbers = #tpu.dot_dimension_numbers<[1], [0], [0], [1], [0, 0, 1, 1], [], []>} : vector<16x32xbf16>, vector<32x32xbf16>, vector<16x32xf32> -> vector<16x32xf32>
    %114 = arith.truncf %113 : vector<16x32xf32> to vector<16x32xbf16>
    %cst_61 = arith.constant dense<0.000000e+00> : vector<128x32xf32>
    %115 = tpu.matmul %28, %114, %cst_61 {dimension_numbers = #tpu.dot_dimension_numbers<[1], [0], [0], [1], [0, 0, 1, 1], [], []>} : vector<128x16xbf16>, vector<16x32xbf16>, vector<128x32xf32> -> vector<128x32xf32>
    %116 = arith.mulf %115, %56 : vector<128x32xf32>
    %117 = arith.truncf %116 : vector<128x32xf32> to vector<128x32xbf16>
    %cst_62 = arith.constant dense<0.000000e+00> : vector<16x32xf32>
    %118 = tpu.matmul %30, %117, %cst_62 {dimension_numbers = #tpu.dot_dimension_numbers<[1], [0], [0], [1], [0, 0, 1, 1], [], []>} : vector<16x128xbf16>, vector<128x32xbf16>, vector<16x32xf32> -> vector<16x32xf32>
    %119 = arith.truncf %118 : vector<16x32xf32> to vector<16x32xbf16>
    %c3 = arith.constant 3 : index
    %c0_63 = arith.constant 0 : index
    %c0_64 = arith.constant 0 : index
    %120 = vector.load %arg8[%c3, %c0_63, %c0_64] : memref<15x32x32xbf16, #tpu.memory_space<vmem>>, vector<1x32x32xbf16>
    %121 = vector.shape_cast %120 : vector<1x32x32xbf16> to vector<32x32xbf16>
    %cst_65 = arith.constant dense<0.000000e+00> : vector<16x32xf32>
    %122 = tpu.matmul %119, %121, %cst_65 {dimension_numbers = #tpu.dot_dimension_numbers<[1], [0], [0], [1], [0, 0, 1, 1], [], []>} : vector<16x32xbf16>, vector<32x32xbf16>, vector<16x32xf32> -> vector<16x32xf32>
    %123 = vector.extract_strided_slice %109 {offsets = [2, 0], sizes = [1, 32], strides = [1, 1]} : vector<4x32xf32> to vector<1x32xf32>
    %124 = vector.broadcast %123 : vector<1x32xf32> to vector<16x32xf32>
    %125 = arith.addf %122, %124 : vector<16x32xf32>
    %cst_66 = arith.constant 0.000000e+00 : f32
    %126 = vector.broadcast %cst_66 : f32 to vector<16x32xf32>
    %127 = arith.maximumf %125, %126 : vector<16x32xf32>
    %128 = math.absf %125 : vector<16x32xf32>
    %cst_67 = arith.constant 0.000000e+00 : f32
    %129 = vector.broadcast %cst_67 : f32 to vector<16x32xf32>
    %130 = arith.subf %129, %128 : vector<16x32xf32>
    %131 = math.exp %130 : vector<16x32xf32>
    %132 = math.log1p %131 : vector<16x32xf32>
    %133 = arith.addf %127, %132 : vector<16x32xf32>
    %cst_68 = arith.constant 0.693147182 : f32
    %134 = vector.broadcast %cst_68 : f32 to vector<16x32xf32>
    %135 = arith.subf %133, %134 : vector<16x32xf32>
    %136 = arith.truncf %135 : vector<16x32xf32> to vector<16x32xbf16>
    %c4 = arith.constant 4 : index
    %c0_69 = arith.constant 0 : index
    %c0_70 = arith.constant 0 : index
    %137 = vector.load %arg8[%c4, %c0_69, %c0_70] : memref<15x32x32xbf16, #tpu.memory_space<vmem>>, vector<1x32x32xbf16>
    %138 = vector.shape_cast %137 : vector<1x32x32xbf16> to vector<32x32xbf16>
    %cst_71 = arith.constant dense<0.000000e+00> : vector<16x32xf32>
    %139 = tpu.matmul %136, %138, %cst_71 {dimension_numbers = #tpu.dot_dimension_numbers<[1], [0], [0], [1], [0, 0, 1, 1], [], []>} : vector<16x32xbf16>, vector<32x32xbf16>, vector<16x32xf32> -> vector<16x32xf32>
    %140 = vector.extract_strided_slice %109 {offsets = [3, 0], sizes = [1, 32], strides = [1, 1]} : vector<4x32xf32> to vector<1x32xf32>
    %141 = vector.broadcast %140 : vector<1x32xf32> to vector<16x32xf32>
    %142 = arith.addf %139, %141 : vector<16x32xf32>
    %143 = arith.addf %107, %142 : vector<16x32xf32>
    %c1_72 = arith.constant 1 : index
    %c0_73 = arith.constant 0 : index
    %c0_74 = arith.constant 0 : index
    %144 = vector.load %arg9[%c1_72, %c0_73, %c0_74] : memref<3x4x32xf32, #tpu.memory_space<vmem>>, vector<1x4x32xf32>
    %145 = vector.shape_cast %144 : vector<1x4x32xf32> to vector<4x32xf32>
    %146 = arith.truncf %143 : vector<16x32xf32> to vector<16x32xbf16>
    %c7 = arith.constant 7 : index
    %c0_75 = arith.constant 0 : index
    %c0_76 = arith.constant 0 : index
    %147 = vector.load %arg8[%c7, %c0_75, %c0_76] : memref<15x32x32xbf16, #tpu.memory_space<vmem>>, vector<1x32x32xbf16>
    %148 = vector.shape_cast %147 : vector<1x32x32xbf16> to vector<32x32xbf16>
    %cst_77 = arith.constant dense<0.000000e+00> : vector<16x32xf32>
    %149 = tpu.matmul %146, %148, %cst_77 {dimension_numbers = #tpu.dot_dimension_numbers<[1], [0], [0], [1], [0, 0, 1, 1], [], []>} : vector<16x32xbf16>, vector<32x32xbf16>, vector<16x32xf32> -> vector<16x32xf32>
    %150 = arith.truncf %149 : vector<16x32xf32> to vector<16x32xbf16>
    %cst_78 = arith.constant dense<0.000000e+00> : vector<128x32xf32>
    %151 = tpu.matmul %28, %150, %cst_78 {dimension_numbers = #tpu.dot_dimension_numbers<[1], [0], [0], [1], [0, 0, 1, 1], [], []>} : vector<128x16xbf16>, vector<16x32xbf16>, vector<128x32xf32> -> vector<128x32xf32>
    %152 = arith.mulf %151, %81 : vector<128x32xf32>
    %153 = arith.truncf %152 : vector<128x32xf32> to vector<128x32xbf16>
    %cst_79 = arith.constant dense<0.000000e+00> : vector<16x32xf32>
    %154 = tpu.matmul %30, %153, %cst_79 {dimension_numbers = #tpu.dot_dimension_numbers<[1], [0], [0], [1], [0, 0, 1, 1], [], []>} : vector<16x128xbf16>, vector<128x32xbf16>, vector<16x32xf32> -> vector<16x32xf32>
    %155 = arith.truncf %154 : vector<16x32xf32> to vector<16x32xbf16>
    %c8 = arith.constant 8 : index
    %c0_80 = arith.constant 0 : index
    %c0_81 = arith.constant 0 : index
    %156 = vector.load %arg8[%c8, %c0_80, %c0_81] : memref<15x32x32xbf16, #tpu.memory_space<vmem>>, vector<1x32x32xbf16>
    %157 = vector.shape_cast %156 : vector<1x32x32xbf16> to vector<32x32xbf16>
    %cst_82 = arith.constant dense<0.000000e+00> : vector<16x32xf32>
    %158 = tpu.matmul %155, %157, %cst_82 {dimension_numbers = #tpu.dot_dimension_numbers<[1], [0], [0], [1], [0, 0, 1, 1], [], []>} : vector<16x32xbf16>, vector<32x32xbf16>, vector<16x32xf32> -> vector<16x32xf32>
    %159 = vector.extract_strided_slice %145 {offsets = [2, 0], sizes = [1, 32], strides = [1, 1]} : vector<4x32xf32> to vector<1x32xf32>
    %160 = vector.broadcast %159 : vector<1x32xf32> to vector<16x32xf32>
    %161 = arith.addf %158, %160 : vector<16x32xf32>
    %cst_83 = arith.constant 0.000000e+00 : f32
    %162 = vector.broadcast %cst_83 : f32 to vector<16x32xf32>
    %163 = arith.maximumf %161, %162 : vector<16x32xf32>
    %164 = math.absf %161 : vector<16x32xf32>
    %cst_84 = arith.constant 0.000000e+00 : f32
    %165 = vector.broadcast %cst_84 : f32 to vector<16x32xf32>
    %166 = arith.subf %165, %164 : vector<16x32xf32>
    %167 = math.exp %166 : vector<16x32xf32>
    %168 = math.log1p %167 : vector<16x32xf32>
    %169 = arith.addf %163, %168 : vector<16x32xf32>
    %cst_85 = arith.constant 0.693147182 : f32
    %170 = vector.broadcast %cst_85 : f32 to vector<16x32xf32>
    %171 = arith.subf %169, %170 : vector<16x32xf32>
    %172 = arith.truncf %171 : vector<16x32xf32> to vector<16x32xbf16>
    %c9 = arith.constant 9 : index
    %c0_86 = arith.constant 0 : index
    %c0_87 = arith.constant 0 : index
    %173 = vector.load %arg8[%c9, %c0_86, %c0_87] : memref<15x32x32xbf16, #tpu.memory_space<vmem>>, vector<1x32x32xbf16>
    %174 = vector.shape_cast %173 : vector<1x32x32xbf16> to vector<32x32xbf16>
    %cst_88 = arith.constant dense<0.000000e+00> : vector<16x32xf32>
    %175 = tpu.matmul %172, %174, %cst_88 {dimension_numbers = #tpu.dot_dimension_numbers<[1], [0], [0], [1], [0, 0, 1, 1], [], []>} : vector<16x32xbf16>, vector<32x32xbf16>, vector<16x32xf32> -> vector<16x32xf32>
    %176 = vector.extract_strided_slice %145 {offsets = [3, 0], sizes = [1, 32], strides = [1, 1]} : vector<4x32xf32> to vector<1x32xf32>
    %177 = vector.broadcast %176 : vector<1x32xf32> to vector<16x32xf32>
    %178 = arith.addf %175, %177 : vector<16x32xf32>
    %179 = arith.addf %143, %178 : vector<16x32xf32>
    %c2_89 = arith.constant 2 : index
    %c0_90 = arith.constant 0 : index
    %c0_91 = arith.constant 0 : index
    %180 = vector.load %arg9[%c2_89, %c0_90, %c0_91] : memref<3x4x32xf32, #tpu.memory_space<vmem>>, vector<1x4x32xf32>
    %181 = vector.shape_cast %180 : vector<1x4x32xf32> to vector<4x32xf32>
    %182 = arith.truncf %179 : vector<16x32xf32> to vector<16x32xbf16>
    %c12 = arith.constant 12 : index
    %c0_92 = arith.constant 0 : index
    %c0_93 = arith.constant 0 : index
    %183 = vector.load %arg8[%c12, %c0_92, %c0_93] : memref<15x32x32xbf16, #tpu.memory_space<vmem>>, vector<1x32x32xbf16>
    %184 = vector.shape_cast %183 : vector<1x32x32xbf16> to vector<32x32xbf16>
    %cst_94 = arith.constant dense<0.000000e+00> : vector<16x32xf32>
    %185 = tpu.matmul %182, %184, %cst_94 {dimension_numbers = #tpu.dot_dimension_numbers<[1], [0], [0], [1], [0, 0, 1, 1], [], []>} : vector<16x32xbf16>, vector<32x32xbf16>, vector<16x32xf32> -> vector<16x32xf32>
    %186 = arith.truncf %185 : vector<16x32xf32> to vector<16x32xbf16>
    %cst_95 = arith.constant dense<0.000000e+00> : vector<128x32xf32>
    %187 = tpu.matmul %28, %186, %cst_95 {dimension_numbers = #tpu.dot_dimension_numbers<[1], [0], [0], [1], [0, 0, 1, 1], [], []>} : vector<128x16xbf16>, vector<16x32xbf16>, vector<128x32xf32> -> vector<128x32xf32>
    %188 = arith.mulf %187, %106 : vector<128x32xf32>
    %189 = arith.truncf %188 : vector<128x32xf32> to vector<128x32xbf16>
    %cst_96 = arith.constant dense<0.000000e+00> : vector<16x32xf32>
    %190 = tpu.matmul %30, %189, %cst_96 {dimension_numbers = #tpu.dot_dimension_numbers<[1], [0], [0], [1], [0, 0, 1, 1], [], []>} : vector<16x128xbf16>, vector<128x32xbf16>, vector<16x32xf32> -> vector<16x32xf32>
    %191 = arith.truncf %190 : vector<16x32xf32> to vector<16x32xbf16>
    %c13 = arith.constant 13 : index
    %c0_97 = arith.constant 0 : index
    %c0_98 = arith.constant 0 : index
    %192 = vector.load %arg8[%c13, %c0_97, %c0_98] : memref<15x32x32xbf16, #tpu.memory_space<vmem>>, vector<1x32x32xbf16>
    %193 = vector.shape_cast %192 : vector<1x32x32xbf16> to vector<32x32xbf16>
    %cst_99 = arith.constant dense<0.000000e+00> : vector<16x32xf32>
    %194 = tpu.matmul %191, %193, %cst_99 {dimension_numbers = #tpu.dot_dimension_numbers<[1], [0], [0], [1], [0, 0, 1, 1], [], []>} : vector<16x32xbf16>, vector<32x32xbf16>, vector<16x32xf32> -> vector<16x32xf32>
    %195 = vector.extract_strided_slice %181 {offsets = [2, 0], sizes = [1, 32], strides = [1, 1]} : vector<4x32xf32> to vector<1x32xf32>
    %196 = vector.broadcast %195 : vector<1x32xf32> to vector<16x32xf32>
    %197 = arith.addf %194, %196 : vector<16x32xf32>
    %cst_100 = arith.constant 0.000000e+00 : f32
    %198 = vector.broadcast %cst_100 : f32 to vector<16x32xf32>
    %199 = arith.maximumf %197, %198 : vector<16x32xf32>
    %200 = math.absf %197 : vector<16x32xf32>
    %cst_101 = arith.constant 0.000000e+00 : f32
    %201 = vector.broadcast %cst_101 : f32 to vector<16x32xf32>
    %202 = arith.subf %201, %200 : vector<16x32xf32>
    %203 = math.exp %202 : vector<16x32xf32>
    %204 = math.log1p %203 : vector<16x32xf32>
    %205 = arith.addf %199, %204 : vector<16x32xf32>
    %cst_102 = arith.constant 0.693147182 : f32
    %206 = vector.broadcast %cst_102 : f32 to vector<16x32xf32>
    %207 = arith.subf %205, %206 : vector<16x32xf32>
    %208 = arith.truncf %207 : vector<16x32xf32> to vector<16x32xbf16>
    %c14 = arith.constant 14 : index
    %c0_103 = arith.constant 0 : index
    %c0_104 = arith.constant 0 : index
    %209 = vector.load %arg8[%c14, %c0_103, %c0_104] : memref<15x32x32xbf16, #tpu.memory_space<vmem>>, vector<1x32x32xbf16>
    %210 = vector.shape_cast %209 : vector<1x32x32xbf16> to vector<32x32xbf16>
    %cst_105 = arith.constant dense<0.000000e+00> : vector<16x32xf32>
    %211 = tpu.matmul %208, %210, %cst_105 {dimension_numbers = #tpu.dot_dimension_numbers<[1], [0], [0], [1], [0, 0, 1, 1], [], []>} : vector<16x32xbf16>, vector<32x32xbf16>, vector<16x32xf32> -> vector<16x32xf32>
    %212 = vector.extract_strided_slice %181 {offsets = [3, 0], sizes = [1, 32], strides = [1, 1]} : vector<4x32xf32> to vector<1x32xf32>
    %213 = vector.broadcast %212 : vector<1x32xf32> to vector<16x32xf32>
    %214 = arith.addf %211, %213 : vector<16x32xf32>
    %215 = arith.addf %179, %214 : vector<16x32xf32>
    %c0_106 = arith.constant 0 : index
    %c0_107 = arith.constant 0 : index
    %216 = vector.load %arg10[%c0_106, %c0_107] : memref<16x32xf32, #tpu.memory_space<vmem>>, vector<16x32xf32>
    tpu.vector_store %arg10[%c0_106, %c0_107], %215 {strides = array<i32>} : memref<16x32xf32, #tpu.memory_space<vmem>>, vector<16x32xf32>,
    return
  }
  func.func @transform_0(%arg0: i32) -> (i32, i32) {
    %c0_i32 = arith.constant 0 : i32
    %c0_i32_0 = arith.constant 0 : i32
    %c0_i32_1 = arith.constant 0 : i32
    return %c0_i32, %c0_i32_0 : i32, i32
  }
  func.func @transform_1(%arg0: i32) -> (i32, i32) {
    %c0_i32 = arith.constant 0 : i32
    %c0_i32_0 = arith.constant 0 : i32
    %c0_i32_1 = arith.constant 0 : i32
    return %c0_i32, %c0_i32_0 : i32, i32
  }
  func.func @transform_2(%arg0: i32) -> (i32, i32) {
    %c0_i32 = arith.constant 0 : i32
    %c0_i32_0 = arith.constant 0 : i32
    %c0_i32_1 = arith.constant 0 : i32
    return %c0_i32, %c0_i32_0 : i32, i32
  }
  func.func @transform_3(%arg0: i32) -> (i32, i32) {
    %c0_i32 = arith.constant 0 : i32
    %c0_i32_0 = arith.constant 0 : i32
    %c0_i32_1 = arith.constant 0 : i32
    return %c0_i32, %c0_i32_0 : i32, i32
  }
  func.func @transform_4(%arg0: i32) -> (i32, i32) {
    %c0_i32 = arith.constant 0 : i32
    %c0_i32_0 = arith.constant 0 : i32
    %c0_i32_1 = arith.constant 0 : i32
    return %c0_i32, %c0_i32_0 : i32, i32
  }
  func.func @transform_5(%arg0: i32) -> (i32, i32) {
    %c0_i32 = arith.constant 0 : i32
    %c0_i32_0 = arith.constant 0 : i32
    %c0_i32_1 = arith.constant 0 : i32
    return %c0_i32, %c0_i32_0 : i32, i32
  }
  func.func @transform_6(%arg0: i32) -> (i32, i32) {
    %c0_i32 = arith.constant 0 : i32
    %c0_i32_0 = arith.constant 0 : i32
    %c0_i32_1 = arith.constant 0 : i32
    return %c0_i32, %c0_i32_0 : i32, i32
  }
  func.func @transform_7(%arg0: i32) -> (i32, i32, i32) {
    %c0_i32 = arith.constant 0 : i32
    %c0_i32_0 = arith.constant 0 : i32
    %c0_i32_1 = arith.constant 0 : i32
    %c0_i32_2 = arith.constant 0 : i32
    return %c0_i32, %c0_i32_0, %c0_i32_1 : i32, i32, i32
  }
  func.func @transform_8(%arg0: i32) -> (i32, i32, i32) {
    %c0_i32 = arith.constant 0 : i32
    %c0_i32_0 = arith.constant 0 : i32
    %c0_i32_1 = arith.constant 0 : i32
    %c0_i32_2 = arith.constant 0 : i32
    return %c0_i32, %c0_i32_0, %c0_i32_1 : i32, i32, i32
  }
  func.func @transform_9(%arg0: i32) -> (i32, i32) {
    %c0_i32 = arith.constant 0 : i32
    %c0_i32_0 = arith.constant 0 : i32
    %c0_i32_1 = arith.constant 0 : i32
    return %c0_i32, %c0_i32_0 : i32, i32
  }
}

</mosaic_0001>

<llo_original>
// kernel: tpu_custom_call.1
$region0: #{tpu_custom_call.1}
  #allocation0 [shape = 'u32[]', space=smem, size = 0x4, offset = 0x4, fixed_abs, tag = 'smem constant byte address 0x4 - core index']
  #allocation1 [shape = 'u32[144,128]{1,0:T(1,128)}', space=vmem, size = 0x12000, scoped, tag = 'internal scratch']
  %s0 = inlined_call_operand.vmem [shape: f32[16,32], index: 0, kind: input, shape index: {}]
  %s1 = inlined_call_operand.vmem [shape: f32[128,22], index: 1, kind: input, shape index: {}]
  %s2 = inlined_call_operand.vmem [shape: f32[22,3], index: 2, kind: input, shape index: {}]
  %s3 = inlined_call_operand.vmem [shape: f32[128,16], index: 3, kind: input, shape index: {}]
  %s4 = inlined_call_operand.vmem [shape: f32[128,1], index: 4, kind: input, shape index: {}]
  %s5 = inlined_call_operand.vmem [shape: f32[1,32], index: 5, kind: input, shape index: {}]
  %s6 = inlined_call_operand.vmem [shape: f32[16,128], index: 6, kind: input, shape index: {}]
  %s7 = inlined_call_operand.vmem [shape: bf16[15,32,32], index: 7, kind: input, shape index: {}]
  %s8 = inlined_call_operand.vmem [shape: f32[3,4,32], index: 8, kind: input, shape index: {}]
  %s9 = inlined_call_operand.hbm [shape: f32[16,32], index: 9, kind: output, shape index: {}]
  %s10 = sld [smem:[#allocation0]]
  $region46: #{tpu_custom_call.1} parent=0
    _
  %s12 = ssub.s32 1, %s10
  %s13 = scalar_select 0, %s12, %s10
  $region1: #{tpu_custom_call.1} parent=0
    #allocation2 [shape = 'u8[8192]{0}', space=vmem, size = 0x2000, scoped, tag = 'output window, operand 0, single buffered']
    #allocation3 [shape = 's32[1]{0}', space=sflag, size = 0x4, scoped, tag = 'scoped memory for tpu_custom_call.1']
    %14 = vsyncpa [#allocation3], 0
    // Predicated region
    $region2: #{tpu_custom_call.1} parent=1 // pred_check
      _
    $region3: #{tpu_custom_call.1} parent=1 // pred_check_branch
      %16 = sbr.rel (0) target = $region5
    $region4: #{tpu_custom_call.1} parent=1 // pred_region
      _
    $region5: #{tpu_custom_call.1} parent=1 // pred_fallthru
      _
    // Predicated region
    $region6: #{tpu_custom_call.1} parent=1 // pred_check
      _
    $region7: #{tpu_custom_call.1} parent=1 // pred_check_branch
      %18 = sbr.rel (0) target = $region9
    $region8: #{tpu_custom_call.1} parent=1 // pred_region
      _
    $region9: #{tpu_custom_call.1} parent=1 // pred_fallthru
      _
    // Predicated region
    $region10: #{tpu_custom_call.1} parent=1 // pred_check
      _
    $region11: #{tpu_custom_call.1} parent=1 // pred_check_branch
      %20 = sbr.rel (0) target = $region13
    $region12: #{tpu_custom_call.1} parent=1 // pred_region
      _
    $region13: #{tpu_custom_call.1} parent=1 // pred_fallthru
      _
    // Predicated region
    $region14: #{tpu_custom_call.1} parent=1 // pred_check
      _
    $region15: #{tpu_custom_call.1} parent=1 // pred_check_branch
      %22 = sbr.rel (0) target = $region17
    $region16: #{tpu_custom_call.1} parent=1 // pred_region
      _
    $region17: #{tpu_custom_call.1} parent=1 // pred_fallthru
      _
    // Predicated region
    $region18: #{tpu_custom_call.1} parent=1 // pred_check
      _
    $region19: #{tpu_custom_call.1} parent=1 // pred_check_branch
      %24 = sbr.rel (0) target = $region21
    $region20: #{tpu_custom_call.1} parent=1 // pred_region
      _
    $region21: #{tpu_custom_call.1} parent=1 // pred_fallthru
      _
    // Predicated region
    $region22: #{tpu_custom_call.1} parent=1 // pred_check
      _
    $region23: #{tpu_custom_call.1} parent=1 // pred_check_branch
      %26 = sbr.rel (0) target = $region25
    $region24: #{tpu_custom_call.1} parent=1 // pred_region
      _
    $region25: #{tpu_custom_call.1} parent=1 // pred_fallthru
      _
    // Predicated region
    $region26: #{tpu_custom_call.1} parent=1 // pred_check
      _
    $region27: #{tpu_custom_call.1} parent=1 // pred_check_branch
      %28 = sbr.rel (0) target = $region29
    $region28: #{tpu_custom_call.1} parent=1 // pred_region
      _
    $region29: #{tpu_custom_call.1} parent=1 // pred_fallthru
      _
    // Predicated region
    $region30: #{tpu_custom_call.1} parent=1 // pred_check
      _
    $region31: #{tpu_custom_call.1} parent=1 // pred_check_branch
      %30 = sbr.rel (0) target = $region33
    $region32: #{tpu_custom_call.1} parent=1 // pred_region
      _
    $region33: #{tpu_custom_call.1} parent=1 // pred_fallthru
      _
    // Predicated region
    $region34: #{tpu_custom_call.1} parent=1 // pred_check
      _
    $region35: #{tpu_custom_call.1} parent=1 // pred_check_branch
      %32 = sbr.rel (0) target = $region37
    $region36: #{tpu_custom_call.1} parent=1 // pred_region
      _
    $region37: #{tpu_custom_call.1} parent=1 // pred_fallthru
      _
    %v34 = vld [vmem:[%s1] sm:$0xff]
    %v35 = vld [vmem:[%s1 + $0x8] sm:$0xff]
    %v36 = vld [vmem:[%s1 + $0x10] sm:$0xff]
    %v37 = vld [vmem:[%s1 + $0x18] sm:$0xff]
    %v38 = vld [vmem:[%s1 + $0x20] sm:$0xff]
    %v39 = vld [vmem:[%s1 + $0x28] sm:$0xff]
    %v40 = vld [vmem:[%s1 + $0x30] sm:$0xff]
    %v41 = vld [vmem:[%s1 + $0x38] sm:$0xff]
    %v42 = vld [vmem:[%s1 + $0x40] sm:$0xff]
    %v43 = vld [vmem:[%s1 + $0x48] sm:$0xff]
    %v44 = vld [vmem:[%s1 + $0x50] sm:$0xff]
    %v45 = vld [vmem:[%s1 + $0x58] sm:$0xff]
    %v46 = vld [vmem:[%s1 + $0x60] sm:$0xff]
    %v47 = vld [vmem:[%s1 + $0x68] sm:$0xff]
    %v48 = vld [vmem:[%s1 + $0x70] sm:$0xff]
    %v49 = vld [vmem:[%s1 + $0x78] sm:$0xff]
    %v50 = vld [vmem:[%s2] sm:$0xff]
    %v51 = vld [vmem:[%s2 + $0x8] sm:$0xff]
    %v52 = vld [vmem:[%s2 + $0x10] sm:$0x3f]
    %vm53 = vcmask 179200
    %v55 = vsel %vm53, %v34, 0
    %v58 = vsel %vm53, %v35, 0
    %v61 = vsel %vm53, %v36, 0
    %v64 = vsel %vm53, %v37, 0
    %v67 = vsel %vm53, %v38, 0
    %v70 = vsel %vm53, %v39, 0
    %v73 = vsel %vm53, %v40, 0
    %v76 = vsel %vm53, %v41, 0
    %v79 = vsel %vm53, %v42, 0
    %v82 = vsel %vm53, %v43, 0
    %v85 = vsel %vm53, %v44, 0
    %v88 = vsel %vm53, %v45, 0
    %v91 = vsel %vm53, %v46, 0
    %v94 = vsel %vm53, %v47, 0
    %v97 = vsel %vm53, %v48, 0
    %v100 = vsel %vm53, %v49, 0
    %vm102 = vcmask 1045504
    %v104 = vsel %vm102, %v52, 0
    %106 = vmatprep.subr.mxu0 0.0
    %107 = vmatpush1.msra.mxu0 %v50
    %108 = vmatprep.subr.mxu0 0.0
    %109 = vmatpush1.msra.mxu0 %v51
    %110 = vmatprep.subr.mxu0 0.0
    %111 = vmatpush1.msra.mxu0 %v104
    %112 = vmatprep.subr.mxu0 0.0
    %113 = vmatpush1.msra.mxu0 0.0
    %114 = vmatprep.subr.mxu0 0.0
    %115 = vmatpush1.msra.mxu0 0.0
    %116 = vmatprep.subr.mxu0 0.0
    %117 = vmatpush1.msra.mxu0 0.0
    %118 = vmatprep.subr.mxu0 0.0
    %119 = vmatpush1.msra.mxu0 0.0
    %120 = vmatprep.subr.mxu0 0.0
    %121 = vmatpush1.msra.mxu0 0.0
    %122 = vmatprep.subr.mxu0 0.0
    %123 = vmatpush1.msra.mxu0 0.0
    %124 = vmatprep.subr.mxu0 0.0
    %125 = vmatpush1.msra.mxu0 0.0
    %126 = vmatprep.subr.mxu0 0.0
    %127 = vmatpush1.msra.mxu0 0.0
    %128 = vmatprep.subr.mxu0 0.0
    %129 = vmatpush1.msra.mxu0 0.0
    %130 = vmatprep.subr.mxu0 0.0
    %131 = vmatpush1.msra.mxu0 0.0
    %132 = vmatprep.subr.mxu0 0.0
    %133 = vmatpush1.msra.mxu0 0.0
    %134 = vmatprep.subr.mxu0 0.0
    %135 = vmatpush1.msra.mxu0 0.0
    %136 = vmatprep.subr.mxu0 0.0
    %137 = vmatpush1.msra.mxu0 0.0
    %138 = vmatprep.subr.mxu0 0.0
    %139 = vmatpush1.msra.mxu0 0.0
    %140 = vmatprep.subr.mxu0 0.0
    %141 = vmatpush1.msra.mxu0 0.0
    %142 = vmatprep.subr.mxu0 0.0
    %143 = vmatpush1.msra.mxu0 0.0
    %144 = vmatprep.subr.mxu0 0.0
    %145 = vmatpush1.msra.mxu0 0.0
    %146 = vmatprep.subr.mxu0 0.0
    %147 = vmatpush1.msra.mxu0 0.0
    %148 = vmatprep.subr.mxu0 0.0
    %149 = vmatpush1.msra.mxu0 0.0
    %150 = vmatprep.subr.mxu0 0.0
    %151 = vmatpush1.msra.mxu0 0.0
    %152 = vmatprep.subr.mxu0 0.0
    %153 = vmatpush1.msra.mxu0 0.0
    %154 = vmatprep.subr.mxu0 0.0
    %155 = vmatpush1.msra.mxu0 0.0
    %156 = vmatprep.subr.mxu0 0.0
    %157 = vmatpush1.msra.mxu0 0.0
    %158 = vmatprep.subr.mxu0 0.0
    %159 = vmatpush1.msra.mxu0 0.0
    %160 = vmatprep.subr.mxu0 0.0
    %161 = vmatpush1.msra.mxu0 0.0
    %162 = vmatprep.subr.mxu0 0.0
    %163 = vmatpush1.msra.mxu0 0.0
    %164 = vmatprep.subr.mxu0 0.0
    %165 = vmatpush1.msra.mxu0 0.0
    %166 = vmatprep.subr.mxu0 0.0
    %167 = vmatpush1.msra.mxu0 0.0
    %168 = vmatprep.subr.mxu0 0.0
    %169 = vmatpush1.msra.mxu0 0.0
    %170 = vmatprep.mubr.f32.mxu0 0.0
    %171 = vmatmul.mubr.f32.gmra.mrb[0].mxu0 %v55
    %v172 = vpop.f32.mrb[0].mxu0
    %v173 = vadd.f32 0.0, %v172
    %v174 = vpop.f32.mrb[0].mxu0
    %175 = vmatprep.mubr.f32.mxu0 0.0
    %176 = vmatmul.mubr.f32.gmra.mrb[0].mxu0 %v58
    %v177 = vpop.f32.mrb[0].mxu0
    %v178 = vadd.f32 0.0, %v177
    %v179 = vpop.f32.mrb[0].mxu0
    %180 = vmatprep.mubr.f32.mxu0 0.0
    %181 = vmatmul.mubr.f32.gmra.mrb[0].mxu0 %v61
    %v182 = vpop.f32.mrb[0].mxu0
    %v183 = vadd.f32 0.0, %v182
    %v184 = vpop.f32.mrb[0].mxu0
    %185 = vmatprep.mubr.f32.mxu0 0.0
    %186 = vmatmul.mubr.f32.gmra.mrb[0].mxu0 %v64
    %v187 = vpop.f32.mrb[0].mxu0
    %v188 = vadd.f32 0.0, %v187
    %v189 = vpop.f32.mrb[0].mxu0
    %190 = vmatprep.mubr.f32.mxu0 0.0
    %191 = vmatmul.mubr.f32.gmra.mrb[0].mxu0 %v67
    %v192 = vpop.f32.mrb[0].mxu0
    %v193 = vadd.f32 0.0, %v192
    %v194 = vpop.f32.mrb[0].mxu0
    %195 = vmatprep.mubr.f32.mxu0 0.0
    %196 = vmatmul.mubr.f32.gmra.mrb[0].mxu0 %v70
    %v197 = vpop.f32.mrb[0].mxu0
    %v198 = vadd.f32 0.0, %v197
    %v199 = vpop.f32.mrb[0].mxu0
    %200 = vmatprep.mubr.f32.mxu0 0.0
    %201 = vmatmul.mubr.f32.gmra.mrb[0].mxu0 %v73
    %v202 = vpop.f32.mrb[0].mxu0
    %v203 = vadd.f32 0.0, %v202
    %v204 = vpop.f32.mrb[0].mxu0
    %205 = vmatprep.mubr.f32.mxu0 0.0
    %206 = vmatmul.mubr.f32.gmra.mrb[0].mxu0 %v76
    %v207 = vpop.f32.mrb[0].mxu0
    %v208 = vadd.f32 0.0, %v207
    %v209 = vpop.f32.mrb[0].mxu0
    %210 = vmatprep.mubr.f32.mxu0 0.0
    %211 = vmatmul.mubr.f32.gmra.mrb[0].mxu0 %v79
    %v212 = vpop.f32.mrb[0].mxu0
    %v213 = vadd.f32 0.0, %v212
    %v214 = vpop.f32.mrb[0].mxu0
    %215 = vmatprep.mubr.f32.mxu0 0.0
    %216 = vmatmul.mubr.f32.gmra.mrb[0].mxu0 %v82
    %v217 = vpop.f32.mrb[0].mxu0
    %v218 = vadd.f32 0.0, %v217
    %v219 = vpop.f32.mrb[0].mxu0
    %220 = vmatprep.mubr.f32.mxu0 0.0
    %221 = vmatmul.mubr.f32.gmra.mrb[0].mxu0 %v85
    %v222 = vpop.f32.mrb[0].mxu0
    %v223 = vadd.f32 0.0, %v222
    %v224 = vpop.f32.mrb[0].mxu0
    %225 = vmatprep.mubr.f32.mxu0 0.0
    %226 = vmatmul.mubr.f32.gmra.mrb[0].mxu0 %v88
    %v227 = vpop.f32.mrb[0].mxu0
    %v228 = vadd.f32 0.0, %v227
    %v229 = vpop.f32.mrb[0].mxu0
    %230 = vmatprep.mubr.f32.mxu0 0.0
    %231 = vmatmul.mubr.f32.gmra.mrb[0].mxu0 %v91
    %v232 = vpop.f32.mrb[0].mxu0
    %v233 = vadd.f32 0.0, %v232
    %v234 = vpop.f32.mrb[0].mxu0
    %235 = vmatprep.mubr.f32.mxu0 0.0
    %236 = vmatmul.mubr.f32.gmra.mrb[0].mxu0 %v94
    %v237 = vpop.f32.mrb[0].mxu0
    %v238 = vadd.f32 0.0, %v237
    %v239 = vpop.f32.mrb[0].mxu0
    %240 = vmatprep.mubr.f32.mxu0 0.0
    %241 = vmatmul.mubr.f32.gmra.mrb[0].mxu0 %v97
    %v242 = vpop.f32.mrb[0].mxu0
    %v243 = vadd.f32 0.0, %v242
    %v244 = vpop.f32.mrb[0].mxu0
    %245 = vmatprep.mubr.f32.mxu0 0.0
    %246 = vmatmul.mubr.f32.gmra.mrb[0].mxu0 %v100
    %v247 = vpop.f32.mrb[0].mxu0
    %v248 = vadd.f32 0.0, %v247
    %v249 = vpop.f32.mrb[0].mxu0
    %250 = vdwg.mxu0
    %v251 = vmul.f32 %v173, %v173
    %v252 = vmul.f32 %v178, %v178
    %v253 = vmul.f32 %v183, %v183
    %v254 = vmul.f32 %v188, %v188
    %v255 = vmul.f32 %v193, %v193
    %v256 = vmul.f32 %v198, %v198
    %v257 = vmul.f32 %v203, %v203
    %v258 = vmul.f32 %v208, %v208
    %v259 = vmul.f32 %v213, %v213
    %v260 = vmul.f32 %v218, %v218
    %v261 = vmul.f32 %v223, %v223
    %v262 = vmul.f32 %v228, %v228
    %v263 = vmul.f32 %v233, %v233
    %v264 = vmul.f32 %v238, %v238
    %v265 = vmul.f32 %v243, %v243
    %v266 = vmul.f32 %v248, %v248
    %vm267 = vcmask 23552
    %v268 = vsel %vm267, %v251, 0.0
    %269 = vadd.xlane.f32.xlu0 %v268
    %v270 = vpop.xlane.xlu0 %269
    %v271 = vsel %vm267, %v252, 0.0
    %272 = vadd.xlane.f32.xlu0 %v271
    %v273 = vpop.xlane.xlu0 %272
    %v274 = vsel %vm267, %v253, 0.0
    %275 = vadd.xlane.f32.xlu0 %v274
    %v276 = vpop.xlane.xlu0 %275
    %v277 = vsel %vm267, %v254, 0.0
    %278 = vadd.xlane.f32.xlu0 %v277
    %v279 = vpop.xlane.xlu0 %278
    %v280 = vsel %vm267, %v255, 0.0
    %281 = vadd.xlane.f32.xlu0 %v280
    %v282 = vpop.xlane.xlu0 %281
    %v283 = vsel %vm267, %v256, 0.0
    %284 = vadd.xlane.f32.xlu0 %v283
    %v285 = vpop.xlane.xlu0 %284
    %v286 = vsel %vm267, %v257, 0.0
    %287 = vadd.xlane.f32.xlu0 %v286
    %v288 = vpop.xlane.xlu0 %287
    %v289 = vsel %vm267, %v258, 0.0
    %290 = vadd.xlane.f32.xlu0 %v289
    %v291 = vpop.xlane.xlu0 %290
    %v292 = vsel %vm267, %v259, 0.0
    %293 = vadd.xlane.f32.xlu0 %v292
    %v294 = vpop.xlane.xlu0 %293
    %v295 = vsel %vm267, %v260, 0.0
    %296 = vadd.xlane.f32.xlu0 %v295
    %v297 = vpop.xlane.xlu0 %296
    %v298 = vsel %vm267, %v261, 0.0
    %299 = vadd.xlane.f32.xlu0 %v298
    %v300 = vpop.xlane.xlu0 %299
    %v301 = vsel %vm267, %v262, 0.0
    %302 = vadd.xlane.f32.xlu0 %v301
    %v303 = vpop.xlane.xlu0 %302
    %v304 = vsel %vm267, %v263, 0.0
    %305 = vadd.xlane.f32.xlu0 %v304
    %v306 = vpop.xlane.xlu0 %305
    %v307 = vsel %vm267, %v264, 0.0
    %308 = vadd.xlane.f32.xlu0 %v307
    %v309 = vpop.xlane.xlu0 %308
    %v310 = vsel %vm267, %v265, 0.0
    %311 = vadd.xlane.f32.xlu0 %v310
    %v312 = vpop.xlane.xlu0 %311
    %v313 = vsel %vm267, %v266, 0.0
    %314 = vadd.xlane.f32.xlu0 %v313
    %v315 = vpop.xlane.xlu0 %314
    %v316 = vrsqrt.pop %v270
    %v317 = vmul.f32 %v270, %v316
    %vm318 = vcmp.eq.f32.partialorder %v270, inf
    %v319 = vsel %vm318, %v270, %v317
    %vm320 = vcmp.eq.f32.partialorder %v270, 0.0
    %v321 = vand.u32 %v270, 2147483648
    %v322 = vsel %vm320, %v321, %v319
    %v323 = vrsqrt.pop %v273
    %v324 = vmul.f32 %v273, %v323
    %vm325 = vcmp.eq.f32.partialorder %v273, inf
    %v326 = vsel %vm325, %v273, %v324
    %vm327 = vcmp.eq.f32.partialorder %v273, 0.0
    %v328 = vand.u32 %v273, 2147483648
    %v329 = vsel %vm327, %v328, %v326
    %v330 = vrsqrt.pop %v276
    %v331 = vmul.f32 %v276, %v330
    %vm332 = vcmp.eq.f32.partialorder %v276, inf
    %v333 = vsel %vm332, %v276, %v331
    %vm334 = vcmp.eq.f32.partialorder %v276, 0.0
    %v335 = vand.u32 %v276, 2147483648
    %v336 = vsel %vm334, %v335, %v333
    %v337 = vrsqrt.pop %v279
    %v338 = vmul.f32 %v279, %v337
    %vm339 = vcmp.eq.f32.partialorder %v279, inf
    %v340 = vsel %vm339, %v279, %v338
    %vm341 = vcmp.eq.f32.partialorder %v279, 0.0
    %v342 = vand.u32 %v279, 2147483648
    %v343 = vsel %vm341, %v342, %v340
    %v344 = vrsqrt.pop %v282
    %v345 = vmul.f32 %v282, %v344
    %vm346 = vcmp.eq.f32.partialorder %v282, inf
    %v347 = vsel %vm346, %v282, %v345
    %vm348 = vcmp.eq.f32.partialorder %v282, 0.0
    %v349 = vand.u32 %v282, 2147483648
    %v350 = vsel %vm348, %v349, %v347
    %v351 = vrsqrt.pop %v285
    %v352 = vmul.f32 %v285, %v351
    %vm353 = vcmp.eq.f32.partialorder %v285, inf
    %v354 = vsel %vm353, %v285, %v352
    %vm355 = vcmp.eq.f32.partialorder %v285, 0.0
    %v356 = vand.u32 %v285, 2147483648
    %v357 = vsel %vm355, %v356, %v354
    %v358 = vrsqrt.pop %v288
    %v359 = vmul.f32 %v288, %v358
    %vm360 = vcmp.eq.f32.partialorder %v288, inf
    %v361 = vsel %vm360, %v288, %v359
    %vm362 = vcmp.eq.f32.partialorder %v288, 0.0
    %v363 = vand.u32 %v288, 2147483648
    %v364 = vsel %vm362, %v363, %v361
    %v365 = vrsqrt.pop %v291
    %v366 = vmul.f32 %v291, %v365
    %vm367 = vcmp.eq.f32.partialorder %v291, inf
    %v368 = vsel %vm367, %v291, %v366
    %vm369 = vcmp.eq.f32.partialorder %v291, 0.0
    %v370 = vand.u32 %v291, 2147483648
    %v371 = vsel %vm369, %v370, %v368
    %v372 = vrsqrt.pop %v294
    %v373 = vmul.f32 %v294, %v372
    %vm374 = vcmp.eq.f32.partialorder %v294, inf
    %v375 = vsel %vm374, %v294, %v373
    %vm376 = vcmp.eq.f32.partialorder %v294, 0.0
    %v377 = vand.u32 %v294, 2147483648
    %v378 = vsel %vm376, %v377, %v375
    %v379 = vrsqrt.pop %v297
    %v380 = vmul.f32 %v297, %v379
    %vm381 = vcmp.eq.f32.partialorder %v297, inf
    %v382 = vsel %vm381, %v297, %v380
    %vm383 = vcmp.eq.f32.partialorder %v297, 0.0
    %v384 = vand.u32 %v297, 2147483648
    %v385 = vsel %vm383, %v384, %v382
    %v386 = vrsqrt.pop %v300
    %v387 = vmul.f32 %v300, %v386
    %vm388 = vcmp.eq.f32.partialorder %v300, inf
    %v389 = vsel %vm388, %v300, %v387
    %vm390 = vcmp.eq.f32.partialorder %v300, 0.0
    %v391 = vand.u32 %v300, 2147483648
    %v392 = vsel %vm390, %v391, %v389
    %v393 = vrsqrt.pop %v303
    %v394 = vmul.f32 %v303, %v393
    %vm395 = vcmp.eq.f32.partialorder %v303, inf
    %v396 = vsel %vm395, %v303, %v394
    %vm397 = vcmp.eq.f32.partialorder %v303, 0.0
    %v398 = vand.u32 %v303, 2147483648
    %v399 = vsel %vm397, %v398, %v396
    %v400 = vrsqrt.pop %v306
    %v401 = vmul.f32 %v306, %v400
    %vm402 = vcmp.eq.f32.partialorder %v306, inf
    %v403 = vsel %vm402, %v306, %v401
    %vm404 = vcmp.eq.f32.partialorder %v306, 0.0
    %v405 = vand.u32 %v306, 2147483648
    %v406 = vsel %vm404, %v405, %v403
    %v407 = vrsqrt.pop %v309
    %v408 = vmul.f32 %v309, %v407
    %vm409 = vcmp.eq.f32.partialorder %v309, inf
    %v410 = vsel %vm409, %v309, %v408
    %vm411 = vcmp.eq.f32.partialorder %v309, 0.0
    %v412 = vand.u32 %v309, 2147483648
    %v413 = vsel %vm411, %v412, %v410
    %v414 = vrsqrt.pop %v312
    %v415 = vmul.f32 %v312, %v414
    %vm416 = vcmp.eq.f32.partialorder %v312, inf
    %v417 = vsel %vm416, %v312, %v415
    %vm418 = vcmp.eq.f32.partialorder %v312, 0.0
    %v419 = vand.u32 %v312, 2147483648
    %v420 = vsel %vm418, %v419, %v417
    %v421 = vrsqrt.pop %v315
    %v422 = vmul.f32 %v315, %v421
    %vm423 = vcmp.eq.f32.partialorder %v315, inf
    %v424 = vsel %vm423, %v315, %v422
    %vm425 = vcmp.eq.f32.partialorder %v315, 0.0
    %v426 = vand.u32 %v315, 2147483648
    %v427 = vsel %vm425, %v426, %v424
    %v428 = vld [vmem:[%s4] sm:$0xff]
    %v429 = vld [vmem:[%s4 + $0x8] sm:$0xff]
    %v430 = vld [vmem:[%s4 + $0x10] sm:$0xff]
    %v431 = vld [vmem:[%s4 + $0x18] sm:$0xff]
    %v432 = vld [vmem:[%s4 + $0x20] sm:$0xff]
    %v433 = vld [vmem:[%s4 + $0x28] sm:$0xff]
    %v434 = vld [vmem:[%s4 + $0x30] sm:$0xff]
    %v435 = vld [vmem:[%s4 + $0x38] sm:$0xff]
    %v436 = vld [vmem:[%s4 + $0x40] sm:$0xff]
    %v437 = vld [vmem:[%s4 + $0x48] sm:$0xff]
    %v438 = vld [vmem:[%s4 + $0x50] sm:$0xff]
    %v439 = vld [vmem:[%s4 + $0x58] sm:$0xff]
    %v440 = vld [vmem:[%s4 + $0x60] sm:$0xff]
    %v441 = vld [vmem:[%s4 + $0x68] sm:$0xff]
    %v442 = vld [vmem:[%s4 + $0x70] sm:$0xff]
    %v443 = vld [vmem:[%s4 + $0x78] sm:$0xff]
    %vm444 = vcmp.ne.f32.partialorder %v428, 0.0
    %vm445 = vcmp.ne.f32.partialorder %v429, 0.0
    %vm446 = vcmp.ne.f32.partialorder %v430, 0.0
    %vm447 = vcmp.ne.f32.partialorder %v431, 0.0
    %vm448 = vcmp.ne.f32.partialorder %v432, 0.0
    %vm449 = vcmp.ne.f32.partialorder %v433, 0.0
    %vm450 = vcmp.ne.f32.partialorder %v434, 0.0
    %vm451 = vcmp.ne.f32.partialorder %v435, 0.0
    %vm452 = vcmp.ne.f32.partialorder %v436, 0.0
    %vm453 = vcmp.ne.f32.partialorder %v437, 0.0
    %vm454 = vcmp.ne.f32.partialorder %v438, 0.0
    %vm455 = vcmp.ne.f32.partialorder %v439, 0.0
    %vm456 = vcmp.ne.f32.partialorder %v440, 0.0
    %vm457 = vcmp.ne.f32.partialorder %v441, 0.0
    %vm458 = vcmp.ne.f32.partialorder %v442, 0.0
    %vm459 = vcmp.ne.f32.partialorder %v443, 0.0
    %v460 = vsel %vm444, %v322, 0.0
    %v461 = vsel %vm445, %v329, 0.0
    %v462 = vsel %vm446, %v336, 0.0
    %v463 = vsel %vm447, %v343, 0.0
    %v464 = vsel %vm448, %v350, 0.0
    %v465 = vsel %vm449, %v357, 0.0
    %v466 = vsel %vm450, %v364, 0.0
    %v467 = vsel %vm451, %v371, 0.0
    %v468 = vsel %vm452, %v378, 0.0
    %v469 = vsel %vm453, %v385, 0.0
    %v470 = vsel %vm454, %v392, 0.0
    %v471 = vsel %vm455, %v399, 0.0
    %v472 = vsel %vm456, %v406, 0.0
    %v473 = vsel %vm457, %v413, 0.0
    %v474 = vsel %vm458, %v420, 0.0
    %v475 = vsel %vm459, %v427, 0.0
    %v476 = vld [vmem:[%s5] sm:$0x1]
    %478 = vset.pattern.permute.xlu0 0
    %479 = vperm.xlu0 %478, %v460
    %v480 = vpop.permute.xlu0 %479
    %483 = vset.pattern.permute.xlu0 0
    %484 = vperm.xlu0 %483, %v461
    %v485 = vpop.permute.xlu0 %484
    %488 = vset.pattern.permute.xlu0 0
    %489 = vperm.xlu0 %488, %v462
    %v490 = vpop.permute.xlu0 %489
    %493 = vset.pattern.permute.xlu0 0
    %494 = vperm.xlu0 %493, %v463
    %v495 = vpop.permute.xlu0 %494
    %498 = vset.pattern.permute.xlu0 0
    %499 = vperm.xlu0 %498, %v464
    %v500 = vpop.permute.xlu0 %499
    %503 = vset.pattern.permute.xlu0 0
    %504 = vperm.xlu0 %503, %v465
    %v505 = vpop.permute.xlu0 %504
    %508 = vset.pattern.permute.xlu0 0
    %509 = vperm.xlu0 %508, %v466
    %v510 = vpop.permute.xlu0 %509
    %513 = vset.pattern.permute.xlu0 0
    %514 = vperm.xlu0 %513, %v467
    %v515 = vpop.permute.xlu0 %514
    %518 = vset.pattern.permute.xlu0 0
    %519 = vperm.xlu0 %518, %v468
    %v520 = vpop.permute.xlu0 %519
    %523 = vset.pattern.permute.xlu0 0
    %524 = vperm.xlu0 %523, %v469
    %v525 = vpop.permute.xlu0 %524
    %528 = vset.pattern.permute.xlu0 0
    %529 = vperm.xlu0 %528, %v470
    %v530 = vpop.permute.xlu0 %529
    %533 = vset.pattern.permute.xlu0 0
    %534 = vperm.xlu0 %533, %v471
    %v535 = vpop.permute.xlu0 %534
    %538 = vset.pattern.permute.xlu0 0
    %539 = vperm.xlu0 %538, %v472
    %v540 = vpop.permute.xlu0 %539
    %543 = vset.pattern.permute.xlu0 0
    %544 = vperm.xlu0 %543, %v473
    %v545 = vpop.permute.xlu0 %544
    %548 = vset.pattern.permute.xlu0 0
    %549 = vperm.xlu0 %548, %v474
    %v550 = vpop.permute.xlu0 %549
    %553 = vset.pattern.permute.xlu0 0
    %554 = vperm.xlu0 %553, %v475
    %v555 = vpop.permute.xlu0 %554
    %v558 = vlaneseq
    %v559 = vshrl.u32 %v558, 7
    %v560 = vsub.s32 0, %v559
    %v561 = vrot.slane %v476, %v560
    %v563 = vsub.f32 %v480, %v561
    %v564 = vsub.f32 %v485, %v561
    %v565 = vsub.f32 %v490, %v561
    %v566 = vsub.f32 %v495, %v561
    %v567 = vsub.f32 %v500, %v561
    %v568 = vsub.f32 %v505, %v561
    %v569 = vsub.f32 %v510, %v561
    %v570 = vsub.f32 %v515, %v561
    %v571 = vsub.f32 %v520, %v561
    %v572 = vsub.f32 %v525, %v561
    %v573 = vsub.f32 %v530, %v561
    %v574 = vsub.f32 %v535, %v561
    %v575 = vsub.f32 %v540, %v561
    %v576 = vsub.f32 %v545, %v561
    %v577 = vsub.f32 %v550, %v561
    %v578 = vsub.f32 %v555, %v561
    %v579 = vmul.f32 %v563, -11.52
    %v580 = vmul.f32 %v564, -11.52
    %v581 = vmul.f32 %v565, -11.52
    %v582 = vmul.f32 %v566, -11.52
    %v583 = vmul.f32 %v567, -11.52
    %v584 = vmul.f32 %v568, -11.52
    %v585 = vmul.f32 %v569, -11.52
    %v586 = vmul.f32 %v570, -11.52
    %v587 = vmul.f32 %v571, -11.52
    %v588 = vmul.f32 %v572, -11.52
    %v589 = vmul.f32 %v573, -11.52
    %v590 = vmul.f32 %v574, -11.52
    %v591 = vmul.f32 %v575, -11.52
    %v592 = vmul.f32 %v576, -11.52
    %v593 = vmul.f32 %v577, -11.52
    %v594 = vmul.f32 %v578, -11.52
    %v595 = vmul.f32 %v579, %v563
    %v596 = vmul.f32 %v580, %v564
    %v597 = vmul.f32 %v581, %v565
    %v598 = vmul.f32 %v582, %v566
    %v599 = vmul.f32 %v583, %v567
    %v600 = vmul.f32 %v584, %v568
    %v601 = vmul.f32 %v585, %v569
    %v602 = vmul.f32 %v586, %v570
    %v603 = vmul.f32 %v587, %v571
    %v604 = vmul.f32 %v588, %v572
    %v605 = vmul.f32 %v589, %v573
    %v606 = vmul.f32 %v590, %v574
    %v607 = vmul.f32 %v591, %v575
    %v608 = vmul.f32 %v592, %v576
    %v609 = vmul.f32 %v593, %v577
    %v610 = vmul.f32 %v594, %v578
    %v611 = vmul.f32 %v595, 1.442695
    %v612 = vpow.pop %v611
    %v613 = vmul.f32 %v596, 1.442695
    %v614 = vpow.pop %v613
    %v615 = vmul.f32 %v597, 1.442695
    %v616 = vpow.pop %v615
    %v617 = vmul.f32 %v598, 1.442695
    %v618 = vpow.pop %v617
    %v619 = vmul.f32 %v599, 1.442695
    %v620 = vpow.pop %v619
    %v621 = vmul.f32 %v600, 1.442695
    %v622 = vpow.pop %v621
    %v623 = vmul.f32 %v601, 1.442695
    %v624 = vpow.pop %v623
    %v625 = vmul.f32 %v602, 1.442695
    %v626 = vpow.pop %v625
    %v627 = vmul.f32 %v603, 1.442695
    %v628 = vpow.pop %v627
    %v629 = vmul.f32 %v604, 1.442695
    %v630 = vpow.pop %v629
    %v631 = vmul.f32 %v605, 1.442695
    %v632 = vpow.pop %v631
    %v633 = vmul.f32 %v606, 1.442695
    %v634 = vpow.pop %v633
    %v635 = vmul.f32 %v607, 1.442695
    %v636 = vpow.pop %v635
    %v637 = vmul.f32 %v608, 1.442695
    %v638 = vpow.pop %v637
    %v639 = vmul.f32 %v609, 1.442695
    %v640 = vpow.pop %v639
    %v641 = vmul.f32 %v610, 1.442695
    %v642 = vpow.pop %v641
    %vm643 = vcmp.le.f32.partialorder %v460, 5.0
    %vm644 = vcmp.le.f32.partialorder %v461, 5.0
    %vm645 = vcmp.le.f32.partialorder %v462, 5.0
    %vm646 = vcmp.le.f32.partialorder %v463, 5.0
    %vm647 = vcmp.le.f32.partialorder %v464, 5.0
    %vm648 = vcmp.le.f32.partialorder %v465, 5.0
    %vm649 = vcmp.le.f32.partialorder %v466, 5.0
    %vm650 = vcmp.le.f32.partialorder %v467, 5.0
    %vm651 = vcmp.le.f32.partialorder %v468, 5.0
    %vm652 = vcmp.le.f32.partialorder %v469, 5.0
    %vm653 = vcmp.le.f32.partialorder %v470, 5.0
    %vm654 = vcmp.le.f32.partialorder %v471, 5.0
    %vm655 = vcmp.le.f32.partialorder %v472, 5.0
    %vm656 = vcmp.le.f32.partialorder %v473, 5.0
    %vm657 = vcmp.le.f32.partialorder %v474, 5.0
    %vm658 = vcmp.le.f32.partialorder %v475, 5.0
    %v659 = vsel %vm643, 1, 0
    %v660 = vsel %vm644, 1, 0
    %v661 = vsel %vm645, 1, 0
    %v662 = vsel %vm646, 1, 0
    %v663 = vsel %vm647, 1, 0
    %v664 = vsel %vm648, 1, 0
    %v665 = vsel %vm649, 1, 0
    %v666 = vsel %vm650, 1, 0
    %v667 = vsel %vm651, 1, 0
    %v668 = vsel %vm652, 1, 0
    %v669 = vsel %vm653, 1, 0
    %v670 = vsel %vm654, 1, 0
    %v671 = vsel %vm655, 1, 0
    %v672 = vsel %vm656, 1, 0
    %v673 = vsel %vm657, 1, 0
    %v674 = vsel %vm658, 1, 0
    %v675 = vcvt.s32.f32 %v659
    %v676 = vcvt.s32.f32 %v660
    %v677 = vcvt.s32.f32 %v661
    %v678 = vcvt.s32.f32 %v662
    %v679 = vcvt.s32.f32 %v663
    %v680 = vcvt.s32.f32 %v664
    %v681 = vcvt.s32.f32 %v665
    %v682 = vcvt.s32.f32 %v666
    %v683 = vcvt.s32.f32 %v667
    %v684 = vcvt.s32.f32 %v668
    %v685 = vcvt.s32.f32 %v669
    %v686 = vcvt.s32.f32 %v670
    %v687 = vcvt.s32.f32 %v671
    %v688 = vcvt.s32.f32 %v672
    %v689 = vcvt.s32.f32 %v673
    %v690 = vcvt.s32.f32 %v674
    %v691 = vmul.f32 %v675, %v428
    %v692 = vmul.f32 %v676, %v429
    %v693 = vmul.f32 %v677, %v430
    %v694 = vmul.f32 %v678, %v431
    %v695 = vmul.f32 %v679, %v432
    %v696 = vmul.f32 %v680, %v433
    %v697 = vmul.f32 %v681, %v434
    %v698 = vmul.f32 %v682, %v435
    %v699 = vmul.f32 %v683, %v436
    %v700 = vmul.f32 %v684, %v437
    %v701 = vmul.f32 %v685, %v438
    %v702 = vmul.f32 %v686, %v439
    %v703 = vmul.f32 %v687, %v440
    %v704 = vmul.f32 %v688, %v441
    %v705 = vmul.f32 %v689, %v442
    %v706 = vmul.f32 %v690, %v443
    %v707 = vld [vmem:[%s3] sm:$0xff]
    %v708 = vld [vmem:[%s3 + $0x8] sm:$0xff]
    %v709 = vld [vmem:[%s3 + $0x10] sm:$0xff]
    %v710 = vld [vmem:[%s3 + $0x18] sm:$0xff]
    %v711 = vld [vmem:[%s3 + $0x20] sm:$0xff]
    %v712 = vld [vmem:[%s3 + $0x28] sm:$0xff]
    %v713 = vld [vmem:[%s3 + $0x30] sm:$0xff]
    %v714 = vld [vmem:[%s3 + $0x38] sm:$0xff]
    %v715 = vld [vmem:[%s3 + $0x40] sm:$0xff]
    %v716 = vld [vmem:[%s3 + $0x48] sm:$0xff]
    %v717 = vld [vmem:[%s3 + $0x50] sm:$0xff]
    %v718 = vld [vmem:[%s3 + $0x58] sm:$0xff]
    %v719 = vld [vmem:[%s3 + $0x60] sm:$0xff]
    %v720 = vld [vmem:[%s3 + $0x68] sm:$0xff]
    %v721 = vld [vmem:[%s3 + $0x70] sm:$0xff]
    %v722 = vld [vmem:[%s3 + $0x78] sm:$0xff]
    %724 = vset.pattern.permute.xlu0 0
    %725 = vperm.xlu0 %724, %v691
    %v726 = vpop.permute.xlu0 %725
    %729 = vset.pattern.permute.xlu0 0
    %730 = vperm.xlu0 %729, %v692
    %v731 = vpop.permute.xlu0 %730
    %734 = vset.pattern.permute.xlu0 0
    %735 = vperm.xlu0 %734, %v693
    %v736 = vpop.permute.xlu0 %735
    %739 = vset.pattern.permute.xlu0 0
    %740 = vperm.xlu0 %739, %v694
    %v741 = vpop.permute.xlu0 %740
    %744 = vset.pattern.permute.xlu0 0
    %745 = vperm.xlu0 %744, %v695
    %v746 = vpop.permute.xlu0 %745
    %749 = vset.pattern.permute.xlu0 0
    %750 = vperm.xlu0 %749, %v696
    %v751 = vpop.permute.xlu0 %750
    %754 = vset.pattern.permute.xlu0 0
    %755 = vperm.xlu0 %754, %v697
    %v756 = vpop.permute.xlu0 %755
    %759 = vset.pattern.permute.xlu0 0
    %760 = vperm.xlu0 %759, %v698
    %v761 = vpop.permute.xlu0 %760
    %764 = vset.pattern.permute.xlu0 0
    %765 = vperm.xlu0 %764, %v699
    %v766 = vpop.permute.xlu0 %765
    %769 = vset.pattern.permute.xlu0 0
    %770 = vperm.xlu0 %769, %v700
    %v771 = vpop.permute.xlu0 %770
    %774 = vset.pattern.permute.xlu0 0
    %775 = vperm.xlu0 %774, %v701
    %v776 = vpop.permute.xlu0 %775
    %779 = vset.pattern.permute.xlu0 0
    %780 = vperm.xlu0 %779, %v702
    %v781 = vpop.permute.xlu0 %780
    %784 = vset.pattern.permute.xlu0 0
    %785 = vperm.xlu0 %784, %v703
    %v786 = vpop.permute.xlu0 %785
    %789 = vset.pattern.permute.xlu0 0
    %790 = vperm.xlu0 %789, %v704
    %v791 = vpop.permute.xlu0 %790
    %794 = vset.pattern.permute.xlu0 0
    %795 = vperm.xlu0 %794, %v705
    %v796 = vpop.permute.xlu0 %795
    %799 = vset.pattern.permute.xlu0 0
    %800 = vperm.xlu0 %799, %v706
    %v801 = vpop.permute.xlu0 %800
    %v803 = vmul.f32 %v707, %v726
    %v804 = vmul.f32 %v708, %v731
    %v805 = vmul.f32 %v709, %v736
    %v806 = vmul.f32 %v710, %v741
    %v807 = vmul.f32 %v711, %v746
    %v808 = vmul.f32 %v712, %v751
    %v809 = vmul.f32 %v713, %v756
    %v810 = vmul.f32 %v714, %v761
    %v811 = vmul.f32 %v715, %v766
    %v812 = vmul.f32 %v716, %v771
    %v813 = vmul.f32 %v717, %v776
    %v814 = vmul.f32 %v718, %v781
    %v815 = vmul.f32 %v719, %v786
    %v816 = vmul.f32 %v720, %v791
    %v817 = vmul.f32 %v721, %v796
    %v818 = vmul.f32 %v722, %v801
    %v819 = vpack.c.bf16 %v804, %v803
    %v820 = vpack.c.bf16 %v806, %v805
    %v821 = vpack.c.bf16 %v808, %v807
    %v822 = vpack.c.bf16 %v810, %v809
    %v823 = vpack.c.bf16 %v812, %v811
    %v824 = vpack.c.bf16 %v814, %v813
    %v825 = vpack.c.bf16 %v816, %v815
    %v826 = vpack.c.bf16 %v818, %v817
    %v827 = vld [vmem:[%s6] sm:$0xff]
    %v828 = vld [vmem:[%s6 + $0x8] sm:$0xff]
    %v829 = vpack.c.bf16 %v828, %v827
    %v830 = vpack.c.bf16 %v614, %v612
    %v831 = vpack.c.bf16 %v618, %v616
    %v832 = vpack.c.bf16 %v622, %v620
    %v833 = vpack.c.bf16 %v626, %v624
    %v834 = vpack.c.bf16 %v630, %v628
    %v835 = vpack.c.bf16 %v634, %v632
    %v836 = vpack.c.bf16 %v638, %v636
    %v837 = vpack.c.bf16 %v642, %v640
    %v838 = vld [vmem:[%s8] sm:$0xf]
    %v839 = vld [vmem:[%s7] sm:$0xf]
    %v840 = vld [vmem:[%s7 + $0x4] sm:$0xf]
    %v841 = vld [vmem:[%s7 + $0x8] sm:$0xf]
    %v842 = vld [vmem:[%s7 + $0xc] sm:$0xf]
    %v843 = vlaneseq
    %v844 = vshrl.u32 %v843, 7
    %v845 = vsub.s32 0, %v844
    %v846 = vrot.slane %v838, %v845
    %v851 = vunpack.c.l.b16 %v839
    %v852 = vunpack.c.l.b16 %v840
    %v853 = vunpack.c.l.b16 %v841
    %v854 = vunpack.c.l.b16 %v842
    %v855 = vpack.c.b16 %v852, %v851
    %v856 = vpack.c.b16 %v854, %v853
    %vm859 = vcmask 261120
    %v861 = vsel %vm859, %v830, 0
    %v864 = vsel %vm859, %v831, 0
    %v867 = vsel %vm859, %v832, 0
    %v870 = vsel %vm859, %v833, 0
    %v873 = vsel %vm859, %v834, 0
    %v876 = vsel %vm859, %v835, 0
    %v879 = vsel %vm859, %v836, 0
    %v882 = vsel %vm859, %v837, 0
    %884 = vmatprep.subr.bf16.mxu0 0
    %885 = vmatpush1.bf16.msra.mxu0 %v855
    %886 = vmatprep.subr.bf16.mxu0 0
    %887 = vmatpush1.bf16.msra.mxu0 %v856
    %888 = vmatprep.subr.bf16.mxu0 0
    %889 = vmatpush1.bf16.msra.mxu0 0
    %890 = vmatprep.subr.bf16.mxu0 0
    %891 = vmatpush1.bf16.msra.mxu0 0
    %892 = vmatprep.subr.bf16.mxu0 0
    %893 = vmatpush1.bf16.msra.mxu0 0
    %894 = vmatprep.subr.bf16.mxu0 0
    %895 = vmatpush1.bf16.msra.mxu0 0
    %896 = vmatprep.subr.bf16.mxu0 0
    %897 = vmatpush1.bf16.msra.mxu0 0
    %898 = vmatprep.subr.bf16.mxu0 0
    %899 = vmatpush1.bf16.msra.mxu0 0
    %900 = vmatprep.subr.bf16.mxu0 0
    %901 = vmatpush1.bf16.msra.mxu0 0
    %902 = vmatprep.subr.bf16.mxu0 0
    %903 = vmatpush1.bf16.msra.mxu0 0
    %904 = vmatprep.subr.bf16.mxu0 0
    %905 = vmatpush1.bf16.msra.mxu0 0
    %906 = vmatprep.subr.bf16.mxu0 0
    %907 = vmatpush1.bf16.msra.mxu0 0
    %908 = vmatprep.subr.bf16.mxu0 0
    %909 = vmatpush1.bf16.msra.mxu0 0
    %910 = vmatprep.subr.bf16.mxu0 0
    %911 = vmatpush1.bf16.msra.mxu0 0
    %912 = vmatprep.subr.bf16.mxu0 0
    %913 = vmatpush1.bf16.msra.mxu0 0
    %914 = vmatprep.subr.bf16.mxu0 0
    %915 = vmatpush1.bf16.msra.mxu0 0
    %916 = vmatprep.mubr.bf16.mxu0 0
    %917 = vmatmul.mubr.bf16.gmra.mrb[0].mxu0 %v861
    %v918 = vpop.f32.mrb[0].mxu0
    %v919 = vadd.f32 %v846, %v918
    %v920 = vpop.f32.mrb[0].mxu0
    %v921 = vpop.f32.mrb[0].mxu0
    %v922 = vadd.f32 %v846, %v921
    %v923 = vpop.f32.mrb[0].mxu0
    %924 = vmatprep.mubr.bf16.mxu0 0
    %925 = vmatmul.mubr.bf16.gmra.mrb[0].mxu0 %v864
    %v926 = vpop.f32.mrb[0].mxu0
    %v927 = vadd.f32 %v846, %v926
    %v928 = vpop.f32.mrb[0].mxu0
    %v929 = vpop.f32.mrb[0].mxu0
    %v930 = vadd.f32 %v846, %v929
    %v931 = vpop.f32.mrb[0].mxu0
    %932 = vmatprep.mubr.bf16.mxu0 0
    %933 = vmatmul.mubr.bf16.gmra.mrb[0].mxu0 %v867
    %v934 = vpop.f32.mrb[0].mxu0
    %v935 = vadd.f32 %v846, %v934
    %v936 = vpop.f32.mrb[0].mxu0
    %v937 = vpop.f32.mrb[0].mxu0
    %v938 = vadd.f32 %v846, %v937
    %v939 = vpop.f32.mrb[0].mxu0
    %940 = vmatprep.mubr.bf16.mxu0 0
    %941 = vmatmul.mubr.bf16.gmra.mrb[0].mxu0 %v870
    %v942 = vpop.f32.mrb[0].mxu0
    %v943 = vadd.f32 %v846, %v942
    %v944 = vpop.f32.mrb[0].mxu0
    %v945 = vpop.f32.mrb[0].mxu0
    %v946 = vadd.f32 %v846, %v945
    %v947 = vpop.f32.mrb[0].mxu0
    %948 = vmatprep.mubr.bf16.mxu0 0
    %949 = vmatmul.mubr.bf16.gmra.mrb[0].mxu0 %v873
    %v950 = vpop.f32.mrb[0].mxu0
    %v951 = vadd.f32 %v846, %v950
    %v952 = vpop.f32.mrb[0].mxu0
    %v953 = vpop.f32.mrb[0].mxu0
    %v954 = vadd.f32 %v846, %v953
    %v955 = vpop.f32.mrb[0].mxu0
    %956 = vmatprep.mubr.bf16.mxu0 0
    %957 = vmatmul.mubr.bf16.gmra.mrb[0].mxu0 %v876
    %v958 = vpop.f32.mrb[0].mxu0
    %v959 = vadd.f32 %v846, %v958
    %v960 = vpop.f32.mrb[0].mxu0
    %v961 = vpop.f32.mrb[0].mxu0
    %v962 = vadd.f32 %v846, %v961
    %v963 = vpop.f32.mrb[0].mxu0
    %964 = vmatprep.mubr.bf16.mxu0 0
    %965 = vmatmul.mubr.bf16.gmra.mrb[0].mxu0 %v879
    %v966 = vpop.f32.mrb[0].mxu0
    %v967 = vadd.f32 %v846, %v966
    %v968 = vpop.f32.mrb[0].mxu0
    %v969 = vpop.f32.mrb[0].mxu0
    %v970 = vadd.f32 %v846, %v969
    %v971 = vpop.f32.mrb[0].mxu0
    %972 = vmatprep.mubr.bf16.mxu0 0
    %973 = vmatmul.mubr.bf16.gmra.mrb[0].mxu0 %v882
    %v974 = vpop.f32.mrb[0].mxu0
    %v975 = vadd.f32 %v846, %v974
    %v976 = vpop.f32.mrb[0].mxu0
    %v977 = vpop.f32.mrb[0].mxu0
    %v978 = vadd.f32 %v846, %v977
    %v979 = vpop.f32.mrb[0].mxu0
    %980 = vdwg.mxu0
    %v981 = vmax.f32 %v919, 0.0
    %v982 = vmax.f32 %v922, 0.0
    %v983 = vmax.f32 %v927, 0.0
    %v984 = vmax.f32 %v930, 0.0
    %v985 = vmax.f32 %v935, 0.0
    %v986 = vmax.f32 %v938, 0.0
    %v987 = vmax.f32 %v943, 0.0
    %v988 = vmax.f32 %v946, 0.0
    %v989 = vmax.f32 %v951, 0.0
    %v990 = vmax.f32 %v954, 0.0
    %v991 = vmax.f32 %v959, 0.0
    %v992 = vmax.f32 %v962, 0.0
    %v993 = vmax.f32 %v967, 0.0
    %v994 = vmax.f32 %v970, 0.0
    %v995 = vmax.f32 %v975, 0.0
    %v996 = vmax.f32 %v978, 0.0
    %v997 = vand.u32 2147483647, %v919
    %v998 = vand.u32 2147483647, %v922
    %v999 = vand.u32 2147483647, %v927
    %v1000 = vand.u32 2147483647, %v930
    %v1001 = vand.u32 2147483647, %v935
    %v1002 = vand.u32 2147483647, %v938
    %v1003 = vand.u32 2147483647, %v943
    %v1004 = vand.u32 2147483647, %v946
    %v1005 = vand.u32 2147483647, %v951
    %v1006 = vand.u32 2147483647, %v954
    %v1007 = vand.u32 2147483647, %v959
    %v1008 = vand.u32 2147483647, %v962
    %v1009 = vand.u32 2147483647, %v967
    %v1010 = vand.u32 2147483647, %v970
    %v1011 = vand.u32 2147483647, %v975
    %v1012 = vand.u32 2147483647, %v978
    %v1013 = vsub.f32 0.0, %v997
    %v1014 = vsub.f32 0.0, %v998
    %v1015 = vsub.f32 0.0, %v999
    %v1016 = vsub.f32 0.0, %v1000
    %v1017 = vsub.f32 0.0, %v1001
    %v1018 = vsub.f32 0.0, %v1002
    %v1019 = vsub.f32 0.0, %v1003
    %v1020 = vsub.f32 0.0, %v1004
    %v1021 = vsub.f32 0.0, %v1005
    %v1022 = vsub.f32 0.0, %v1006
    %v1023 = vsub.f32 0.0, %v1007
    %v1024 = vsub.f32 0.0, %v1008
    %v1025 = vsub.f32 0.0, %v1009
    %v1026 = vsub.f32 0.0, %v1010
    %v1027 = vsub.f32 0.0, %v1011
    %v1028 = vsub.f32 0.0, %v1012
    %v1029 = vmul.f32 %v1013, 1.442695
    %v1030 = vpow.pop %v1029
    %v1031 = vmul.f32 %v1014, 1.442695
    %v1032 = vpow.pop %v1031
    %v1033 = vmul.f32 %v1015, 1.442695
    %v1034 = vpow.pop %v1033
    %v1035 = vmul.f32 %v1016, 1.442695
    %v1036 = vpow.pop %v1035
    %v1037 = vmul.f32 %v1017, 1.442695
    %v1038 = vpow.pop %v1037
    %v1039 = vmul.f32 %v1018, 1.442695
    %v1040 = vpow.pop %v1039
    %v1041 = vmul.f32 %v1019, 1.442695
    %v1042 = vpow.pop %v1041
    %v1043 = vmul.f32 %v1020, 1.442695
    %v1044 = vpow.pop %v1043
    %v1045 = vmul.f32 %v1021, 1.442695
    %v1046 = vpow.pop %v1045
    %v1047 = vmul.f32 %v1022, 1.442695
    %v1048 = vpow.pop %v1047
    %v1049 = vmul.f32 %v1023, 1.442695
    %v1050 = vpow.pop %v1049
    %v1051 = vmul.f32 %v1024, 1.442695
    %v1052 = vpow.pop %v1051
    %v1053 = vmul.f32 %v1025, 1.442695
    %v1054 = vpow.pop %v1053
    %v1055 = vmul.f32 %v1026, 1.442695
    %v1056 = vpow.pop %v1055
    %v1057 = vmul.f32 %v1027, 1.442695
    %v1058 = vpow.pop %v1057
    %v1059 = vmul.f32 %v1028, 1.442695
    %v1060 = vpow.pop %v1059
    %v1061 = vadd.f32 %v1030, 1.0
    %v1062 = vlog2.pop %v1061
    %v1063 = vmul.f32 %v1062, 0.6931472
    %v1064 = vmul.f32 -0.5, %v1030
    %v1065 = vadd.f32 %v1064, 1.0
    %v1066 = vmul.f32 %v1065, %v1030
    %v1067 = vand.u32 2147483647, %v1030
    %vm1068 = vcmp.lt.f32.partialorder %v1067, 0.0004427343
    %v1069 = vsel %vm1068, %v1066, %v1063
    %v1070 = vadd.f32 %v1032, 1.0
    %v1071 = vlog2.pop %v1070
    %v1072 = vmul.f32 %v1071, 0.6931472
    %v1073 = vmul.f32 -0.5, %v1032
    %v1074 = vadd.f32 %v1073, 1.0
    %v1075 = vmul.f32 %v1074, %v1032
    %v1076 = vand.u32 2147483647, %v1032
    %vm1077 = vcmp.lt.f32.partialorder %v1076, 0.0004427343
    %v1078 = vsel %vm1077, %v1075, %v1072
    %v1079 = vadd.f32 %v1034, 1.0
    %v1080 = vlog2.pop %v1079
    %v1081 = vmul.f32 %v1080, 0.6931472
    %v1082 = vmul.f32 -0.5, %v1034
    %v1083 = vadd.f32 %v1082, 1.0
    %v1084 = vmul.f32 %v1083, %v1034
    %v1085 = vand.u32 2147483647, %v1034
    %vm1086 = vcmp.lt.f32.partialorder %v1085, 0.0004427343
    %v1087 = vsel %vm1086, %v1084, %v1081
    %v1088 = vadd.f32 %v1036, 1.0
    %v1089 = vlog2.pop %v1088
    %v1090 = vmul.f32 %v1089, 0.6931472
    %v1091 = vmul.f32 -0.5, %v1036
    %v1092 = vadd.f32 %v1091, 1.0
    %v1093 = vmul.f32 %v1092, %v1036
    %v1094 = vand.u32 2147483647, %v1036
    %vm1095 = vcmp.lt.f32.partialorder %v1094, 0.0004427343
    %v1096 = vsel %vm1095, %v1093, %v1090
    %v1097 = vadd.f32 %v1038, 1.0
    %v1098 = vlog2.pop %v1097
    %v1099 = vmul.f32 %v1098, 0.6931472
    %v1100 = vmul.f32 -0.5, %v1038
    %v1101 = vadd.f32 %v1100, 1.0
    %v1102 = vmul.f32 %v1101, %v1038
    %v1103 = vand.u32 2147483647, %v1038
    %vm1104 = vcmp.lt.f32.partialorder %v1103, 0.0004427343
    %v1105 = vsel %vm1104, %v1102, %v1099
    %v1106 = vadd.f32 %v1040, 1.0
    %v1107 = vlog2.pop %v1106
    %v1108 = vmul.f32 %v1107, 0.6931472
    %v1109 = vmul.f32 -0.5, %v1040
    %v1110 = vadd.f32 %v1109, 1.0
    %v1111 = vmul.f32 %v1110, %v1040
    %v1112 = vand.u32 2147483647, %v1040
    %vm1113 = vcmp.lt.f32.partialorder %v1112, 0.0004427343
    %v1114 = vsel %vm1113, %v1111, %v1108
    %v1115 = vadd.f32 %v1042, 1.0
    %v1116 = vlog2.pop %v1115
    %v1117 = vmul.f32 %v1116, 0.6931472
    %v1118 = vmul.f32 -0.5, %v1042
    %v1119 = vadd.f32 %v1118, 1.0
    %v1120 = vmul.f32 %v1119, %v1042
    %v1121 = vand.u32 2147483647, %v1042
    %vm1122 = vcmp.lt.f32.partialorder %v1121, 0.0004427343
    %v1123 = vsel %vm1122, %v1120, %v1117
    %v1124 = vadd.f32 %v1044, 1.0
    %v1125 = vlog2.pop %v1124
    %v1126 = vmul.f32 %v1125, 0.6931472
    %v1127 = vmul.f32 -0.5, %v1044
    %v1128 = vadd.f32 %v1127, 1.0
    %v1129 = vmul.f32 %v1128, %v1044
    %v1130 = vand.u32 2147483647, %v1044
    %vm1131 = vcmp.lt.f32.partialorder %v1130, 0.0004427343
    %v1132 = vsel %vm1131, %v1129, %v1126
    %v1133 = vadd.f32 %v1046, 1.0
    %v1134 = vlog2.pop %v1133
    %v1135 = vmul.f32 %v1134, 0.6931472
    %v1136 = vmul.f32 -0.5, %v1046
    %v1137 = vadd.f32 %v1136, 1.0
    %v1138 = vmul.f32 %v1137, %v1046
    %v1139 = vand.u32 2147483647, %v1046
    %vm1140 = vcmp.lt.f32.partialorder %v1139, 0.0004427343
    %v1141 = vsel %vm1140, %v1138, %v1135
    %v1142 = vadd.f32 %v1048, 1.0
    %v1143 = vlog2.pop %v1142
    %v1144 = vmul.f32 %v1143, 0.6931472
    %v1145 = vmul.f32 -0.5, %v1048
    %v1146 = vadd.f32 %v1145, 1.0
    %v1147 = vmul.f32 %v1146, %v1048
    %v1148 = vand.u32 2147483647, %v1048
    %vm1149 = vcmp.lt.f32.partialorder %v1148, 0.0004427343
    %v1150 = vsel %vm1149, %v1147, %v1144
    %v1151 = vadd.f32 %v1050, 1.0
    %v1152 = vlog2.pop %v1151
    %v1153 = vmul.f32 %v1152, 0.6931472
    %v1154 = vmul.f32 -0.5, %v1050
    %v1155 = vadd.f32 %v1154, 1.0
    %v1156 = vmul.f32 %v1155, %v1050
    %v1157 = vand.u32 2147483647, %v1050
    %vm1158 = vcmp.lt.f32.partialorder %v1157, 0.0004427343
    %v1159 = vsel %vm1158, %v1156, %v1153
    %v1160 = vadd.f32 %v1052, 1.0
    %v1161 = vlog2.pop %v1160
    %v1162 = vmul.f32 %v1161, 0.6931472
    %v1163 = vmul.f32 -0.5, %v1052
    %v1164 = vadd.f32 %v1163, 1.0
    %v1165 = vmul.f32 %v1164, %v1052
    %v1166 = vand.u32 2147483647, %v1052
    %vm1167 = vcmp.lt.f32.partialorder %v1166, 0.0004427343
    %v1168 = vsel %vm1167, %v1165, %v1162
    %v1169 = vadd.f32 %v1054, 1.0
    %v1170 = vlog2.pop %v1169
    %v1171 = vmul.f32 %v1170, 0.6931472
    %v1172 = vmul.f32 -0.5, %v1054
    %v1173 = vadd.f32 %v1172, 1.0
    %v1174 = vmul.f32 %v1173, %v1054
    %v1175 = vand.u32 2147483647, %v1054
    %vm1176 = vcmp.lt.f32.partialorder %v1175, 0.0004427343
    %v1177 = vsel %vm1176, %v1174, %v1171
    %v1178 = vadd.f32 %v1056, 1.0
    %v1179 = vlog2.pop %v1178
    %v1180 = vmul.f32 %v1179, 0.6931472
    %v1181 = vmul.f32 -0.5, %v1056
    %v1182 = vadd.f32 %v1181, 1.0
    %v1183 = vmul.f32 %v1182, %v1056
    %v1184 = vand.u32 2147483647, %v1056
    %vm1185 = vcmp.lt.f32.partialorder %v1184, 0.0004427343
    %v1186 = vsel %vm1185, %v1183, %v1180
    %v1187 = vadd.f32 %v1058, 1.0
    %v1188 = vlog2.pop %v1187
    %v1189 = vmul.f32 %v1188, 0.6931472
    %v1190 = vmul.f32 -0.5, %v1058
    %v1191 = vadd.f32 %v1190, 1.0
    %v1192 = vmul.f32 %v1191, %v1058
    %v1193 = vand.u32 2147483647, %v1058
    %vm1194 = vcmp.lt.f32.partialorder %v1193, 0.0004427343
    %v1195 = vsel %vm1194, %v1192, %v1189
    %v1196 = vadd.f32 %v1060, 1.0
    %v1197 = vlog2.pop %v1196
    %v1198 = vmul.f32 %v1197, 0.6931472
    %v1199 = vmul.f32 -0.5, %v1060
    %v1200 = vadd.f32 %v1199, 1.0
    %v1201 = vmul.f32 %v1200, %v1060
    %v1202 = vand.u32 2147483647, %v1060
    %vm1203 = vcmp.lt.f32.partialorder %v1202, 0.0004427343
    %v1204 = vsel %vm1203, %v1201, %v1198
    %v1205 = vadd.f32 %v981, %v1069
    %v1206 = vadd.f32 %v982, %v1078
    %v1207 = vadd.f32 %v983, %v1087
    %v1208 = vadd.f32 %v984, %v1096
    %v1209 = vadd.f32 %v985, %v1105
    %v1210 = vadd.f32 %v986, %v1114
    %v1211 = vadd.f32 %v987, %v1123
    %v1212 = vadd.f32 %v988, %v1132
    %v1213 = vadd.f32 %v989, %v1141
    %v1214 = vadd.f32 %v990, %v1150
    %v1215 = vadd.f32 %v991, %v1159
    %v1216 = vadd.f32 %v992, %v1168
    %v1217 = vadd.f32 %v993, %v1177
    %v1218 = vadd.f32 %v994, %v1186
    %v1219 = vadd.f32 %v995, %v1195
    %v1220 = vadd.f32 %v996, %v1204
    %v1221 = vsub.f32 %v1205, 0.6931472
    %v1222 = vsub.f32 %v1206, 0.6931472
    %v1223 = vsub.f32 %v1207, 0.6931472
    %v1224 = vsub.f32 %v1208, 0.6931472
    %v1225 = vsub.f32 %v1209, 0.6931472
    %v1226 = vsub.f32 %v1210, 0.6931472
    %v1227 = vsub.f32 %v1211, 0.6931472
    %v1228 = vsub.f32 %v1212, 0.6931472
    %v1229 = vsub.f32 %v1213, 0.6931472
    %v1230 = vsub.f32 %v1214, 0.6931472
    %v1231 = vsub.f32 %v1215, 0.6931472
    %v1232 = vsub.f32 %v1216, 0.6931472
    %v1233 = vsub.f32 %v1217, 0.6931472
    %v1234 = vsub.f32 %v1218, 0.6931472
    %v1235 = vsub.f32 %v1219, 0.6931472
    %v1236 = vsub.f32 %v1220, 0.6931472
    %v1237 = vpack.c.bf16 %v1222, %v1221
    %v1238 = vpack.c.bf16 %v1224, %v1223
    %v1239 = vpack.c.bf16 %v1226, %v1225
    %v1240 = vpack.c.bf16 %v1228, %v1227
    %v1241 = vpack.c.bf16 %v1230, %v1229
    %v1242 = vpack.c.bf16 %v1232, %v1231
    %v1243 = vpack.c.bf16 %v1234, %v1233
    %v1244 = vpack.c.bf16 %v1236, %v1235
    %s1245 = scalar_lea.vmem %s7, 16
    %v1246 = vld [vmem:[%s1245] sm:$0xf]
    %v1247 = vld [vmem:[%s1245 + $0x4] sm:$0xf]
    %v1248 = vld [vmem:[%s1245 + $0x8] sm:$0xf]
    %v1249 = vld [vmem:[%s1245 + $0xc] sm:$0xf]
    %v1250 = vlaneseq
    %v1251 = vshrl.u32 %v1250, 7
    %v1252 = vsub.s32 1, %v1251
    %v1253 = vrot.slane %v838, %v1252
    %v1258 = vunpack.c.l.b16 %v1246
    %v1259 = vunpack.c.l.b16 %v1247
    %v1260 = vunpack.c.l.b16 %v1248
    %v1261 = vunpack.c.l.b16 %v1249
    %v1262 = vpack.c.b16 %v1259, %v1258
    %v1263 = vpack.c.b16 %v1261, %v1260
    %v1267 = vsel %vm859, %v1237, 0
    %v1270 = vsel %vm859, %v1238, 0
    %v1273 = vsel %vm859, %v1239, 0
    %v1276 = vsel %vm859, %v1240, 0
    %v1279 = vsel %vm859, %v1241, 0
    %v1282 = vsel %vm859, %v1242, 0
    %v1285 = vsel %vm859, %v1243, 0
    %v1288 = vsel %vm859, %v1244, 0
    %1290 = vmatprep.subr.bf16.mxu0 0
    %1291 = vmatpush1.bf16.msra.mxu0 %v1262
    %1292 = vmatprep.subr.bf16.mxu0 0
    %1293 = vmatpush1.bf16.msra.mxu0 %v1263
    %1294 = vmatprep.subr.bf16.mxu0 0
    %1295 = vmatpush1.bf16.msra.mxu0 0
    %1296 = vmatprep.subr.bf16.mxu0 0
    %1297 = vmatpush1.bf16.msra.mxu0 0
    %1298 = vmatprep.subr.bf16.mxu0 0
    %1299 = vmatpush1.bf16.msra.mxu0 0
    %1300 = vmatprep.subr.bf16.mxu0 0
    %1301 = vmatpush1.bf16.msra.mxu0 0
    %1302 = vmatprep.subr.bf16.mxu0 0
    %1303 = vmatpush1.bf16.msra.mxu0 0
    %1304 = vmatprep.subr.bf16.mxu0 0
    %1305 = vmatpush1.bf16.msra.mxu0 0
    %1306 = vmatprep.subr.bf16.mxu0 0
    %1307 = vmatpush1.bf16.msra.mxu0 0
    %1308 = vmatprep.subr.bf16.mxu0 0
    %1309 = vmatpush1.bf16.msra.mxu0 0
    %1310 = vmatprep.subr.bf16.mxu0 0
    %1311 = vmatpush1.bf16.msra.mxu0 0
    %1312 = vmatprep.subr.bf16.mxu0 0
    %1313 = vmatpush1.bf16.msra.mxu0 0
    %1314 = vmatprep.subr.bf16.mxu0 0
    %1315 = vmatpush1.bf16.msra.mxu0 0
    %1316 = vmatprep.subr.bf16.mxu0 0
    %1317 = vmatpush1.bf16.msra.mxu0 0
    %1318 = vmatprep.subr.bf16.mxu0 0
    %1319 = vmatpush1.bf16.msra.mxu0 0
    %1320 = vmatprep.subr.bf16.mxu0 0
    %1321 = vmatpush1.bf16.msra.mxu0 0
    %1322 = vmatprep.mubr.bf16.mxu0 0
    %1323 = vmatmul.mubr.bf16.gmra.mrb[0].mxu0 %v1267
    %v1324 = vpop.f32.mrb[0].mxu0
    %v1325 = vadd.f32 %v1253, %v1324
    %v1326 = vpop.f32.mrb[0].mxu0
    %v1327 = vpop.f32.mrb[0].mxu0
    %v1328 = vadd.f32 %v1253, %v1327
    %v1329 = vpop.f32.mrb[0].mxu0
    %1330 = vmatprep.mubr.bf16.mxu0 0
    %1331 = vmatmul.mubr.bf16.gmra.mrb[0].mxu0 %v1270
    %v1332 = vpop.f32.mrb[0].mxu0
    %v1333 = vadd.f32 %v1253, %v1332
    %v1334 = vpop.f32.mrb[0].mxu0
    %v1335 = vpop.f32.mrb[0].mxu0
    %v1336 = vadd.f32 %v1253, %v1335
    %v1337 = vpop.f32.mrb[0].mxu0
    %1338 = vmatprep.mubr.bf16.mxu0 0
    %1339 = vmatmul.mubr.bf16.gmra.mrb[0].mxu0 %v1273
    %v1340 = vpop.f32.mrb[0].mxu0
    %v1341 = vadd.f32 %v1253, %v1340
    %v1342 = vpop.f32.mrb[0].mxu0
    %v1343 = vpop.f32.mrb[0].mxu0
    %v1344 = vadd.f32 %v1253, %v1343
    %v1345 = vpop.f32.mrb[0].mxu0
    %1346 = vmatprep.mubr.bf16.mxu0 0
    %1347 = vmatmul.mubr.bf16.gmra.mrb[0].mxu0 %v1276
    %v1348 = vpop.f32.mrb[0].mxu0
    %v1349 = vadd.f32 %v1253, %v1348
    %v1350 = vpop.f32.mrb[0].mxu0
    %v1351 = vpop.f32.mrb[0].mxu0
    %v1352 = vadd.f32 %v1253, %v1351
    %v1353 = vpop.f32.mrb[0].mxu0
    %1354 = vmatprep.mubr.bf16.mxu0 0
    %1355 = vmatmul.mubr.bf16.gmra.mrb[0].mxu0 %v1279
    %v1356 = vpop.f32.mrb[0].mxu0
    %v1357 = vadd.f32 %v1253, %v1356
    %v1358 = vpop.f32.mrb[0].mxu0
    %v1359 = vpop.f32.mrb[0].mxu0
    %v1360 = vadd.f32 %v1253, %v1359
    %v1361 = vpop.f32.mrb[0].mxu0
    %1362 = vmatprep.mubr.bf16.mxu0 0
    %1363 = vmatmul.mubr.bf16.gmra.mrb[0].mxu0 %v1282
    %v1364 = vpop.f32.mrb[0].mxu0
    %v1365 = vadd.f32 %v1253, %v1364
    %v1366 = vpop.f32.mrb[0].mxu0
    %v1367 = vpop.f32.mrb[0].mxu0
    %v1368 = vadd.f32 %v1253, %v1367
    %v1369 = vpop.f32.mrb[0].mxu0
    %1370 = vmatprep.mubr.bf16.mxu0 0
    %1371 = vmatmul.mubr.bf16.gmra.mrb[0].mxu0 %v1285
    %v1372 = vpop.f32.mrb[0].mxu0
    %v1373 = vadd.f32 %v1253, %v1372
    %v1374 = vpop.f32.mrb[0].mxu0
    %v1375 = vpop.f32.mrb[0].mxu0
    %v1376 = vadd.f32 %v1253, %v1375
    %v1377 = vpop.f32.mrb[0].mxu0
    %1378 = vmatprep.mubr.bf16.mxu0 0
    %1379 = vmatmul.mubr.bf16.gmra.mrb[0].mxu0 %v1288
    %v1380 = vpop.f32.mrb[0].mxu0
    %v1381 = vadd.f32 %v1253, %v1380
    %v1382 = vpop.f32.mrb[0].mxu0
    %v1383 = vpop.f32.mrb[0].mxu0
    %v1384 = vadd.f32 %v1253, %v1383
    %v1385 = vpop.f32.mrb[0].mxu0
    %1386 = vdwg.mxu0
    %s1387 = scalar_lea.vmem %s8, 4
    %v1388 = vld [vmem:[%s1387] sm:$0xf]
    %s1389 = scalar_lea.vmem %s7, 80
    %v1390 = vld [vmem:[%s1389] sm:$0xf]
    %v1391 = vld [vmem:[%s1389 + $0x4] sm:$0xf]
    %v1392 = vld [vmem:[%s1389 + $0x8] sm:$0xf]
    %v1393 = vld [vmem:[%s1389 + $0xc] sm:$0xf]
    %v1394 = vlaneseq
    %v1395 = vshrl.u32 %v1394, 7
    %v1396 = vsub.s32 0, %v1395
    %v1397 = vrot.slane %v1388, %v1396
    %v1402 = vunpack.c.l.b16 %v1390
    %v1403 = vunpack.c.l.b16 %v1391
    %v1404 = vunpack.c.l.b16 %v1392
    %v1405 = vunpack.c.l.b16 %v1393
    %v1406 = vpack.c.b16 %v1403, %v1402
    %v1407 = vpack.c.b16 %v1405, %v1404
    %1410 = vmatprep.subr.bf16.mxu0 0
    %1411 = vmatpush1.bf16.msra.mxu0 %v1406
    %1412 = vmatprep.subr.bf16.mxu0 0
    %1413 = vmatpush1.bf16.msra.mxu0 %v1407
    %1414 = vmatprep.subr.bf16.mxu0 0
    %1415 = vmatpush1.bf16.msra.mxu0 0
    %1416 = vmatprep.subr.bf16.mxu0 0
    %1417 = vmatpush1.bf16.msra.mxu0 0
    %1418 = vmatprep.subr.bf16.mxu0 0
    %1419 = vmatpush1.bf16.msra.mxu0 0
    %1420 = vmatprep.subr.bf16.mxu0 0
    %1421 = vmatpush1.bf16.msra.mxu0 0
    %1422 = vmatprep.subr.bf16.mxu0 0
    %1423 = vmatpush1.bf16.msra.mxu0 0
    %1424 = vmatprep.subr.bf16.mxu0 0
    %1425 = vmatpush1.bf16.msra.mxu0 0
    %1426 = vmatprep.subr.bf16.mxu0 0
    %1427 = vmatpush1.bf16.msra.mxu0 0
    %1428 = vmatprep.subr.bf16.mxu0 0
    %1429 = vmatpush1.bf16.msra.mxu0 0
    %1430 = vmatprep.subr.bf16.mxu0 0
    %1431 = vmatpush1.bf16.msra.mxu0 0
    %1432 = vmatprep.subr.bf16.mxu0 0
    %1433 = vmatpush1.bf16.msra.mxu0 0
    %1434 = vmatprep.subr.bf16.mxu0 0
    %1435 = vmatpush1.bf16.msra.mxu0 0
    %1436 = vmatprep.subr.bf16.mxu0 0
    %1437 = vmatpush1.bf16.msra.mxu0 0
    %1438 = vmatprep.subr.bf16.mxu0 0
    %1439 = vmatpush1.bf16.msra.mxu0 0
    %1440 = vmatprep.subr.bf16.mxu0 0
    %1441 = vmatpush1.bf16.msra.mxu0 0
    %1442 = vmatprep.mubr.bf16.mxu0 0
    %1443 = vmatmul.mubr.bf16.gmra.mrb[0].mxu0 %v861
    %v1444 = vpop.f32.mrb[0].mxu0
    %v1445 = vadd.f32 %v1397, %v1444
    %v1446 = vpop.f32.mrb[0].mxu0
    %v1447 = vpop.f32.mrb[0].mxu0
    %v1448 = vadd.f32 %v1397, %v1447
    %v1449 = vpop.f32.mrb[0].mxu0
    %1450 = vmatprep.mubr.bf16.mxu0 0
    %1451 = vmatmul.mubr.bf16.gmra.mrb[0].mxu0 %v864
    %v1452 = vpop.f32.mrb[0].mxu0
    %v1453 = vadd.f32 %v1397, %v1452
    %v1454 = vpop.f32.mrb[0].mxu0
    %v1455 = vpop.f32.mrb[0].mxu0
    %v1456 = vadd.f32 %v1397, %v1455
    %v1457 = vpop.f32.mrb[0].mxu0
    %1458 = vmatprep.mubr.bf16.mxu0 0
    %1459 = vmatmul.mubr.bf16.gmra.mrb[0].mxu0 %v867
    %v1460 = vpop.f32.mrb[0].mxu0
    %v1461 = vadd.f32 %v1397, %v1460
    %v1462 = vpop.f32.mrb[0].mxu0
    %v1463 = vpop.f32.mrb[0].mxu0
    %v1464 = vadd.f32 %v1397, %v1463
    %v1465 = vpop.f32.mrb[0].mxu0
    %1466 = vmatprep.mubr.bf16.mxu0 0
    %1467 = vmatmul.mubr.bf16.gmra.mrb[0].mxu0 %v870
    %v1468 = vpop.f32.mrb[0].mxu0
    %v1469 = vadd.f32 %v1397, %v1468
    %v1470 = vpop.f32.mrb[0].mxu0
    %v1471 = vpop.f32.mrb[0].mxu0
    %v1472 = vadd.f32 %v1397, %v1471
    %v1473 = vpop.f32.mrb[0].mxu0
    %1474 = vmatprep.mubr.bf16.mxu0 0
    %1475 = vmatmul.mubr.bf16.gmra.mrb[0].mxu0 %v873
    %v1476 = vpop.f32.mrb[0].mxu0
    %v1477 = vadd.f32 %v1397, %v1476
    %v1478 = vpop.f32.mrb[0].mxu0
    %v1479 = vpop.f32.mrb[0].mxu0
    %v1480 = vadd.f32 %v1397, %v1479
    %v1481 = vpop.f32.mrb[0].mxu0
    %1482 = vmatprep.mubr.bf16.mxu0 0
    %1483 = vmatmul.mubr.bf16.gmra.mrb[0].mxu0 %v876
    %v1484 = vpop.f32.mrb[0].mxu0
    %v1485 = vadd.f32 %v1397, %v1484
    %v1486 = vpop.f32.mrb[0].mxu0
    %v1487 = vpop.f32.mrb[0].mxu0
    %v1488 = vadd.f32 %v1397, %v1487
    %v1489 = vpop.f32.mrb[0].mxu0
    %1490 = vmatprep.mubr.bf16.mxu0 0
    %1491 = vmatmul.mubr.bf16.gmra.mrb[0].mxu0 %v879
    %v1492 = vpop.f32.mrb[0].mxu0
    %v1493 = vadd.f32 %v1397, %v1492
    %v1494 = vpop.f32.mrb[0].mxu0
    %v1495 = vpop.f32.mrb[0].mxu0
    %v1496 = vadd.f32 %v1397, %v1495
    %v1497 = vpop.f32.mrb[0].mxu0
    %1498 = vmatprep.mubr.bf16.mxu0 0
    %1499 = vmatmul.mubr.bf16.gmra.mrb[0].mxu0 %v882
    %v1500 = vpop.f32.mrb[0].mxu0
    %v1501 = vadd.f32 %v1397, %v1500
    %v1502 = vpop.f32.mrb[0].mxu0
    %v1503 = vpop.f32.mrb[0].mxu0
    %v1504 = vadd.f32 %v1397, %v1503
    %v1505 = vpop.f32.mrb[0].mxu0
    %1506 = vdwg.mxu0
    %v1507 = vmax.f32 %v1445, 0.0
    %v1508 = vmax.f32 %v1448, 0.0
    %v1509 = vmax.f32 %v1453, 0.0
    %v1510 = vmax.f32 %v1456, 0.0
    %v1511 = vmax.f32 %v1461, 0.0
    %v1512 = vmax.f32 %v1464, 0.0
    %v1513 = vmax.f32 %v1469, 0.0
    %v1514 = vmax.f32 %v1472, 0.0
    %v1515 = vmax.f32 %v1477, 0.0
    %v1516 = vmax.f32 %v1480, 0.0
    %v1517 = vmax.f32 %v1485, 0.0
    %v1518 = vmax.f32 %v1488, 0.0
    %v1519 = vmax.f32 %v1493, 0.0
    %v1520 = vmax.f32 %v1496, 0.0
    %v1521 = vmax.f32 %v1501, 0.0
    %v1522 = vmax.f32 %v1504, 0.0
    %v1523 = vand.u32 2147483647, %v1445
    %v1524 = vand.u32 2147483647, %v1448
    %v1525 = vand.u32 2147483647, %v1453
    %v1526 = vand.u32 2147483647, %v1456
    %v1527 = vand.u32 2147483647, %v1461
    %v1528 = vand.u32 2147483647, %v1464
    %v1529 = vand.u32 2147483647, %v1469
    %v1530 = vand.u32 2147483647, %v1472
    %v1531 = vand.u32 2147483647, %v1477
    %v1532 = vand.u32 2147483647, %v1480
    %v1533 = vand.u32 2147483647, %v1485
    %v1534 = vand.u32 2147483647, %v1488
    %v1535 = vand.u32 2147483647, %v1493
    %v1536 = vand.u32 2147483647, %v1496
    %v1537 = vand.u32 2147483647, %v1501
    %v1538 = vand.u32 2147483647, %v1504
    %v1539 = vsub.f32 0.0, %v1523
    %v1540 = vsub.f32 0.0, %v1524
    %v1541 = vsub.f32 0.0, %v1525
    %v1542 = vsub.f32 0.0, %v1526
    %v1543 = vsub.f32 0.0, %v1527
    %v1544 = vsub.f32 0.0, %v1528
    %v1545 = vsub.f32 0.0, %v1529
    %v1546 = vsub.f32 0.0, %v1530
    %v1547 = vsub.f32 0.0, %v1531
    %v1548 = vsub.f32 0.0, %v1532
    %v1549 = vsub.f32 0.0, %v1533
    %v1550 = vsub.f32 0.0, %v1534
    %v1551 = vsub.f32 0.0, %v1535
    %v1552 = vsub.f32 0.0, %v1536
    %v1553 = vsub.f32 0.0, %v1537
    %v1554 = vsub.f32 0.0, %v1538
    %v1555 = vmul.f32 %v1539, 1.442695
    %v1556 = vpow.pop %v1555
    %v1557 = vmul.f32 %v1540, 1.442695
    %v1558 = vpow.pop %v1557
    %v1559 = vmul.f32 %v1541, 1.442695
    %v1560 = vpow.pop %v1559
    %v1561 = vmul.f32 %v1542, 1.442695
    %v1562 = vpow.pop %v1561
    %v1563 = vmul.f32 %v1543, 1.442695
    %v1564 = vpow.pop %v1563
    %v1565 = vmul.f32 %v1544, 1.442695
    %v1566 = vpow.pop %v1565
    %v1567 = vmul.f32 %v1545, 1.442695
    %v1568 = vpow.pop %v1567
    %v1569 = vmul.f32 %v1546, 1.442695
    %v1570 = vpow.pop %v1569
    %v1571 = vmul.f32 %v1547, 1.442695
    %v1572 = vpow.pop %v1571
    %v1573 = vmul.f32 %v1548, 1.442695
    %v1574 = vpow.pop %v1573
    %v1575 = vmul.f32 %v1549, 1.442695
    %v1576 = vpow.pop %v1575
    %v1577 = vmul.f32 %v1550, 1.442695
    %v1578 = vpow.pop %v1577
    %v1579 = vmul.f32 %v1551, 1.442695
    %v1580 = vpow.pop %v1579
    %v1581 = vmul.f32 %v1552, 1.442695
    %v1582 = vpow.pop %v1581
    %v1583 = vmul.f32 %v1553, 1.442695
    %v1584 = vpow.pop %v1583
    %v1585 = vmul.f32 %v1554, 1.442695
    %v1586 = vpow.pop %v1585
    %v1587 = vadd.f32 %v1556, 1.0
    %v1588 = vlog2.pop %v1587
    %v1589 = vmul.f32 %v1588, 0.6931472
    %v1590 = vmul.f32 -0.5, %v1556
    %v1591 = vadd.f32 %v1590, 1.0
    %v1592 = vmul.f32 %v1591, %v1556
    %v1593 = vand.u32 2147483647, %v1556
    %vm1594 = vcmp.lt.f32.partialorder %v1593, 0.0004427343
    %v1595 = vsel %vm1594, %v1592, %v1589
    %v1596 = vadd.f32 %v1558, 1.0
    %v1597 = vlog2.pop %v1596
    %v1598 = vmul.f32 %v1597, 0.6931472
    %v1599 = vmul.f32 -0.5, %v1558
    %v1600 = vadd.f32 %v1599, 1.0
    %v1601 = vmul.f32 %v1600, %v1558
    %v1602 = vand.u32 2147483647, %v1558
    %vm1603 = vcmp.lt.f32.partialorder %v1602, 0.0004427343
    %v1604 = vsel %vm1603, %v1601, %v1598
    %v1605 = vadd.f32 %v1560, 1.0
    %v1606 = vlog2.pop %v1605
    %v1607 = vmul.f32 %v1606, 0.6931472
    %v1608 = vmul.f32 -0.5, %v1560
    %v1609 = vadd.f32 %v1608, 1.0
    %v1610 = vmul.f32 %v1609, %v1560
    %v1611 = vand.u32 2147483647, %v1560
    %vm1612 = vcmp.lt.f32.partialorder %v1611, 0.0004427343
    %v1613 = vsel %vm1612, %v1610, %v1607
    %v1614 = vadd.f32 %v1562, 1.0
    %v1615 = vlog2.pop %v1614
    %v1616 = vmul.f32 %v1615, 0.6931472
    %v1617 = vmul.f32 -0.5, %v1562
    %v1618 = vadd.f32 %v1617, 1.0
    %v1619 = vmul.f32 %v1618, %v1562
    %v1620 = vand.u32 2147483647, %v1562
    %vm1621 = vcmp.lt.f32.partialorder %v1620, 0.0004427343
    %v1622 = vsel %vm1621, %v1619, %v1616
    %v1623 = vadd.f32 %v1564, 1.0
    %v1624 = vlog2.pop %v1623
    %v1625 = vmul.f32 %v1624, 0.6931472
    %v1626 = vmul.f32 -0.5, %v1564
    %v1627 = vadd.f32 %v1626, 1.0
    %v1628 = vmul.f32 %v1627, %v1564
    %v1629 = vand.u32 2147483647, %v1564
    %vm1630 = vcmp.lt.f32.partialorder %v1629, 0.0004427343
    %v1631 = vsel %vm1630, %v1628, %v1625
    %v1632 = vadd.f32 %v1566, 1.0
    %v1633 = vlog2.pop %v1632
    %v1634 = vmul.f32 %v1633, 0.6931472
    %v1635 = vmul.f32 -0.5, %v1566
    %v1636 = vadd.f32 %v1635, 1.0
    %v1637 = vmul.f32 %v1636, %v1566
    %v1638 = vand.u32 2147483647, %v1566
    %vm1639 = vcmp.lt.f32.partialorder %v1638, 0.0004427343
    %v1640 = vsel %vm1639, %v1637, %v1634
    %v1641 = vadd.f32 %v1568, 1.0
    %v1642 = vlog2.pop %v1641
    %v1643 = vmul.f32 %v1642, 0.6931472
    %v1644 = vmul.f32 -0.5, %v1568
    %v1645 = vadd.f32 %v1644, 1.0
    %v1646 = vmul.f32 %v1645, %v1568
    %v1647 = vand.u32 2147483647, %v1568
    %vm1648 = vcmp.lt.f32.partialorder %v1647, 0.0004427343
    %v1649 = vsel %vm1648, %v1646, %v1643
    %v1650 = vadd.f32 %v1570, 1.0
    %v1651 = vlog2.pop %v1650
    %v1652 = vmul.f32 %v1651, 0.6931472
    %v1653 = vmul.f32 -0.5, %v1570
    %v1654 = vadd.f32 %v1653, 1.0
    %v1655 = vmul.f32 %v1654, %v1570
    %v1656 = vand.u32 2147483647, %v1570
    %vm1657 = vcmp.lt.f32.partialorder %v1656, 0.0004427343
    %v1658 = vsel %vm1657, %v1655, %v1652
    %v1659 = vadd.f32 %v1572, 1.0
    %v1660 = vlog2.pop %v1659
    %v1661 = vmul.f32 %v1660, 0.6931472
    %v1662 = vmul.f32 -0.5, %v1572
    %v1663 = vadd.f32 %v1662, 1.0
    %v1664 = vmul.f32 %v1663, %v1572
    %v1665 = vand.u32 2147483647, %v1572
    %vm1666 = vcmp.lt.f32.partialorder %v1665, 0.0004427343
    %v1667 = vsel %vm1666, %v1664, %v1661
    %v1668 = vadd.f32 %v1574, 1.0
    %v1669 = vlog2.pop %v1668
    %v1670 = vmul.f32 %v1669, 0.6931472
    %v1671 = vmul.f32 -0.5, %v1574
    %v1672 = vadd.f32 %v1671, 1.0
    %v1673 = vmul.f32 %v1672, %v1574
    %v1674 = vand.u32 2147483647, %v1574
    %vm1675 = vcmp.lt.f32.partialorder %v1674, 0.0004427343
    %v1676 = vsel %vm1675, %v1673, %v1670
    %v1677 = vadd.f32 %v1576, 1.0
    %v1678 = vlog2.pop %v1677
    %v1679 = vmul.f32 %v1678, 0.6931472
    %v1680 = vmul.f32 -0.5, %v1576
    %v1681 = vadd.f32 %v1680, 1.0
    %v1682 = vmul.f32 %v1681, %v1576
    %v1683 = vand.u32 2147483647, %v1576
    %vm1684 = vcmp.lt.f32.partialorder %v1683, 0.0004427343
    %v1685 = vsel %vm1684, %v1682, %v1679
    %v1686 = vadd.f32 %v1578, 1.0
    %v1687 = vlog2.pop %v1686
    %v1688 = vmul.f32 %v1687, 0.6931472
    %v1689 = vmul.f32 -0.5, %v1578
    %v1690 = vadd.f32 %v1689, 1.0
    %v1691 = vmul.f32 %v1690, %v1578
    %v1692 = vand.u32 2147483647, %v1578
    %vm1693 = vcmp.lt.f32.partialorder %v1692, 0.0004427343
    %v1694 = vsel %vm1693, %v1691, %v1688
    %v1695 = vadd.f32 %v1580, 1.0
    %v1696 = vlog2.pop %v1695
    %v1697 = vmul.f32 %v1696, 0.6931472
    %v1698 = vmul.f32 -0.5, %v1580
    %v1699 = vadd.f32 %v1698, 1.0
    %v1700 = vmul.f32 %v1699, %v1580
    %v1701 = vand.u32 2147483647, %v1580
    %vm1702 = vcmp.lt.f32.partialorder %v1701, 0.0004427343
    %v1703 = vsel %vm1702, %v1700, %v1697
    %v1704 = vadd.f32 %v1582, 1.0
    %v1705 = vlog2.pop %v1704
    %v1706 = vmul.f32 %v1705, 0.6931472
    %v1707 = vmul.f32 -0.5, %v1582
    %v1708 = vadd.f32 %v1707, 1.0
    %v1709 = vmul.f32 %v1708, %v1582
    %v1710 = vand.u32 2147483647, %v1582
    %vm1711 = vcmp.lt.f32.partialorder %v1710, 0.0004427343
    %v1712 = vsel %vm1711, %v1709, %v1706
    %v1713 = vadd.f32 %v1584, 1.0
    %v1714 = vlog2.pop %v1713
    %v1715 = vmul.f32 %v1714, 0.6931472
    %v1716 = vmul.f32 -0.5, %v1584
    %v1717 = vadd.f32 %v1716, 1.0
    %v1718 = vmul.f32 %v1717, %v1584
    %v1719 = vand.u32 2147483647, %v1584
    %vm1720 = vcmp.lt.f32.partialorder %v1719, 0.0004427343
    %v1721 = vsel %vm1720, %v1718, %v1715
    %v1722 = vadd.f32 %v1586, 1.0
    %v1723 = vlog2.pop %v1722
    %v1724 = vmul.f32 %v1723, 0.6931472
    %v1725 = vmul.f32 -0.5, %v1586
    %v1726 = vadd.f32 %v1725, 1.0
    %v1727 = vmul.f32 %v1726, %v1586
    %v1728 = vand.u32 2147483647, %v1586
    %vm1729 = vcmp.lt.f32.partialorder %v1728, 0.0004427343
    %v1730 = vsel %vm1729, %v1727, %v1724
    %v1731 = vadd.f32 %v1507, %v1595
    %v1732 = vadd.f32 %v1508, %v1604
    %v1733 = vadd.f32 %v1509, %v1613
    %v1734 = vadd.f32 %v1510, %v1622
    %v1735 = vadd.f32 %v1511, %v1631
    %v1736 = vadd.f32 %v1512, %v1640
    %v1737 = vadd.f32 %v1513, %v1649
    %v1738 = vadd.f32 %v1514, %v1658
    %v1739 = vadd.f32 %v1515, %v1667
    %v1740 = vadd.f32 %v1516, %v1676
    %v1741 = vadd.f32 %v1517, %v1685
    %v1742 = vadd.f32 %v1518, %v1694
    %v1743 = vadd.f32 %v1519, %v1703
    %v1744 = vadd.f32 %v1520, %v1712
    %v1745 = vadd.f32 %v1521, %v1721
    %v1746 = vadd.f32 %v1522, %v1730
    %v1747 = vsub.f32 %v1731, 0.6931472
    %v1748 = vsub.f32 %v1732, 0.6931472
    %v1749 = vsub.f32 %v1733, 0.6931472
    %v1750 = vsub.f32 %v1734, 0.6931472
    %v1751 = vsub.f32 %v1735, 0.6931472
    %v1752 = vsub.f32 %v1736, 0.6931472
    %v1753 = vsub.f32 %v1737, 0.6931472
    %v1754 = vsub.f32 %v1738, 0.6931472
    %v1755 = vsub.f32 %v1739, 0.6931472
    %v1756 = vsub.f32 %v1740, 0.6931472
    %v1757 = vsub.f32 %v1741, 0.6931472
    %v1758 = vsub.f32 %v1742, 0.6931472
    %v1759 = vsub.f32 %v1743, 0.6931472
    %v1760 = vsub.f32 %v1744, 0.6931472
    %v1761 = vsub.f32 %v1745, 0.6931472
    %v1762 = vsub.f32 %v1746, 0.6931472
    %v1763 = vpack.c.bf16 %v1748, %v1747
    %v1764 = vpack.c.bf16 %v1750, %v1749
    %v1765 = vpack.c.bf16 %v1752, %v1751
    %v1766 = vpack.c.bf16 %v1754, %v1753
    %v1767 = vpack.c.bf16 %v1756, %v1755
    %v1768 = vpack.c.bf16 %v1758, %v1757
    %v1769 = vpack.c.bf16 %v1760, %v1759
    %v1770 = vpack.c.bf16 %v1762, %v1761
    %s1771 = scalar_lea.vmem %s7, 96
    %v1772 = vld [vmem:[%s1771] sm:$0xf]
    %v1773 = vld [vmem:[%s1771 + $0x4] sm:$0xf]
    %v1774 = vld [vmem:[%s1771 + $0x8] sm:$0xf]
    %v1775 = vld [vmem:[%s1771 + $0xc] sm:$0xf]
    %v1776 = vlaneseq
    %v1777 = vshrl.u32 %v1776, 7
    %v1778 = vsub.s32 1, %v1777
    %v1779 = vrot.slane %v1388, %v1778
    %v1784 = vunpack.c.l.b16 %v1772
    %v1785 = vunpack.c.l.b16 %v1773
    %v1786 = vunpack.c.l.b16 %v1774
    %v1787 = vunpack.c.l.b16 %v1775
    %v1788 = vpack.c.b16 %v1785, %v1784
    %v1789 = vpack.c.b16 %v1787, %v1786
    %v1793 = vsel %vm859, %v1763, 0
    %v1796 = vsel %vm859, %v1764, 0
    %v1799 = vsel %vm859, %v1765, 0
    %v1802 = vsel %vm859, %v1766, 0
    %v1805 = vsel %vm859, %v1767, 0
    %v1808 = vsel %vm859, %v1768, 0
    %v1811 = vsel %vm859, %v1769, 0
    %v1814 = vsel %vm859, %v1770, 0
    %1816 = vmatprep.subr.bf16.mxu0 0
    %1817 = vmatpush1.bf16.msra.mxu0 %v1788
    %1818 = vmatprep.subr.bf16.mxu0 0
    %1819 = vmatpush1.bf16.msra.mxu0 %v1789
    %1820 = vmatprep.subr.bf16.mxu0 0
    %1821 = vmatpush1.bf16.msra.mxu0 0
    %1822 = vmatprep.subr.bf16.mxu0 0
    %1823 = vmatpush1.bf16.msra.mxu0 0
    %1824 = vmatprep.subr.bf16.mxu0 0
    %1825 = vmatpush1.bf16.msra.mxu0 0
    %1826 = vmatprep.subr.bf16.mxu0 0
    %1827 = vmatpush1.bf16.msra.mxu0 0
    %1828 = vmatprep.subr.bf16.mxu0 0
    %1829 = vmatpush1.bf16.msra.mxu0 0
    %1830 = vmatprep.subr.bf16.mxu0 0
    %1831 = vmatpush1.bf16.msra.mxu0 0
    %1832 = vmatprep.subr.bf16.mxu0 0
    %1833 = vmatpush1.bf16.msra.mxu0 0
    %1834 = vmatprep.subr.bf16.mxu0 0
    %1835 = vmatpush1.bf16.msra.mxu0 0
    %1836 = vmatprep.subr.bf16.mxu0 0
    %1837 = vmatpush1.bf16.msra.mxu0 0
    %1838 = vmatprep.subr.bf16.mxu0 0
    %1839 = vmatpush1.bf16.msra.mxu0 0
    %1840 = vmatprep.subr.bf16.mxu0 0
    %1841 = vmatpush1.bf16.msra.mxu0 0
    %1842 = vmatprep.subr.bf16.mxu0 0
    %1843 = vmatpush1.bf16.msra.mxu0 0
    %1844 = vmatprep.subr.bf16.mxu0 0
    %1845 = vmatpush1.bf16.msra.mxu0 0
    %1846 = vmatprep.subr.bf16.mxu0 0
    %1847 = vmatpush1.bf16.msra.mxu0 0
    %1848 = vmatprep.mubr.bf16.mxu0 0
    %1849 = vmatmul.mubr.bf16.gmra.mrb[0].mxu0 %v1793
    %v1850 = vpop.f32.mrb[0].mxu0
    %v1851 = vadd.f32 %v1779, %v1850
    %v1852 = vpop.f32.mrb[0].mxu0
    %v1853 = vpop.f32.mrb[0].mxu0
    %v1854 = vadd.f32 %v1779, %v1853
    %v1855 = vpop.f32.mrb[0].mxu0
    %1856 = vmatprep.mubr.bf16.mxu0 0
    %1857 = vmatmul.mubr.bf16.gmra.mrb[0].mxu0 %v1796
    %v1858 = vpop.f32.mrb[0].mxu0
    %v1859 = vadd.f32 %v1779, %v1858
    %v1860 = vpop.f32.mrb[0].mxu0
    %v1861 = vpop.f32.mrb[0].mxu0
    %v1862 = vadd.f32 %v1779, %v1861
    %v1863 = vpop.f32.mrb[0].mxu0
    %1864 = vmatprep.mubr.bf16.mxu0 0
    %1865 = vmatmul.mubr.bf16.gmra.mrb[0].mxu0 %v1799
    %v1866 = vpop.f32.mrb[0].mxu0
    %v1867 = vadd.f32 %v1779, %v1866
    %v1868 = vpop.f32.mrb[0].mxu0
    %v1869 = vpop.f32.mrb[0].mxu0
    %v1870 = vadd.f32 %v1779, %v1869
    %v1871 = vpop.f32.mrb[0].mxu0
    %1872 = vmatprep.mubr.bf16.mxu0 0
    %1873 = vmatmul.mubr.bf16.gmra.mrb[0].mxu0 %v1802
    %v1874 = vpop.f32.mrb[0].mxu0
    %v1875 = vadd.f32 %v1779, %v1874
    %v1876 = vpop.f32.mrb[0].mxu0
    %v1877 = vpop.f32.mrb[0].mxu0
    %v1878 = vadd.f32 %v1779, %v1877
    %v1879 = vpop.f32.mrb[0].mxu0
    %1880 = vmatprep.mubr.bf16.mxu0 0
    %1881 = vmatmul.mubr.bf16.gmra.mrb[0].mxu0 %v1805
    %v1882 = vpop.f32.mrb[0].mxu0
    %v1883 = vadd.f32 %v1779, %v1882
    %v1884 = vpop.f32.mrb[0].mxu0
    %v1885 = vpop.f32.mrb[0].mxu0
    %v1886 = vadd.f32 %v1779, %v1885
    %v1887 = vpop.f32.mrb[0].mxu0
    %1888 = vmatprep.mubr.bf16.mxu0 0
    %1889 = vmatmul.mubr.bf16.gmra.mrb[0].mxu0 %v1808
    %v1890 = vpop.f32.mrb[0].mxu0
    %v1891 = vadd.f32 %v1779, %v1890
    %v1892 = vpop.f32.mrb[0].mxu0
    %v1893 = vpop.f32.mrb[0].mxu0
    %v1894 = vadd.f32 %v1779, %v1893
    %v1895 = vpop.f32.mrb[0].mxu0
    %1896 = vmatprep.mubr.bf16.mxu0 0
    %1897 = vmatmul.mubr.bf16.gmra.mrb[0].mxu0 %v1811
    %v1898 = vpop.f32.mrb[0].mxu0
    %v1899 = vadd.f32 %v1779, %v1898
    %v1900 = vpop.f32.mrb[0].mxu0
    %v1901 = vpop.f32.mrb[0].mxu0
    %v1902 = vadd.f32 %v1779, %v1901
    %v1903 = vpop.f32.mrb[0].mxu0
    %1904 = vmatprep.mubr.bf16.mxu0 0
    %1905 = vmatmul.mubr.bf16.gmra.mrb[0].mxu0 %v1814
    %v1906 = vpop.f32.mrb[0].mxu0
    %v1907 = vadd.f32 %v1779, %v1906
    %v1908 = vpop.f32.mrb[0].mxu0
    %v1909 = vpop.f32.mrb[0].mxu0
    %v1910 = vadd.f32 %v1779, %v1909
    %v1911 = vpop.f32.mrb[0].mxu0
    %1912 = vdwg.mxu0
    %s1913 = scalar_lea.vmem %s8, 8
    %v1914 = vld [vmem:[%s1913] sm:$0xf]
    %s1915 = scalar_lea.vmem %s7, 160
    %v1916 = vld [vmem:[%s1915] sm:$0xf]
    %v1917 = vld [vmem:[%s1915 + $0x4] sm:$0xf]
    %v1918 = vld [vmem:[%s1915 + $0x8] sm:$0xf]
    %v1919 = vld [vmem:[%s1915 + $0xc] sm:$0xf]
    %v1920 = vlaneseq
    %v1921 = vshrl.u32 %v1920, 7
    %v1922 = vsub.s32 0, %v1921
    %v1923 = vrot.slane %v1914, %v1922
    %v1928 = vunpack.c.l.b16 %v1916
    %v1929 = vunpack.c.l.b16 %v1917
    %v1930 = vunpack.c.l.b16 %v1918
    %v1931 = vunpack.c.l.b16 %v1919
    %v1932 = vpack.c.b16 %v1929, %v1928
    %v1933 = vpack.c.b16 %v1931, %v1930
    %1936 = vmatprep.subr.bf16.mxu0 0
    %1937 = vmatpush1.bf16.msra.mxu0 %v1932
    %1938 = vmatprep.subr.bf16.mxu0 0
    %1939 = vmatpush1.bf16.msra.mxu0 %v1933
    %1940 = vmatprep.subr.bf16.mxu0 0
    %1941 = vmatpush1.bf16.msra.mxu0 0
    %1942 = vmatprep.subr.bf16.mxu0 0
    %1943 = vmatpush1.bf16.msra.mxu0 0
    %1944 = vmatprep.subr.bf16.mxu0 0
    %1945 = vmatpush1.bf16.msra.mxu0 0
    %1946 = vmatprep.subr.bf16.mxu0 0
    %1947 = vmatpush1.bf16.msra.mxu0 0
    %1948 = vmatprep.subr.bf16.mxu0 0
    %1949 = vmatpush1.bf16.msra.mxu0 0
    %1950 = vmatprep.subr.bf16.mxu0 0
    %1951 = vmatpush1.bf16.msra.mxu0 0
    %1952 = vmatprep.subr.bf16.mxu0 0
    %1953 = vmatpush1.bf16.msra.mxu0 0
    %1954 = vmatprep.subr.bf16.mxu0 0
    %1955 = vmatpush1.bf16.msra.mxu0 0
    %1956 = vmatprep.subr.bf16.mxu0 0
    %1957 = vmatpush1.bf16.msra.mxu0 0
    %1958 = vmatprep.subr.bf16.mxu0 0
    %1959 = vmatpush1.bf16.msra.mxu0 0
    %1960 = vmatprep.subr.bf16.mxu0 0
    %1961 = vmatpush1.bf16.msra.mxu0 0
    %1962 = vmatprep.subr.bf16.mxu0 0
    %1963 = vmatpush1.bf16.msra.mxu0 0
    %1964 = vmatprep.subr.bf16.mxu0 0
    %1965 = vmatpush1.bf16.msra.mxu0 0
    %1966 = vmatprep.subr.bf16.mxu0 0
    %1967 = vmatpush1.bf16.msra.mxu0 0
    %1968 = vmatprep.mubr.bf16.mxu0 0
    %1969 = vmatmul.mubr.bf16.gmra.mrb[0].mxu0 %v861
    %v1970 = vpop.f32.mrb[0].mxu0
    %v1971 = vadd.f32 %v1923, %v1970
    %v1972 = vpop.f32.mrb[0].mxu0
    %v1973 = vpop.f32.mrb[0].mxu0
    %v1974 = vadd.f32 %v1923, %v1973
    %v1975 = vpop.f32.mrb[0].mxu0
    %1976 = vmatprep.mubr.bf16.mxu0 0
    %1977 = vmatmul.mubr.bf16.gmra.mrb[0].mxu0 %v864
    %v1978 = vpop.f32.mrb[0].mxu0
    %v1979 = vadd.f32 %v1923, %v1978
    %v1980 = vpop.f32.mrb[0].mxu0
    %v1981 = vpop.f32.mrb[0].mxu0
    %v1982 = vadd.f32 %v1923, %v1981
    %v1983 = vpop.f32.mrb[0].mxu0
    %1984 = vmatprep.mubr.bf16.mxu0 0
    %1985 = vmatmul.mubr.bf16.gmra.mrb[0].mxu0 %v867
    %v1986 = vpop.f32.mrb[0].mxu0
    %v1987 = vadd.f32 %v1923, %v1986
    %v1988 = vpop.f32.mrb[0].mxu0
    %v1989 = vpop.f32.mrb[0].mxu0
    %v1990 = vadd.f32 %v1923, %v1989
    %v1991 = vpop.f32.mrb[0].mxu0
    %1992 = vmatprep.mubr.bf16.mxu0 0
    %1993 = vmatmul.mubr.bf16.gmra.mrb[0].mxu0 %v870
    %v1994 = vpop.f32.mrb[0].mxu0
    %v1995 = vadd.f32 %v1923, %v1994
    %v1996 = vpop.f32.mrb[0].mxu0
    %v1997 = vpop.f32.mrb[0].mxu0
    %v1998 = vadd.f32 %v1923, %v1997
    %v1999 = vpop.f32.mrb[0].mxu0
    %2000 = vmatprep.mubr.bf16.mxu0 0
    %2001 = vmatmul.mubr.bf16.gmra.mrb[0].mxu0 %v873
    %v2002 = vpop.f32.mrb[0].mxu0
    %v2003 = vadd.f32 %v1923, %v2002
    %v2004 = vpop.f32.mrb[0].mxu0
    %v2005 = vpop.f32.mrb[0].mxu0
    %v2006 = vadd.f32 %v1923, %v2005
    %v2007 = vpop.f32.mrb[0].mxu0
    %2008 = vmatprep.mubr.bf16.mxu0 0
    %2009 = vmatmul.mubr.bf16.gmra.mrb[0].mxu0 %v876
    %v2010 = vpop.f32.mrb[0].mxu0
    %v2011 = vadd.f32 %v1923, %v2010
    %v2012 = vpop.f32.mrb[0].mxu0
    %v2013 = vpop.f32.mrb[0].mxu0
    %v2014 = vadd.f32 %v1923, %v2013
    %v2015 = vpop.f32.mrb[0].mxu0
    %2016 = vmatprep.mubr.bf16.mxu0 0
    %2017 = vmatmul.mubr.bf16.gmra.mrb[0].mxu0 %v879
    %v2018 = vpop.f32.mrb[0].mxu0
    %v2019 = vadd.f32 %v1923, %v2018
    %v2020 = vpop.f32.mrb[0].mxu0
    %v2021 = vpop.f32.mrb[0].mxu0
    %v2022 = vadd.f32 %v1923, %v2021
    %v2023 = vpop.f32.mrb[0].mxu0
    %2024 = vmatprep.mubr.bf16.mxu0 0
    %2025 = vmatmul.mubr.bf16.gmra.mrb[0].mxu0 %v882
    %v2026 = vpop.f32.mrb[0].mxu0
    %v2027 = vadd.f32 %v1923, %v2026
    %v2028 = vpop.f32.mrb[0].mxu0
    %v2029 = vpop.f32.mrb[0].mxu0
    %v2030 = vadd.f32 %v1923, %v2029
    %v2031 = vpop.f32.mrb[0].mxu0
    %2032 = vdwg.mxu0
    %v2033 = vmax.f32 %v1971, 0.0
    %v2034 = vmax.f32 %v1974, 0.0
    %v2035 = vmax.f32 %v1979, 0.0
    %v2036 = vmax.f32 %v1982, 0.0
    %v2037 = vmax.f32 %v1987, 0.0
    %v2038 = vmax.f32 %v1990, 0.0
    %v2039 = vmax.f32 %v1995, 0.0
    %v2040 = vmax.f32 %v1998, 0.0
    %v2041 = vmax.f32 %v2003, 0.0
    %v2042 = vmax.f32 %v2006, 0.0
    %v2043 = vmax.f32 %v2011, 0.0
    %v2044 = vmax.f32 %v2014, 0.0
    %v2045 = vmax.f32 %v2019, 0.0
    %v2046 = vmax.f32 %v2022, 0.0
    %v2047 = vmax.f32 %v2027, 0.0
    %v2048 = vmax.f32 %v2030, 0.0
    %v2049 = vand.u32 2147483647, %v1971
    %v2050 = vand.u32 2147483647, %v1974
    %v2051 = vand.u32 2147483647, %v1979
    %v2052 = vand.u32 2147483647, %v1982
    %v2053 = vand.u32 2147483647, %v1987
    %v2054 = vand.u32 2147483647, %v1990
    %v2055 = vand.u32 2147483647, %v1995
    %v2056 = vand.u32 2147483647, %v1998
    %v2057 = vand.u32 2147483647, %v2003
    %v2058 = vand.u32 2147483647, %v2006
    %v2059 = vand.u32 2147483647, %v2011
    %v2060 = vand.u32 2147483647, %v2014
    %v2061 = vand.u32 2147483647, %v2019
    %v2062 = vand.u32 2147483647, %v2022
    %v2063 = vand.u32 2147483647, %v2027
    %v2064 = vand.u32 2147483647, %v2030
    %v2065 = vsub.f32 0.0, %v2049
    %v2066 = vsub.f32 0.0, %v2050
    %v2067 = vsub.f32 0.0, %v2051
    %v2068 = vsub.f32 0.0, %v2052
    %v2069 = vsub.f32 0.0, %v2053
    %v2070 = vsub.f32 0.0, %v2054
    %v2071 = vsub.f32 0.0, %v2055
    %v2072 = vsub.f32 0.0, %v2056
    %v2073 = vsub.f32 0.0, %v2057
    %v2074 = vsub.f32 0.0, %v2058
    %v2075 = vsub.f32 0.0, %v2059
    %v2076 = vsub.f32 0.0, %v2060
    %v2077 = vsub.f32 0.0, %v2061
    %v2078 = vsub.f32 0.0, %v2062
    %v2079 = vsub.f32 0.0, %v2063
    %v2080 = vsub.f32 0.0, %v2064
    %v2081 = vmul.f32 %v2065, 1.442695
    %v2082 = vpow.pop %v2081
    %v2083 = vmul.f32 %v2066, 1.442695
    %v2084 = vpow.pop %v2083
    %v2085 = vmul.f32 %v2067, 1.442695
    %v2086 = vpow.pop %v2085
    %v2087 = vmul.f32 %v2068, 1.442695
    %v2088 = vpow.pop %v2087
    %v2089 = vmul.f32 %v2069, 1.442695
    %v2090 = vpow.pop %v2089
    %v2091 = vmul.f32 %v2070, 1.442695
    %v2092 = vpow.pop %v2091
    %v2093 = vmul.f32 %v2071, 1.442695
    %v2094 = vpow.pop %v2093
    %v2095 = vmul.f32 %v2072, 1.442695
    %v2096 = vpow.pop %v2095
    %v2097 = vmul.f32 %v2073, 1.442695
    %v2098 = vpow.pop %v2097
    %v2099 = vmul.f32 %v2074, 1.442695
    %v2100 = vpow.pop %v2099
    %v2101 = vmul.f32 %v2075, 1.442695
    %v2102 = vpow.pop %v2101
    %v2103 = vmul.f32 %v2076, 1.442695
    %v2104 = vpow.pop %v2103
    %v2105 = vmul.f32 %v2077, 1.442695
    %v2106 = vpow.pop %v2105
    %v2107 = vmul.f32 %v2078, 1.442695
    %v2108 = vpow.pop %v2107
    %v2109 = vmul.f32 %v2079, 1.442695
    %v2110 = vpow.pop %v2109
    %v2111 = vmul.f32 %v2080, 1.442695
    %v2112 = vpow.pop %v2111
    %v2113 = vadd.f32 %v2082, 1.0
    %v2114 = vlog2.pop %v2113
    %v2115 = vmul.f32 %v2114, 0.6931472
    %v2116 = vmul.f32 -0.5, %v2082
    %v2117 = vadd.f32 %v2116, 1.0
    %v2118 = vmul.f32 %v2117, %v2082
    %v2119 = vand.u32 2147483647, %v2082
    %vm2120 = vcmp.lt.f32.partialorder %v2119, 0.0004427343
    %v2121 = vsel %vm2120, %v2118, %v2115
    %v2122 = vadd.f32 %v2084, 1.0
    %v2123 = vlog2.pop %v2122
    %v2124 = vmul.f32 %v2123, 0.6931472
    %v2125 = vmul.f32 -0.5, %v2084
    %v2126 = vadd.f32 %v2125, 1.0
    %v2127 = vmul.f32 %v2126, %v2084
    %v2128 = vand.u32 2147483647, %v2084
    %vm2129 = vcmp.lt.f32.partialorder %v2128, 0.0004427343
    %v2130 = vsel %vm2129, %v2127, %v2124
    %v2131 = vadd.f32 %v2086, 1.0
    %v2132 = vlog2.pop %v2131
    %v2133 = vmul.f32 %v2132, 0.6931472
    %v2134 = vmul.f32 -0.5, %v2086
    %v2135 = vadd.f32 %v2134, 1.0
    %v2136 = vmul.f32 %v2135, %v2086
    %v2137 = vand.u32 2147483647, %v2086
    %vm2138 = vcmp.lt.f32.partialorder %v2137, 0.0004427343
    %v2139 = vsel %vm2138, %v2136, %v2133
    %v2140 = vadd.f32 %v2088, 1.0
    %v2141 = vlog2.pop %v2140
    %v2142 = vmul.f32 %v2141, 0.6931472
    %v2143 = vmul.f32 -0.5, %v2088
    %v2144 = vadd.f32 %v2143, 1.0
    %v2145 = vmul.f32 %v2144, %v2088
    %v2146 = vand.u32 2147483647, %v2088
    %vm2147 = vcmp.lt.f32.partialorder %v2146, 0.0004427343
    %v2148 = vsel %vm2147, %v2145, %v2142
    %v2149 = vadd.f32 %v2090, 1.0
    %v2150 = vlog2.pop %v2149
    %v2151 = vmul.f32 %v2150, 0.6931472
    %v2152 = vmul.f32 -0.5, %v2090
    %v2153 = vadd.f32 %v2152, 1.0
    %v2154 = vmul.f32 %v2153, %v2090
    %v2155 = vand.u32 2147483647, %v2090
    %vm2156 = vcmp.lt.f32.partialorder %v2155, 0.0004427343
    %v2157 = vsel %vm2156, %v2154, %v2151
    %v2158 = vadd.f32 %v2092, 1.0
    %v2159 = vlog2.pop %v2158
    %v2160 = vmul.f32 %v2159, 0.6931472
    %v2161 = vmul.f32 -0.5, %v2092
    %v2162 = vadd.f32 %v2161, 1.0
    %v2163 = vmul.f32 %v2162, %v2092
    %v2164 = vand.u32 2147483647, %v2092
    %vm2165 = vcmp.lt.f32.partialorder %v2164, 0.0004427343
    %v2166 = vsel %vm2165, %v2163, %v2160
    %v2167 = vadd.f32 %v2094, 1.0
    %v2168 = vlog2.pop %v2167
    %v2169 = vmul.f32 %v2168, 0.6931472
    %v2170 = vmul.f32 -0.5, %v2094
    %v2171 = vadd.f32 %v2170, 1.0
    %v2172 = vmul.f32 %v2171, %v2094
    %v2173 = vand.u32 2147483647, %v2094
    %vm2174 = vcmp.lt.f32.partialorder %v2173, 0.0004427343
    %v2175 = vsel %vm2174, %v2172, %v2169
    %v2176 = vadd.f32 %v2096, 1.0
    %v2177 = vlog2.pop %v2176
    %v2178 = vmul.f32 %v2177, 0.6931472
    %v2179 = vmul.f32 -0.5, %v2096
    %v2180 = vadd.f32 %v2179, 1.0
    %v2181 = vmul.f32 %v2180, %v2096
    %v2182 = vand.u32 2147483647, %v2096
    %vm2183 = vcmp.lt.f32.partialorder %v2182, 0.0004427343
    %v2184 = vsel %vm2183, %v2181, %v2178
    %v2185 = vadd.f32 %v2098, 1.0
    %v2186 = vlog2.pop %v2185
    %v2187 = vmul.f32 %v2186, 0.6931472
    %v2188 = vmul.f32 -0.5, %v2098
    %v2189 = vadd.f32 %v2188, 1.0
    %v2190 = vmul.f32 %v2189, %v2098
    %v2191 = vand.u32 2147483647, %v2098
    %vm2192 = vcmp.lt.f32.partialorder %v2191, 0.0004427343
    %v2193 = vsel %vm2192, %v2190, %v2187
    %v2194 = vadd.f32 %v2100, 1.0
    %v2195 = vlog2.pop %v2194
    %v2196 = vmul.f32 %v2195, 0.6931472
    %v2197 = vmul.f32 -0.5, %v2100
    %v2198 = vadd.f32 %v2197, 1.0
    %v2199 = vmul.f32 %v2198, %v2100
    %v2200 = vand.u32 2147483647, %v2100
    %vm2201 = vcmp.lt.f32.partialorder %v2200, 0.0004427343
    %v2202 = vsel %vm2201, %v2199, %v2196
    %v2203 = vadd.f32 %v2102, 1.0
    %v2204 = vlog2.pop %v2203
    %v2205 = vmul.f32 %v2204, 0.6931472
    %v2206 = vmul.f32 -0.5, %v2102
    %v2207 = vadd.f32 %v2206, 1.0
    %v2208 = vmul.f32 %v2207, %v2102
    %v2209 = vand.u32 2147483647, %v2102
    %vm2210 = vcmp.lt.f32.partialorder %v2209, 0.0004427343
    %v2211 = vsel %vm2210, %v2208, %v2205
    %v2212 = vadd.f32 %v2104, 1.0
    %v2213 = vlog2.pop %v2212
    %v2214 = vmul.f32 %v2213, 0.6931472
    %v2215 = vmul.f32 -0.5, %v2104
    %v2216 = vadd.f32 %v2215, 1.0
    %v2217 = vmul.f32 %v2216, %v2104
    %v2218 = vand.u32 2147483647, %v2104
    %vm2219 = vcmp.lt.f32.partialorder %v2218, 0.0004427343
    %v2220 = vsel %vm2219, %v2217, %v2214
    %v2221 = vadd.f32 %v2106, 1.0
    %v2222 = vlog2.pop %v2221
    %v2223 = vmul.f32 %v2222, 0.6931472
    %v2224 = vmul.f32 -0.5, %v2106
    %v2225 = vadd.f32 %v2224, 1.0
    %v2226 = vmul.f32 %v2225, %v2106
    %v2227 = vand.u32 2147483647, %v2106
    %vm2228 = vcmp.lt.f32.partialorder %v2227, 0.0004427343
    %v2229 = vsel %vm2228, %v2226, %v2223
    %v2230 = vadd.f32 %v2108, 1.0
    %v2231 = vlog2.pop %v2230
    %v2232 = vmul.f32 %v2231, 0.6931472
    %v2233 = vmul.f32 -0.5, %v2108
    %v2234 = vadd.f32 %v2233, 1.0
    %v2235 = vmul.f32 %v2234, %v2108
    %v2236 = vand.u32 2147483647, %v2108
    %vm2237 = vcmp.lt.f32.partialorder %v2236, 0.0004427343
    %v2238 = vsel %vm2237, %v2235, %v2232
    %v2239 = vadd.f32 %v2110, 1.0
    %v2240 = vlog2.pop %v2239
    %v2241 = vmul.f32 %v2240, 0.6931472
    %v2242 = vmul.f32 -0.5, %v2110
    %v2243 = vadd.f32 %v2242, 1.0
    %v2244 = vmul.f32 %v2243, %v2110
    %v2245 = vand.u32 2147483647, %v2110
    %vm2246 = vcmp.lt.f32.partialorder %v2245, 0.0004427343
    %v2247 = vsel %vm2246, %v2244, %v2241
    %v2248 = vadd.f32 %v2112, 1.0
    %v2249 = vlog2.pop %v2248
    %v2250 = vmul.f32 %v2249, 0.6931472
    %v2251 = vmul.f32 -0.5, %v2112
    %v2252 = vadd.f32 %v2251, 1.0
    %v2253 = vmul.f32 %v2252, %v2112
    %v2254 = vand.u32 2147483647, %v2112
    %vm2255 = vcmp.lt.f32.partialorder %v2254, 0.0004427343
    %v2256 = vsel %vm2255, %v2253, %v2250
    %v2257 = vadd.f32 %v2033, %v2121
    %v2258 = vadd.f32 %v2034, %v2130
    %v2259 = vadd.f32 %v2035, %v2139
    %v2260 = vadd.f32 %v2036, %v2148
    %v2261 = vadd.f32 %v2037, %v2157
    %v2262 = vadd.f32 %v2038, %v2166
    %v2263 = vadd.f32 %v2039, %v2175
    %v2264 = vadd.f32 %v2040, %v2184
    %v2265 = vadd.f32 %v2041, %v2193
    %v2266 = vadd.f32 %v2042, %v2202
    %v2267 = vadd.f32 %v2043, %v2211
    %v2268 = vadd.f32 %v2044, %v2220
    %v2269 = vadd.f32 %v2045, %v2229
    %v2270 = vadd.f32 %v2046, %v2238
    %v2271 = vadd.f32 %v2047, %v2247
    %v2272 = vadd.f32 %v2048, %v2256
    %v2273 = vsub.f32 %v2257, 0.6931472
    %v2274 = vsub.f32 %v2258, 0.6931472
    %v2275 = vsub.f32 %v2259, 0.6931472
    %v2276 = vsub.f32 %v2260, 0.6931472
    %v2277 = vsub.f32 %v2261, 0.6931472
    %v2278 = vsub.f32 %v2262, 0.6931472
    %v2279 = vsub.f32 %v2263, 0.6931472
    %v2280 = vsub.f32 %v2264, 0.6931472
    %v2281 = vsub.f32 %v2265, 0.6931472
    %v2282 = vsub.f32 %v2266, 0.6931472
    %v2283 = vsub.f32 %v2267, 0.6931472
    %v2284 = vsub.f32 %v2268, 0.6931472
    %v2285 = vsub.f32 %v2269, 0.6931472
    %v2286 = vsub.f32 %v2270, 0.6931472
    %v2287 = vsub.f32 %v2271, 0.6931472
    %v2288 = vsub.f32 %v2272, 0.6931472
    %v2289 = vpack.c.bf16 %v2274, %v2273
    %v2290 = vpack.c.bf16 %v2276, %v2275
    %v2291 = vpack.c.bf16 %v2278, %v2277
    %v2292 = vpack.c.bf16 %v2280, %v2279
    %v2293 = vpack.c.bf16 %v2282, %v2281
    %v2294 = vpack.c.bf16 %v2284, %v2283
    %v2295 = vpack.c.bf16 %v2286, %v2285
    %v2296 = vpack.c.bf16 %v2288, %v2287
    %s2297 = scalar_lea.vmem %s7, 176
    %v2298 = vld [vmem:[%s2297] sm:$0xf]
    %v2299 = vld [vmem:[%s2297 + $0x4] sm:$0xf]
    %v2300 = vld [vmem:[%s2297 + $0x8] sm:$0xf]
    %v2301 = vld [vmem:[%s2297 + $0xc] sm:$0xf]
    %v2302 = vlaneseq
    %v2303 = vshrl.u32 %v2302, 7
    %v2304 = vsub.s32 1, %v2303
    %v2305 = vrot.slane %v1914, %v2304
    %v2310 = vunpack.c.l.b16 %v2298
    %v2311 = vunpack.c.l.b16 %v2299
    %v2312 = vunpack.c.l.b16 %v2300
    %v2313 = vunpack.c.l.b16 %v2301
    %v2314 = vpack.c.b16 %v2311, %v2310
    %v2315 = vpack.c.b16 %v2313, %v2312
    %v2319 = vsel %vm859, %v2289, 0
    %v2322 = vsel %vm859, %v2290, 0
    %v2325 = vsel %vm859, %v2291, 0
    %v2328 = vsel %vm859, %v2292, 0
    %v2331 = vsel %vm859, %v2293, 0
    %v2334 = vsel %vm859, %v2294, 0
    %v2337 = vsel %vm859, %v2295, 0
    %v2340 = vsel %vm859, %v2296, 0
    %2342 = vmatprep.subr.bf16.mxu0 0
    %2343 = vmatpush1.bf16.msra.mxu0 %v2314
    %2344 = vmatprep.subr.bf16.mxu0 0
    %2345 = vmatpush1.bf16.msra.mxu0 %v2315
    %2346 = vmatprep.subr.bf16.mxu0 0
    %2347 = vmatpush1.bf16.msra.mxu0 0
    %2348 = vmatprep.subr.bf16.mxu0 0
    %2349 = vmatpush1.bf16.msra.mxu0 0
    %2350 = vmatprep.subr.bf16.mxu0 0
    %2351 = vmatpush1.bf16.msra.mxu0 0
    %2352 = vmatprep.subr.bf16.mxu0 0
    %2353 = vmatpush1.bf16.msra.mxu0 0
    %2354 = vmatprep.subr.bf16.mxu0 0
    %2355 = vmatpush1.bf16.msra.mxu0 0
    %2356 = vmatprep.subr.bf16.mxu0 0
    %2357 = vmatpush1.bf16.msra.mxu0 0
    %2358 = vmatprep.subr.bf16.mxu0 0
    %2359 = vmatpush1.bf16.msra.mxu0 0
    %2360 = vmatprep.subr.bf16.mxu0 0
    %2361 = vmatpush1.bf16.msra.mxu0 0
    %2362 = vmatprep.subr.bf16.mxu0 0
    %2363 = vmatpush1.bf16.msra.mxu0 0
    %2364 = vmatprep.subr.bf16.mxu0 0
    %2365 = vmatpush1.bf16.msra.mxu0 0
    %2366 = vmatprep.subr.bf16.mxu0 0
    %2367 = vmatpush1.bf16.msra.mxu0 0
    %2368 = vmatprep.subr.bf16.mxu0 0
    %2369 = vmatpush1.bf16.msra.mxu0 0
    %2370 = vmatprep.subr.bf16.mxu0 0
    %2371 = vmatpush1.bf16.msra.mxu0 0
    %2372 = vmatprep.subr.bf16.mxu0 0
    %2373 = vmatpush1.bf16.msra.mxu0 0
    %2374 = vmatprep.mubr.bf16.mxu0 0
    %2375 = vmatmul.mubr.bf16.gmra.mrb[0].mxu0 %v2319
    %v2376 = vpop.f32.mrb[0].mxu0
    %v2377 = vadd.f32 %v2305, %v2376
    %v2378 = vpop.f32.mrb[0].mxu0
    %v2379 = vpop.f32.mrb[0].mxu0
    %v2380 = vadd.f32 %v2305, %v2379
    %v2381 = vpop.f32.mrb[0].mxu0
    %2382 = vmatprep.mubr.bf16.mxu0 0
    %2383 = vmatmul.mubr.bf16.gmra.mrb[0].mxu0 %v2322
    %v2384 = vpop.f32.mrb[0].mxu0
    %v2385 = vadd.f32 %v2305, %v2384
    %v2386 = vpop.f32.mrb[0].mxu0
    %v2387 = vpop.f32.mrb[0].mxu0
    %v2388 = vadd.f32 %v2305, %v2387
    %v2389 = vpop.f32.mrb[0].mxu0
    %2390 = vmatprep.mubr.bf16.mxu0 0
    %2391 = vmatmul.mubr.bf16.gmra.mrb[0].mxu0 %v2325
    %v2392 = vpop.f32.mrb[0].mxu0
    %v2393 = vadd.f32 %v2305, %v2392
    %v2394 = vpop.f32.mrb[0].mxu0
    %v2395 = vpop.f32.mrb[0].mxu0
    %v2396 = vadd.f32 %v2305, %v2395
    %v2397 = vpop.f32.mrb[0].mxu0
    %2398 = vmatprep.mubr.bf16.mxu0 0
    %2399 = vmatmul.mubr.bf16.gmra.mrb[0].mxu0 %v2328
    %v2400 = vpop.f32.mrb[0].mxu0
    %v2401 = vadd.f32 %v2305, %v2400
    %v2402 = vpop.f32.mrb[0].mxu0
    %v2403 = vpop.f32.mrb[0].mxu0
    %v2404 = vadd.f32 %v2305, %v2403
    %v2405 = vpop.f32.mrb[0].mxu0
    %2406 = vmatprep.mubr.bf16.mxu0 0
    %2407 = vmatmul.mubr.bf16.gmra.mrb[0].mxu0 %v2331
    %v2408 = vpop.f32.mrb[0].mxu0
    %v2409 = vadd.f32 %v2305, %v2408
    %v2410 = vpop.f32.mrb[0].mxu0
    %v2411 = vpop.f32.mrb[0].mxu0
    %v2412 = vadd.f32 %v2305, %v2411
    %v2413 = vpop.f32.mrb[0].mxu0
    %2414 = vmatprep.mubr.bf16.mxu0 0
    %2415 = vmatmul.mubr.bf16.gmra.mrb[0].mxu0 %v2334
    %v2416 = vpop.f32.mrb[0].mxu0
    %v2417 = vadd.f32 %v2305, %v2416
    %v2418 = vpop.f32.mrb[0].mxu0
    %v2419 = vpop.f32.mrb[0].mxu0
    %v2420 = vadd.f32 %v2305, %v2419
    %v2421 = vpop.f32.mrb[0].mxu0
    %2422 = vmatprep.mubr.bf16.mxu0 0
    %2423 = vmatmul.mubr.bf16.gmra.mrb[0].mxu0 %v2337
    %v2424 = vpop.f32.mrb[0].mxu0
    %v2425 = vadd.f32 %v2305, %v2424
    %v2426 = vpop.f32.mrb[0].mxu0
    %v2427 = vpop.f32.mrb[0].mxu0
    %v2428 = vadd.f32 %v2305, %v2427
    %v2429 = vpop.f32.mrb[0].mxu0
    %2430 = vmatprep.mubr.bf16.mxu0 0
    %2431 = vmatmul.mubr.bf16.gmra.mrb[0].mxu0 %v2340
    %v2432 = vpop.f32.mrb[0].mxu0
    %v2433 = vadd.f32 %v2305, %v2432
    %v2434 = vpop.f32.mrb[0].mxu0
    %v2435 = vpop.f32.mrb[0].mxu0
    %v2436 = vadd.f32 %v2305, %v2435
    %v2437 = vpop.f32.mrb[0].mxu0
    %2438 = vdwg.mxu0
    %v2439 = vld [vmem:[%s0] sm:$0xff]
    %v2440 = vld [vmem:[%s0 + $0x8] sm:$0xff]
    %v2441 = vpack.c.bf16 %v2440, %v2439
    %s2442 = scalar_lea.vmem %s7, 32
    %v2443 = vld [vmem:[%s2442] sm:$0xf]
    %v2444 = vld [vmem:[%s2442 + $0x4] sm:$0xf]
    %v2445 = vld [vmem:[%s2442 + $0x8] sm:$0xf]
    %v2446 = vld [vmem:[%s2442 + $0xc] sm:$0xf]
    %v2451 = vunpack.c.l.b16 %v2443
    %v2452 = vunpack.c.l.b16 %v2444
    %v2453 = vunpack.c.l.b16 %v2445
    %v2454 = vunpack.c.l.b16 %v2446
    %v2455 = vpack.c.b16 %v2452, %v2451
    %v2456 = vpack.c.b16 %v2454, %v2453
    %v2460 = vsel %vm859, %v2441, 0
    %2462 = vmatprep.subr.bf16.mxu0 0
    %2463 = vmatpush1.bf16.msra.mxu0 %v2455
    %2464 = vmatprep.subr.bf16.mxu0 0
    %2465 = vmatpush1.bf16.msra.mxu0 %v2456
    %2466 = vmatprep.subr.bf16.mxu0 0
    %2467 = vmatpush1.bf16.msra.mxu0 0
    %2468 = vmatprep.subr.bf16.mxu0 0
    %2469 = vmatpush1.bf16.msra.mxu0 0
    %2470 = vmatprep.subr.bf16.mxu0 0
    %2471 = vmatpush1.bf16.msra.mxu0 0
    %2472 = vmatprep.subr.bf16.mxu0 0
    %2473 = vmatpush1.bf16.msra.mxu0 0
    %2474 = vmatprep.subr.bf16.mxu0 0
    %2475 = vmatpush1.bf16.msra.mxu0 0
    %2476 = vmatprep.subr.bf16.mxu0 0
    %2477 = vmatpush1.bf16.msra.mxu0 0
    %2478 = vmatprep.subr.bf16.mxu0 0
    %2479 = vmatpush1.bf16.msra.mxu0 0
    %2480 = vmatprep.subr.bf16.mxu0 0
    %2481 = vmatpush1.bf16.msra.mxu0 0
    %2482 = vmatprep.subr.bf16.mxu0 0
    %2483 = vmatpush1.bf16.msra.mxu0 0
    %2484 = vmatprep.subr.bf16.mxu0 0
    %2485 = vmatpush1.bf16.msra.mxu0 0
    %2486 = vmatprep.subr.bf16.mxu0 0
    %2487 = vmatpush1.bf16.msra.mxu0 0
    %2488 = vmatprep.subr.bf16.mxu0 0
    %2489 = vmatpush1.bf16.msra.mxu0 0
    %2490 = vmatprep.subr.bf16.mxu0 0
    %2491 = vmatpush1.bf16.msra.mxu0 0
    %2492 = vmatprep.subr.bf16.mxu0 0
    %2493 = vmatpush1.bf16.msra.mxu0 0
    %2494 = vmatprep.mubr.bf16.mxu0 0
    %2495 = vmatmul.mubr.bf16.gmra.mrb[0].mxu0 %v2460
    %v2496 = vpop.f32.mrb[0].mxu0
    %v2497 = vadd.f32 0.0, %v2496
    %v2498 = vpop.f32.mrb[0].mxu0
    %v2499 = vpop.f32.mrb[0].mxu0
    %v2500 = vadd.f32 0.0, %v2499
    %v2501 = vpop.f32.mrb[0].mxu0
    %2502 = vdwg.mxu0
    %v2503 = vpack.c.bf16 %v2500, %v2497
    %vm2504 = vcmask 130048
    %v2506 = vsel %vm2504, %v819, 0
    %v2509 = vsel %vm2504, %v820, 0
    %v2512 = vsel %vm2504, %v821, 0
    %v2515 = vsel %vm2504, %v822, 0
    %v2518 = vsel %vm2504, %v823, 0
    %v2521 = vsel %vm2504, %v824, 0
    %v2524 = vsel %vm2504, %v825, 0
    %v2527 = vsel %vm2504, %v826, 0
    %2529 = vmatprep.subr.bf16.mxu0 0
    %2530 = vmatpush1.bf16.msra.mxu0 %v2503
    %2531 = vmatprep.subr.bf16.mxu0 0
    %2532 = vmatpush1.bf16.msra.mxu0 0
    %2533 = vmatprep.subr.bf16.mxu0 0
    %2534 = vmatpush1.bf16.msra.mxu0 0
    %2535 = vmatprep.subr.bf16.mxu0 0
    %2536 = vmatpush1.bf16.msra.mxu0 0
    %2537 = vmatprep.subr.bf16.mxu0 0
    %2538 = vmatpush1.bf16.msra.mxu0 0
    %2539 = vmatprep.subr.bf16.mxu0 0
    %2540 = vmatpush1.bf16.msra.mxu0 0
    %2541 = vmatprep.subr.bf16.mxu0 0
    %2542 = vmatpush1.bf16.msra.mxu0 0
    %2543 = vmatprep.subr.bf16.mxu0 0
    %2544 = vmatpush1.bf16.msra.mxu0 0
    %2545 = vmatprep.subr.bf16.mxu0 0
    %2546 = vmatpush1.bf16.msra.mxu0 0
    %2547 = vmatprep.subr.bf16.mxu0 0
    %2548 = vmatpush1.bf16.msra.mxu0 0
    %2549 = vmatprep.subr.bf16.mxu0 0
    %2550 = vmatpush1.bf16.msra.mxu0 0
    %2551 = vmatprep.subr.bf16.mxu0 0
    %2552 = vmatpush1.bf16.msra.mxu0 0
    %2553 = vmatprep.subr.bf16.mxu0 0
    %2554 = vmatpush1.bf16.msra.mxu0 0
    %2555 = vmatprep.subr.bf16.mxu0 0
    %2556 = vmatpush1.bf16.msra.mxu0 0
    %2557 = vmatprep.subr.bf16.mxu0 0
    %2558 = vmatpush1.bf16.msra.mxu0 0
    %2559 = vmatprep.subr.bf16.mxu0 0
    %2560 = vmatpush1.bf16.msra.mxu0 0
    %2561 = vmatprep.mubr.bf16.mxu0 0
    %2562 = vmatmul.mubr.bf16.gmra.mrb[0].mxu0 %v2506
    %v2563 = vpop.f32.mrb[0].mxu0
    %v2564 = vadd.f32 0.0, %v2563
    %v2565 = vpop.f32.mrb[0].mxu0
    %v2566 = vpop.f32.mrb[0].mxu0
    %v2567 = vadd.f32 0.0, %v2566
    %v2568 = vpop.f32.mrb[0].mxu0
    %2569 = vmatprep.mubr.bf16.mxu0 0
    %2570 = vmatmul.mubr.bf16.gmra.mrb[0].mxu0 %v2509
    %v2571 = vpop.f32.mrb[0].mxu0
    %v2572 = vadd.f32 0.0, %v2571
    %v2573 = vpop.f32.mrb[0].mxu0
    %v2574 = vpop.f32.mrb[0].mxu0
    %v2575 = vadd.f32 0.0, %v2574
    %v2576 = vpop.f32.mrb[0].mxu0
    %2577 = vmatprep.mubr.bf16.mxu0 0
    %2578 = vmatmul.mubr.bf16.gmra.mrb[0].mxu0 %v2512
    %v2579 = vpop.f32.mrb[0].mxu0
    %v2580 = vadd.f32 0.0, %v2579
    %v2581 = vpop.f32.mrb[0].mxu0
    %v2582 = vpop.f32.mrb[0].mxu0
    %v2583 = vadd.f32 0.0, %v2582
    %v2584 = vpop.f32.mrb[0].mxu0
    %2585 = vmatprep.mubr.bf16.mxu0 0
    %2586 = vmatmul.mubr.bf16.gmra.mrb[0].mxu0 %v2515
    %v2587 = vpop.f32.mrb[0].mxu0
    %v2588 = vadd.f32 0.0, %v2587
    %v2589 = vpop.f32.mrb[0].mxu0
    %v2590 = vpop.f32.mrb[0].mxu0
    %v2591 = vadd.f32 0.0, %v2590
    %v2592 = vpop.f32.mrb[0].mxu0
    %2593 = vmatprep.mubr.bf16.mxu0 0
    %2594 = vmatmul.mubr.bf16.gmra.mrb[0].mxu0 %v2518
    %v2595 = vpop.f32.mrb[0].mxu0
    %v2596 = vadd.f32 0.0, %v2595
    %v2597 = vpop.f32.mrb[0].mxu0
    %v2598 = vpop.f32.mrb[0].mxu0
    %v2599 = vadd.f32 0.0, %v2598
    %v2600 = vpop.f32.mrb[0].mxu0
    %2601 = vmatprep.mubr.bf16.mxu0 0
    %2602 = vmatmul.mubr.bf16.gmra.mrb[0].mxu0 %v2521
    %v2603 = vpop.f32.mrb[0].mxu0
    %v2604 = vadd.f32 0.0, %v2603
    %v2605 = vpop.f32.mrb[0].mxu0
    %v2606 = vpop.f32.mrb[0].mxu0
    %v2607 = vadd.f32 0.0, %v2606
    %v2608 = vpop.f32.mrb[0].mxu0
    %2609 = vmatprep.mubr.bf16.mxu0 0
    %2610 = vmatmul.mubr.bf16.gmra.mrb[0].mxu0 %v2524
    %v2611 = vpop.f32.mrb[0].mxu0
    %v2612 = vadd.f32 0.0, %v2611
    %v2613 = vpop.f32.mrb[0].mxu0
    %v2614 = vpop.f32.mrb[0].mxu0
    %v2615 = vadd.f32 0.0, %v2614
    %v2616 = vpop.f32.mrb[0].mxu0
    %2617 = vmatprep.mubr.bf16.mxu0 0
    %2618 = vmatmul.mubr.bf16.gmra.mrb[0].mxu0 %v2527
    %v2619 = vpop.f32.mrb[0].mxu0
    %v2620 = vadd.f32 0.0, %v2619
    %v2621 = vpop.f32.mrb[0].mxu0
    %v2622 = vpop.f32.mrb[0].mxu0
    %v2623 = vadd.f32 0.0, %v2622
    %v2624 = vpop.f32.mrb[0].mxu0
    %2625 = vdwg.mxu0
    %v2626 = vmul.f32 %v2564, %v1325
    %v2627 = vmul.f32 %v2567, %v1328
    %v2628 = vmul.f32 %v2572, %v1333
    %v2629 = vmul.f32 %v2575, %v1336
    %v2630 = vmul.f32 %v2580, %v1341
    %v2631 = vmul.f32 %v2583, %v1344
    %v2632 = vmul.f32 %v2588, %v1349
    %v2633 = vmul.f32 %v2591, %v1352
    %v2634 = vmul.f32 %v2596, %v1357
    %v2635 = vmul.f32 %v2599, %v1360
    %v2636 = vmul.f32 %v2604, %v1365
    %v2637 = vmul.f32 %v2607, %v1368
    %v2638 = vmul.f32 %v2612, %v1373
    %v2639 = vmul.f32 %v2615, %v1376
    %v2640 = vmul.f32 %v2620, %v1381
    %v2641 = vmul.f32 %v2623, %v1384
    %v2642 = vpack.c.bf16 %v2627, %v2626
    %v2643 = vpack.c.bf16 %v2629, %v2628
    %v2644 = vpack.c.bf16 %v2631, %v2630
    %v2645 = vpack.c.bf16 %v2633, %v2632
    %v2646 = vpack.c.bf16 %v2635, %v2634
    %v2647 = vpack.c.bf16 %v2637, %v2636
    %v2648 = vpack.c.bf16 %v2639, %v2638
    %v2649 = vpack.c.bf16 %v2641, %v2640
    %2650 = vmatprep.subr.bf16.mxu0 0
    %2651 = vmatpush1.bf16.msra.mxu0 %v2642
    %2652 = vmatprep.subr.bf16.mxu0 0
    %2653 = vmatpush1.bf16.msra.mxu0 %v2643
    %2654 = vmatprep.subr.bf16.mxu0 0
    %2655 = vmatpush1.bf16.msra.mxu0 %v2644
    %2656 = vmatprep.subr.bf16.mxu0 0
    %2657 = vmatpush1.bf16.msra.mxu0 %v2645
    %2658 = vmatprep.subr.bf16.mxu0 0
    %2659 = vmatpush1.bf16.msra.mxu0 %v2646
    %2660 = vmatprep.subr.bf16.mxu0 0
    %2661 = vmatpush1.bf16.msra.mxu0 %v2647
    %2662 = vmatprep.subr.bf16.mxu0 0
    %2663 = vmatpush1.bf16.msra.mxu0 %v2648
    %2664 = vmatprep.subr.bf16.mxu0 0
    %2665 = vmatpush1.bf16.msra.mxu0 %v2649
    %2666 = vmatprep.subr.bf16.mxu0 0
    %2667 = vmatpush1.bf16.msra.mxu0 0
    %2668 = vmatprep.subr.bf16.mxu0 0
    %2669 = vmatpush1.bf16.msra.mxu0 0
    %2670 = vmatprep.subr.bf16.mxu0 0
    %2671 = vmatpush1.bf16.msra.mxu0 0
    %2672 = vmatprep.subr.bf16.mxu0 0
    %2673 = vmatpush1.bf16.msra.mxu0 0
    %2674 = vmatprep.subr.bf16.mxu0 0
    %2675 = vmatpush1.bf16.msra.mxu0 0
    %2676 = vmatprep.subr.bf16.mxu0 0
    %2677 = vmatpush1.bf16.msra.mxu0 0
    %2678 = vmatprep.subr.bf16.mxu0 0
    %2679 = vmatpush1.bf16.msra.mxu0 0
    %2680 = vmatprep.subr.bf16.mxu0 0
    %2681 = vmatpush1.bf16.msra.mxu0 0
    %2682 = vmatprep.mubr.bf16.mxu0 0
    %2683 = vmatmul.mubr.bf16.gmra.mrb[0].mxu0 %v829
    %v2684 = vpop.f32.mrb[0].mxu0
    %v2685 = vadd.f32 0.0, %v2684
    %v2686 = vpop.f32.mrb[0].mxu0
    %v2687 = vpop.f32.mrb[0].mxu0
    %v2688 = vadd.f32 0.0, %v2687
    %v2689 = vpop.f32.mrb[0].mxu0
    %2690 = vdwg.mxu0
    %v2691 = vpack.c.bf16 %v2688, %v2685
    %s2692 = scalar_lea.vmem %s7, 48
    %v2693 = vld [vmem:[%s2692] sm:$0xf]
    %v2694 = vld [vmem:[%s2692 + $0x4] sm:$0xf]
    %v2695 = vld [vmem:[%s2692 + $0x8] sm:$0xf]
    %v2696 = vld [vmem:[%s2692 + $0xc] sm:$0xf]
    %v2697 = vlaneseq
    %v2698 = vshrl.u32 %v2697, 7
    %v2699 = vsub.s32 2, %v2698
    %v2700 = vrot.slane %v838, %v2699
    %v2705 = vunpack.c.l.b16 %v2693
    %v2706 = vunpack.c.l.b16 %v2694
    %v2707 = vunpack.c.l.b16 %v2695
    %v2708 = vunpack.c.l.b16 %v2696
    %v2709 = vpack.c.b16 %v2706, %v2705
    %v2710 = vpack.c.b16 %v2708, %v2707
    %v2714 = vsel %vm859, %v2691, 0
    %2716 = vmatprep.subr.bf16.mxu0 0
    %2717 = vmatpush1.bf16.msra.mxu0 %v2709
    %2718 = vmatprep.subr.bf16.mxu0 0
    %2719 = vmatpush1.bf16.msra.mxu0 %v2710
    %2720 = vmatprep.subr.bf16.mxu0 0
    %2721 = vmatpush1.bf16.msra.mxu0 0
    %2722 = vmatprep.subr.bf16.mxu0 0
    %2723 = vmatpush1.bf16.msra.mxu0 0
    %2724 = vmatprep.subr.bf16.mxu0 0
    %2725 = vmatpush1.bf16.msra.mxu0 0
    %2726 = vmatprep.subr.bf16.mxu0 0
    %2727 = vmatpush1.bf16.msra.mxu0 0
    %2728 = vmatprep.subr.bf16.mxu0 0
    %2729 = vmatpush1.bf16.msra.mxu0 0
    %2730 = vmatprep.subr.bf16.mxu0 0
    %2731 = vmatpush1.bf16.msra.mxu0 0
    %2732 = vmatprep.subr.bf16.mxu0 0
    %2733 = vmatpush1.bf16.msra.mxu0 0
    %2734 = vmatprep.subr.bf16.mxu0 0
    %2735 = vmatpush1.bf16.msra.mxu0 0
    %2736 = vmatprep.subr.bf16.mxu0 0
    %2737 = vmatpush1.bf16.msra.mxu0 0
    %2738 = vmatprep.subr.bf16.mxu0 0
    %2739 = vmatpush1.bf16.msra.mxu0 0
    %2740 = vmatprep.subr.bf16.mxu0 0
    %2741 = vmatpush1.bf16.msra.mxu0 0
    %2742 = vmatprep.subr.bf16.mxu0 0
    %2743 = vmatpush1.bf16.msra.mxu0 0
    %2744 = vmatprep.subr.bf16.mxu0 0
    %2745 = vmatpush1.bf16.msra.mxu0 0
    %2746 = vmatprep.subr.bf16.mxu0 0
    %2747 = vmatpush1.bf16.msra.mxu0 0
    %2748 = vmatprep.mubr.bf16.mxu0 0
    %2749 = vmatmul.mubr.bf16.gmra.mrb[0].mxu0 %v2714
    %v2750 = vpop.f32.mrb[0].mxu0
    %v2751 = vadd.f32 %v2700, %v2750
    %v2752 = vpop.f32.mrb[0].mxu0
    %v2753 = vpop.f32.mrb[0].mxu0
    %v2754 = vadd.f32 %v2700, %v2753
    %v2755 = vpop.f32.mrb[0].mxu0
    %2756 = vdwg.mxu0
    %v2757 = vmax.f32 %v2751, 0.0
    %v2758 = vmax.f32 %v2754, 0.0
    %v2759 = vand.u32 2147483647, %v2751
    %v2760 = vand.u32 2147483647, %v2754
    %v2761 = vsub.f32 0.0, %v2759
    %v2762 = vsub.f32 0.0, %v2760
    %v2763 = vmul.f32 %v2761, 1.442695
    %v2764 = vpow.pop %v2763
    %v2765 = vmul.f32 %v2762, 1.442695
    %v2766 = vpow.pop %v2765
    %v2767 = vadd.f32 %v2764, 1.0
    %v2768 = vlog2.pop %v2767
    %v2769 = vmul.f32 %v2768, 0.6931472
    %v2770 = vmul.f32 -0.5, %v2764
    %v2771 = vadd.f32 %v2770, 1.0
    %v2772 = vmul.f32 %v2771, %v2764
    %v2773 = vand.u32 2147483647, %v2764
    %vm2774 = vcmp.lt.f32.partialorder %v2773, 0.0004427343
    %v2775 = vsel %vm2774, %v2772, %v2769
    %v2776 = vadd.f32 %v2766, 1.0
    %v2777 = vlog2.pop %v2776
    %v2778 = vmul.f32 %v2777, 0.6931472
    %v2779 = vmul.f32 -0.5, %v2766
    %v2780 = vadd.f32 %v2779, 1.0
    %v2781 = vmul.f32 %v2780, %v2766
    %v2782 = vand.u32 2147483647, %v2766
    %vm2783 = vcmp.lt.f32.partialorder %v2782, 0.0004427343
    %v2784 = vsel %vm2783, %v2781, %v2778
    %v2785 = vadd.f32 %v2757, %v2775
    %v2786 = vadd.f32 %v2758, %v2784
    %v2787 = vsub.f32 %v2785, 0.6931472
    %v2788 = vsub.f32 %v2786, 0.6931472
    %v2789 = vpack.c.bf16 %v2788, %v2787
    %s2790 = scalar_lea.vmem %s7, 64
    %v2791 = vld [vmem:[%s2790] sm:$0xf]
    %v2792 = vld [vmem:[%s2790 + $0x4] sm:$0xf]
    %v2793 = vld [vmem:[%s2790 + $0x8] sm:$0xf]
    %v2794 = vld [vmem:[%s2790 + $0xc] sm:$0xf]
    %v2795 = vlaneseq
    %v2796 = vshrl.u32 %v2795, 7
    %v2797 = vsub.s32 3, %v2796
    %v2798 = vrot.slane %v838, %v2797
    %v2803 = vunpack.c.l.b16 %v2791
    %v2804 = vunpack.c.l.b16 %v2792
    %v2805 = vunpack.c.l.b16 %v2793
    %v2806 = vunpack.c.l.b16 %v2794
    %v2807 = vpack.c.b16 %v2804, %v2803
    %v2808 = vpack.c.b16 %v2806, %v2805
    %v2812 = vsel %vm859, %v2789, 0
    %2814 = vmatprep.subr.bf16.mxu0 0
    %2815 = vmatpush1.bf16.msra.mxu0 %v2807
    %2816 = vmatprep.subr.bf16.mxu0 0
    %2817 = vmatpush1.bf16.msra.mxu0 %v2808
    %2818 = vmatprep.subr.bf16.mxu0 0
    %2819 = vmatpush1.bf16.msra.mxu0 0
    %2820 = vmatprep.subr.bf16.mxu0 0
    %2821 = vmatpush1.bf16.msra.mxu0 0
    %2822 = vmatprep.subr.bf16.mxu0 0
    %2823 = vmatpush1.bf16.msra.mxu0 0
    %2824 = vmatprep.subr.bf16.mxu0 0
    %2825 = vmatpush1.bf16.msra.mxu0 0
    %2826 = vmatprep.subr.bf16.mxu0 0
    %2827 = vmatpush1.bf16.msra.mxu0 0
    %2828 = vmatprep.subr.bf16.mxu0 0
    %2829 = vmatpush1.bf16.msra.mxu0 0
    %2830 = vmatprep.subr.bf16.mxu0 0
    %2831 = vmatpush1.bf16.msra.mxu0 0
    %2832 = vmatprep.subr.bf16.mxu0 0
    %2833 = vmatpush1.bf16.msra.mxu0 0
    %2834 = vmatprep.subr.bf16.mxu0 0
    %2835 = vmatpush1.bf16.msra.mxu0 0
    %2836 = vmatprep.subr.bf16.mxu0 0
    %2837 = vmatpush1.bf16.msra.mxu0 0
    %2838 = vmatprep.subr.bf16.mxu0 0
    %2839 = vmatpush1.bf16.msra.mxu0 0
    %2840 = vmatprep.subr.bf16.mxu0 0
    %2841 = vmatpush1.bf16.msra.mxu0 0
    %2842 = vmatprep.subr.bf16.mxu0 0
    %2843 = vmatpush1.bf16.msra.mxu0 0
    %2844 = vmatprep.subr.bf16.mxu0 0
    %2845 = vmatpush1.bf16.msra.mxu0 0
    %2846 = vmatprep.mubr.bf16.mxu0 0
    %2847 = vmatmul.mubr.bf16.gmra.mrb[0].mxu0 %v2812
    %v2848 = vpop.f32.mrb[0].mxu0
    %v2849 = vadd.f32 %v2798, %v2848
    %v2850 = vpop.f32.mrb[0].mxu0
    %v2851 = vpop.f32.mrb[0].mxu0
    %v2852 = vadd.f32 %v2798, %v2851
    %v2853 = vpop.f32.mrb[0].mxu0
    %2854 = vdwg.mxu0
    %v2855 = vadd.f32 %v2439, %v2849
    %v2856 = vadd.f32 %v2440, %v2852
    %v2857 = vpack.c.bf16 %v2856, %v2855
    %s2858 = scalar_lea.vmem %s7, 112
    %v2859 = vld [vmem:[%s2858] sm:$0xf]
    %v2860 = vld [vmem:[%s2858 + $0x4] sm:$0xf]
    %v2861 = vld [vmem:[%s2858 + $0x8] sm:$0xf]
    %v2862 = vld [vmem:[%s2858 + $0xc] sm:$0xf]
    %v2867 = vunpack.c.l.b16 %v2859
    %v2868 = vunpack.c.l.b16 %v2860
    %v2869 = vunpack.c.l.b16 %v2861
    %v2870 = vunpack.c.l.b16 %v2862
    %v2871 = vpack.c.b16 %v2868, %v2867
    %v2872 = vpack.c.b16 %v2870, %v2869
    %v2876 = vsel %vm859, %v2857, 0
    %2878 = vmatprep.subr.bf16.mxu0 0
    %2879 = vmatpush1.bf16.msra.mxu0 %v2871
    %2880 = vmatprep.subr.bf16.mxu0 0
    %2881 = vmatpush1.bf16.msra.mxu0 %v2872
    %2882 = vmatprep.subr.bf16.mxu0 0
    %2883 = vmatpush1.bf16.msra.mxu0 0
    %2884 = vmatprep.subr.bf16.mxu0 0
    %2885 = vmatpush1.bf16.msra.mxu0 0
    %2886 = vmatprep.subr.bf16.mxu0 0
    %2887 = vmatpush1.bf16.msra.mxu0 0
    %2888 = vmatprep.subr.bf16.mxu0 0
    %2889 = vmatpush1.bf16.msra.mxu0 0
    %2890 = vmatprep.subr.bf16.mxu0 0
    %2891 = vmatpush1.bf16.msra.mxu0 0
    %2892 = vmatprep.subr.bf16.mxu0 0
    %2893 = vmatpush1.bf16.msra.mxu0 0
    %2894 = vmatprep.subr.bf16.mxu0 0
    %2895 = vmatpush1.bf16.msra.mxu0 0
    %2896 = vmatprep.subr.bf16.mxu0 0
    %2897 = vmatpush1.bf16.msra.mxu0 0
    %2898 = vmatprep.subr.bf16.mxu0 0
    %2899 = vmatpush1.bf16.msra.mxu0 0
    %2900 = vmatprep.subr.bf16.mxu0 0
    %2901 = vmatpush1.bf16.msra.mxu0 0
    %2902 = vmatprep.subr.bf16.mxu0 0
    %2903 = vmatpush1.bf16.msra.mxu0 0
    %2904 = vmatprep.subr.bf16.mxu0 0
    %2905 = vmatpush1.bf16.msra.mxu0 0
    %2906 = vmatprep.subr.bf16.mxu0 0
    %2907 = vmatpush1.bf16.msra.mxu0 0
    %2908 = vmatprep.subr.bf16.mxu0 0
    %2909 = vmatpush1.bf16.msra.mxu0 0
    %2910 = vmatprep.mubr.bf16.mxu0 0
    %2911 = vmatmul.mubr.bf16.gmra.mrb[0].mxu0 %v2876
    %v2912 = vpop.f32.mrb[0].mxu0
    %v2913 = vadd.f32 0.0, %v2912
    %v2914 = vpop.f32.mrb[0].mxu0
    %v2915 = vpop.f32.mrb[0].mxu0
    %v2916 = vadd.f32 0.0, %v2915
    %v2917 = vpop.f32.mrb[0].mxu0
    %2918 = vdwg.mxu0
    %v2919 = vpack.c.bf16 %v2916, %v2913
    %2920 = vmatprep.subr.bf16.mxu0 0
    %2921 = vmatpush1.bf16.msra.mxu0 %v2919
    %2922 = vmatprep.subr.bf16.mxu0 0
    %2923 = vmatpush1.bf16.msra.mxu0 0
    %2924 = vmatprep.subr.bf16.mxu0 0
    %2925 = vmatpush1.bf16.msra.mxu0 0
    %2926 = vmatprep.subr.bf16.mxu0 0
    %2927 = vmatpush1.bf16.msra.mxu0 0
    %2928 = vmatprep.subr.bf16.mxu0 0
    %2929 = vmatpush1.bf16.msra.mxu0 0
    %2930 = vmatprep.subr.bf16.mxu0 0
    %2931 = vmatpush1.bf16.msra.mxu0 0
    %2932 = vmatprep.subr.bf16.mxu0 0
    %2933 = vmatpush1.bf16.msra.mxu0 0
    %2934 = vmatprep.subr.bf16.mxu0 0
    %2935 = vmatpush1.bf16.msra.mxu0 0
    %2936 = vmatprep.subr.bf16.mxu0 0
    %2937 = vmatpush1.bf16.msra.mxu0 0
    %2938 = vmatprep.subr.bf16.mxu0 0
    %2939 = vmatpush1.bf16.msra.mxu0 0
    %2940 = vmatprep.subr.bf16.mxu0 0
    %2941 = vmatpush1.bf16.msra.mxu0 0
    %2942 = vmatprep.subr.bf16.mxu0 0
    %2943 = vmatpush1.bf16.msra.mxu0 0
    %2944 = vmatprep.subr.bf16.mxu0 0
    %2945 = vmatpush1.bf16.msra.mxu0 0
    %2946 = vmatprep.subr.bf16.mxu0 0
    %2947 = vmatpush1.bf16.msra.mxu0 0
    %2948 = vmatprep.subr.bf16.mxu0 0
    %2949 = vmatpush1.bf16.msra.mxu0 0
    %2950 = vmatprep.subr.bf16.mxu0 0
    %2951 = vmatpush1.bf16.msra.mxu0 0
    %2952 = vmatprep.mubr.bf16.mxu0 0
    %2953 = vmatmul.mubr.bf16.gmra.mrb[0].mxu0 %v2506
    %v2954 = vpop.f32.mrb[0].mxu0
    %v2955 = vadd.f32 0.0, %v2954
    %v2956 = vpop.f32.mrb[0].mxu0
    %v2957 = vpop.f32.mrb[0].mxu0
    %v2958 = vadd.f32 0.0, %v2957
    %v2959 = vpop.f32.mrb[0].mxu0
    %2960 = vmatprep.mubr.bf16.mxu0 0
    %2961 = vmatmul.mubr.bf16.gmra.mrb[0].mxu0 %v2509
    %v2962 = vpop.f32.mrb[0].mxu0
    %v2963 = vadd.f32 0.0, %v2962
    %v2964 = vpop.f32.mrb[0].mxu0
    %v2965 = vpop.f32.mrb[0].mxu0
    %v2966 = vadd.f32 0.0, %v2965
    %v2967 = vpop.f32.mrb[0].mxu0
    %2968 = vmatprep.mubr.bf16.mxu0 0
    %2969 = vmatmul.mubr.bf16.gmra.mrb[0].mxu0 %v2512
    %v2970 = vpop.f32.mrb[0].mxu0
    %v2971 = vadd.f32 0.0, %v2970
    %v2972 = vpop.f32.mrb[0].mxu0
    %v2973 = vpop.f32.mrb[0].mxu0
    %v2974 = vadd.f32 0.0, %v2973
    %v2975 = vpop.f32.mrb[0].mxu0
    %2976 = vmatprep.mubr.bf16.mxu0 0
    %2977 = vmatmul.mubr.bf16.gmra.mrb[0].mxu0 %v2515
    %v2978 = vpop.f32.mrb[0].mxu0
    %v2979 = vadd.f32 0.0, %v2978
    %v2980 = vpop.f32.mrb[0].mxu0
    %v2981 = vpop.f32.mrb[0].mxu0
    %v2982 = vadd.f32 0.0, %v2981
    %v2983 = vpop.f32.mrb[0].mxu0
    %2984 = vmatprep.mubr.bf16.mxu0 0
    %2985 = vmatmul.mubr.bf16.gmra.mrb[0].mxu0 %v2518
    %v2986 = vpop.f32.mrb[0].mxu0
    %v2987 = vadd.f32 0.0, %v2986
    %v2988 = vpop.f32.mrb[0].mxu0
    %v2989 = vpop.f32.mrb[0].mxu0
    %v2990 = vadd.f32 0.0, %v2989
    %v2991 = vpop.f32.mrb[0].mxu0
    %2992 = vmatprep.mubr.bf16.mxu0 0
    %2993 = vmatmul.mubr.bf16.gmra.mrb[0].mxu0 %v2521
    %v2994 = vpop.f32.mrb[0].mxu0
    %v2995 = vadd.f32 0.0, %v2994
    %v2996 = vpop.f32.mrb[0].mxu0
    %v2997 = vpop.f32.mrb[0].mxu0
    %v2998 = vadd.f32 0.0, %v2997
    %v2999 = vpop.f32.mrb[0].mxu0
    %3000 = vmatprep.mubr.bf16.mxu0 0
    %3001 = vmatmul.mubr.bf16.gmra.mrb[0].mxu0 %v2524
    %v3002 = vpop.f32.mrb[0].mxu0
    %v3003 = vadd.f32 0.0, %v3002
    %v3004 = vpop.f32.mrb[0].mxu0
    %v3005 = vpop.f32.mrb[0].mxu0
    %v3006 = vadd.f32 0.0, %v3005
    %v3007 = vpop.f32.mrb[0].mxu0
    %3008 = vmatprep.mubr.bf16.mxu0 0
    %3009 = vmatmul.mubr.bf16.gmra.mrb[0].mxu0 %v2527
    %v3010 = vpop.f32.mrb[0].mxu0
    %v3011 = vadd.f32 0.0, %v3010
    %v3012 = vpop.f32.mrb[0].mxu0
    %v3013 = vpop.f32.mrb[0].mxu0
    %v3014 = vadd.f32 0.0, %v3013
    %v3015 = vpop.f32.mrb[0].mxu0
    %3016 = vdwg.mxu0
    %v3017 = vmul.f32 %v2955, %v1851
    %v3018 = vmul.f32 %v2958, %v1854
    %v3019 = vmul.f32 %v2963, %v1859
    %v3020 = vmul.f32 %v2966, %v1862
    %v3021 = vmul.f32 %v2971, %v1867
    %v3022 = vmul.f32 %v2974, %v1870
    %v3023 = vmul.f32 %v2979, %v1875
    %v3024 = vmul.f32 %v2982, %v1878
    %v3025 = vmul.f32 %v2987, %v1883
    %v3026 = vmul.f32 %v2990, %v1886
    %v3027 = vmul.f32 %v2995, %v1891
    %v3028 = vmul.f32 %v2998, %v1894
    %v3029 = vmul.f32 %v3003, %v1899
    %v3030 = vmul.f32 %v3006, %v1902
    %v3031 = vmul.f32 %v3011, %v1907
    %v3032 = vmul.f32 %v3014, %v1910
    %v3033 = vpack.c.bf16 %v3018, %v3017
    %v3034 = vpack.c.bf16 %v3020, %v3019
    %v3035 = vpack.c.bf16 %v3022, %v3021
    %v3036 = vpack.c.bf16 %v3024, %v3023
    %v3037 = vpack.c.bf16 %v3026, %v3025
    %v3038 = vpack.c.bf16 %v3028, %v3027
    %v3039 = vpack.c.bf16 %v3030, %v3029
    %v3040 = vpack.c.bf16 %v3032, %v3031
    %3041 = vmatprep.subr.bf16.mxu0 0
    %3042 = vmatpush1.bf16.msra.mxu0 %v3033
    %3043 = vmatprep.subr.bf16.mxu0 0
    %3044 = vmatpush1.bf16.msra.mxu0 %v3034
    %3045 = vmatprep.subr.bf16.mxu0 0
    %3046 = vmatpush1.bf16.msra.mxu0 %v3035
    %3047 = vmatprep.subr.bf16.mxu0 0
    %3048 = vmatpush1.bf16.msra.mxu0 %v3036
    %3049 = vmatprep.subr.bf16.mxu0 0
    %3050 = vmatpush1.bf16.msra.mxu0 %v3037
    %3051 = vmatprep.subr.bf16.mxu0 0
    %3052 = vmatpush1.bf16.msra.mxu0 %v3038
    %3053 = vmatprep.subr.bf16.mxu0 0
    %3054 = vmatpush1.bf16.msra.mxu0 %v3039
    %3055 = vmatprep.subr.bf16.mxu0 0
    %3056 = vmatpush1.bf16.msra.mxu0 %v3040
    %3057 = vmatprep.subr.bf16.mxu0 0
    %3058 = vmatpush1.bf16.msra.mxu0 0
    %3059 = vmatprep.subr.bf16.mxu0 0
    %3060 = vmatpush1.bf16.msra.mxu0 0
    %3061 = vmatprep.subr.bf16.mxu0 0
    %3062 = vmatpush1.bf16.msra.mxu0 0
    %3063 = vmatprep.subr.bf16.mxu0 0
    %3064 = vmatpush1.bf16.msra.mxu0 0
    %3065 = vmatprep.subr.bf16.mxu0 0
    %3066 = vmatpush1.bf16.msra.mxu0 0
    %3067 = vmatprep.subr.bf16.mxu0 0
    %3068 = vmatpush1.bf16.msra.mxu0 0
    %3069 = vmatprep.subr.bf16.mxu0 0
    %3070 = vmatpush1.bf16.msra.mxu0 0
    %3071 = vmatprep.subr.bf16.mxu0 0
    %3072 = vmatpush1.bf16.msra.mxu0 0
    %3073 = vmatprep.mubr.bf16.mxu0 0
    %3074 = vmatmul.mubr.bf16.gmra.mrb[0].mxu0 %v829
    %v3075 = vpop.f32.mrb[0].mxu0
    %v3076 = vadd.f32 0.0, %v3075
    %v3077 = vpop.f32.mrb[0].mxu0
    %v3078 = vpop.f32.mrb[0].mxu0
    %v3079 = vadd.f32 0.0, %v3078
    %v3080 = vpop.f32.mrb[0].mxu0
    %3081 = vdwg.mxu0
    %v3082 = vpack.c.bf16 %v3079, %v3076
    %s3083 = scalar_lea.vmem %s7, 128
    %v3084 = vld [vmem:[%s3083] sm:$0xf]
    %v3085 = vld [vmem:[%s3083 + $0x4] sm:$0xf]
    %v3086 = vld [vmem:[%s3083 + $0x8] sm:$0xf]
    %v3087 = vld [vmem:[%s3083 + $0xc] sm:$0xf]
    %v3088 = vlaneseq
    %v3089 = vshrl.u32 %v3088, 7
    %v3090 = vsub.s32 2, %v3089
    %v3091 = vrot.slane %v1388, %v3090
    %v3096 = vunpack.c.l.b16 %v3084
    %v3097 = vunpack.c.l.b16 %v3085
    %v3098 = vunpack.c.l.b16 %v3086
    %v3099 = vunpack.c.l.b16 %v3087
    %v3100 = vpack.c.b16 %v3097, %v3096
    %v3101 = vpack.c.b16 %v3099, %v3098
    %v3105 = vsel %vm859, %v3082, 0
    %3107 = vmatprep.subr.bf16.mxu0 0
    %3108 = vmatpush1.bf16.msra.mxu0 %v3100
    %3109 = vmatprep.subr.bf16.mxu0 0
    %3110 = vmatpush1.bf16.msra.mxu0 %v3101
    %3111 = vmatprep.subr.bf16.mxu0 0
    %3112 = vmatpush1.bf16.msra.mxu0 0
    %3113 = vmatprep.subr.bf16.mxu0 0
    %3114 = vmatpush1.bf16.msra.mxu0 0
    %3115 = vmatprep.subr.bf16.mxu0 0
    %3116 = vmatpush1.bf16.msra.mxu0 0
    %3117 = vmatprep.subr.bf16.mxu0 0
    %3118 = vmatpush1.bf16.msra.mxu0 0
    %3119 = vmatprep.subr.bf16.mxu0 0
    %3120 = vmatpush1.bf16.msra.mxu0 0
    %3121 = vmatprep.subr.bf16.mxu0 0
    %3122 = vmatpush1.bf16.msra.mxu0 0
    %3123 = vmatprep.subr.bf16.mxu0 0
    %3124 = vmatpush1.bf16.msra.mxu0 0
    %3125 = vmatprep.subr.bf16.mxu0 0
    %3126 = vmatpush1.bf16.msra.mxu0 0
    %3127 = vmatprep.subr.bf16.mxu0 0
    %3128 = vmatpush1.bf16.msra.mxu0 0
    %3129 = vmatprep.subr.bf16.mxu0 0
    %3130 = vmatpush1.bf16.msra.mxu0 0
    %3131 = vmatprep.subr.bf16.mxu0 0
    %3132 = vmatpush1.bf16.msra.mxu0 0
    %3133 = vmatprep.subr.bf16.mxu0 0
    %3134 = vmatpush1.bf16.msra.mxu0 0
    %3135 = vmatprep.subr.bf16.mxu0 0
    %3136 = vmatpush1.bf16.msra.mxu0 0
    %3137 = vmatprep.subr.bf16.mxu0 0
    %3138 = vmatpush1.bf16.msra.mxu0 0
    %3139 = vmatprep.mubr.bf16.mxu0 0
    %3140 = vmatmul.mubr.bf16.gmra.mrb[0].mxu0 %v3105
    %v3141 = vpop.f32.mrb[0].mxu0
    %v3142 = vadd.f32 %v3091, %v3141
    %v3143 = vpop.f32.mrb[0].mxu0
    %v3144 = vpop.f32.mrb[0].mxu0
    %v3145 = vadd.f32 %v3091, %v3144
    %v3146 = vpop.f32.mrb[0].mxu0
    %3147 = vdwg.mxu0
    %v3148 = vmax.f32 %v3142, 0.0
    %v3149 = vmax.f32 %v3145, 0.0
    %v3150 = vand.u32 2147483647, %v3142
    %v3151 = vand.u32 2147483647, %v3145
    %v3152 = vsub.f32 0.0, %v3150
    %v3153 = vsub.f32 0.0, %v3151
    %v3154 = vmul.f32 %v3152, 1.442695
    %v3155 = vpow.pop %v3154
    %v3156 = vmul.f32 %v3153, 1.442695
    %v3157 = vpow.pop %v3156
    %v3158 = vadd.f32 %v3155, 1.0
    %v3159 = vlog2.pop %v3158
    %v3160 = vmul.f32 %v3159, 0.6931472
    %v3161 = vmul.f32 -0.5, %v3155
    %v3162 = vadd.f32 %v3161, 1.0
    %v3163 = vmul.f32 %v3162, %v3155
    %v3164 = vand.u32 2147483647, %v3155
    %vm3165 = vcmp.lt.f32.partialorder %v3164, 0.0004427343
    %v3166 = vsel %vm3165, %v3163, %v3160
    %v3167 = vadd.f32 %v3157, 1.0
    %v3168 = vlog2.pop %v3167
    %v3169 = vmul.f32 %v3168, 0.6931472
    %v3170 = vmul.f32 -0.5, %v3157
    %v3171 = vadd.f32 %v3170, 1.0
    %v3172 = vmul.f32 %v3171, %v3157
    %v3173 = vand.u32 2147483647, %v3157
    %vm3174 = vcmp.lt.f32.partialorder %v3173, 0.0004427343
    %v3175 = vsel %vm3174, %v3172, %v3169
    %v3176 = vadd.f32 %v3148, %v3166
    %v3177 = vadd.f32 %v3149, %v3175
    %v3178 = vsub.f32 %v3176, 0.6931472
    %v3179 = vsub.f32 %v3177, 0.6931472
    %v3180 = vpack.c.bf16 %v3179, %v3178
    %s3181 = scalar_lea.vmem %s7, 144
    %v3182 = vld [vmem:[%s3181] sm:$0xf]
    %v3183 = vld [vmem:[%s3181 + $0x4] sm:$0xf]
    %v3184 = vld [vmem:[%s3181 + $0x8] sm:$0xf]
    %v3185 = vld [vmem:[%s3181 + $0xc] sm:$0xf]
    %v3186 = vlaneseq
    %v3187 = vshrl.u32 %v3186, 7
    %v3188 = vsub.s32 3, %v3187
    %v3189 = vrot.slane %v1388, %v3188
    %v3194 = vunpack.c.l.b16 %v3182
    %v3195 = vunpack.c.l.b16 %v3183
    %v3196 = vunpack.c.l.b16 %v3184
    %v3197 = vunpack.c.l.b16 %v3185
    %v3198 = vpack.c.b16 %v3195, %v3194
    %v3199 = vpack.c.b16 %v3197, %v3196
    %v3203 = vsel %vm859, %v3180, 0
    %3205 = vmatprep.subr.bf16.mxu0 0
    %3206 = vmatpush1.bf16.msra.mxu0 %v3198
    %3207 = vmatprep.subr.bf16.mxu0 0
    %3208 = vmatpush1.bf16.msra.mxu0 %v3199
    %3209 = vmatprep.subr.bf16.mxu0 0
    %3210 = vmatpush1.bf16.msra.mxu0 0
    %3211 = vmatprep.subr.bf16.mxu0 0
    %3212 = vmatpush1.bf16.msra.mxu0 0
    %3213 = vmatprep.subr.bf16.mxu0 0
    %3214 = vmatpush1.bf16.msra.mxu0 0
    %3215 = vmatprep.subr.bf16.mxu0 0
    %3216 = vmatpush1.bf16.msra.mxu0 0
    %3217 = vmatprep.subr.bf16.mxu0 0
    %3218 = vmatpush1.bf16.msra.mxu0 0
    %3219 = vmatprep.subr.bf16.mxu0 0
    %3220 = vmatpush1.bf16.msra.mxu0 0
    %3221 = vmatprep.subr.bf16.mxu0 0
    %3222 = vmatpush1.bf16.msra.mxu0 0
    %3223 = vmatprep.subr.bf16.mxu0 0
    %3224 = vmatpush1.bf16.msra.mxu0 0
    %3225 = vmatprep.subr.bf16.mxu0 0
    %3226 = vmatpush1.bf16.msra.mxu0 0
    %3227 = vmatprep.subr.bf16.mxu0 0
    %3228 = vmatpush1.bf16.msra.mxu0 0
    %3229 = vmatprep.subr.bf16.mxu0 0
    %3230 = vmatpush1.bf16.msra.mxu0 0
    %3231 = vmatprep.subr.bf16.mxu0 0
    %3232 = vmatpush1.bf16.msra.mxu0 0
    %3233 = vmatprep.subr.bf16.mxu0 0
    %3234 = vmatpush1.bf16.msra.mxu0 0
    %3235 = vmatprep.subr.bf16.mxu0 0
    %3236 = vmatpush1.bf16.msra.mxu0 0
    %3237 = vmatprep.mubr.bf16.mxu0 0
    %3238 = vmatmul.mubr.bf16.gmra.mrb[0].mxu0 %v3203
    %v3239 = vpop.f32.mrb[0].mxu0
    %v3240 = vadd.f32 %v3189, %v3239
    %v3241 = vpop.f32.mrb[0].mxu0
    %v3242 = vpop.f32.mrb[0].mxu0
    %v3243 = vadd.f32 %v3189, %v3242
    %v3244 = vpop.f32.mrb[0].mxu0
    %3245 = vdwg.mxu0
    %v3246 = vadd.f32 %v2855, %v3240
    %v3247 = vadd.f32 %v2856, %v3243
    %v3248 = vpack.c.bf16 %v3247, %v3246
    %s3249 = scalar_lea.vmem %s7, 192
    %v3250 = vld [vmem:[%s3249] sm:$0xf]
    %v3251 = vld [vmem:[%s3249 + $0x4] sm:$0xf]
    %v3252 = vld [vmem:[%s3249 + $0x8] sm:$0xf]
    %v3253 = vld [vmem:[%s3249 + $0xc] sm:$0xf]
    %v3258 = vunpack.c.l.b16 %v3250
    %v3259 = vunpack.c.l.b16 %v3251
    %v3260 = vunpack.c.l.b16 %v3252
    %v3261 = vunpack.c.l.b16 %v3253
    %v3262 = vpack.c.b16 %v3259, %v3258
    %v3263 = vpack.c.b16 %v3261, %v3260
    %v3267 = vsel %vm859, %v3248, 0
    %3269 = vmatprep.subr.bf16.mxu0 0
    %3270 = vmatpush1.bf16.msra.mxu0 %v3262
    %3271 = vmatprep.subr.bf16.mxu0 0
    %3272 = vmatpush1.bf16.msra.mxu0 %v3263
    %3273 = vmatprep.subr.bf16.mxu0 0
    %3274 = vmatpush1.bf16.msra.mxu0 0
    %3275 = vmatprep.subr.bf16.mxu0 0
    %3276 = vmatpush1.bf16.msra.mxu0 0
    %3277 = vmatprep.subr.bf16.mxu0 0
    %3278 = vmatpush1.bf16.msra.mxu0 0
    %3279 = vmatprep.subr.bf16.mxu0 0
    %3280 = vmatpush1.bf16.msra.mxu0 0
    %3281 = vmatprep.subr.bf16.mxu0 0
    %3282 = vmatpush1.bf16.msra.mxu0 0
    %3283 = vmatprep.subr.bf16.mxu0 0
    %3284 = vmatpush1.bf16.msra.mxu0 0
    %3285 = vmatprep.subr.bf16.mxu0 0
    %3286 = vmatpush1.bf16.msra.mxu0 0
    %3287 = vmatprep.subr.bf16.mxu0 0
    %3288 = vmatpush1.bf16.msra.mxu0 0
    %3289 = vmatprep.subr.bf16.mxu0 0
    %3290 = vmatpush1.bf16.msra.mxu0 0
    %3291 = vmatprep.subr.bf16.mxu0 0
    %3292 = vmatpush1.bf16.msra.mxu0 0
    %3293 = vmatprep.subr.bf16.mxu0 0
    %3294 = vmatpush1.bf16.msra.mxu0 0
    %3295 = vmatprep.subr.bf16.mxu0 0
    %3296 = vmatpush1.bf16.msra.mxu0 0
    %3297 = vmatprep.subr.bf16.mxu0 0
    %3298 = vmatpush1.bf16.msra.mxu0 0
    %3299 = vmatprep.subr.bf16.mxu0 0
    %3300 = vmatpush1.bf16.msra.mxu0 0
    %3301 = vmatprep.mubr.bf16.mxu0 0
    %3302 = vmatmul.mubr.bf16.gmra.mrb[0].mxu0 %v3267
    %v3303 = vpop.f32.mrb[0].mxu0
    %v3304 = vadd.f32 0.0, %v3303
    %v3305 = vpop.f32.mrb[0].mxu0
    %v3306 = vpop.f32.mrb[0].mxu0
    %v3307 = vadd.f32 0.0, %v3306
    %v3308 = vpop.f32.mrb[0].mxu0
    %3309 = vdwg.mxu0
    %v3310 = vpack.c.bf16 %v3307, %v3304
    %3311 = vmatprep.subr.bf16.mxu0 0
    %3312 = vmatpush1.bf16.msra.mxu0 %v3310
    %3313 = vmatprep.subr.bf16.mxu0 0
    %3314 = vmatpush1.bf16.msra.mxu0 0
    %3315 = vmatprep.subr.bf16.mxu0 0
    %3316 = vmatpush1.bf16.msra.mxu0 0
    %3317 = vmatprep.subr.bf16.mxu0 0
    %3318 = vmatpush1.bf16.msra.mxu0 0
    %3319 = vmatprep.subr.bf16.mxu0 0
    %3320 = vmatpush1.bf16.msra.mxu0 0
    %3321 = vmatprep.subr.bf16.mxu0 0
    %3322 = vmatpush1.bf16.msra.mxu0 0
    %3323 = vmatprep.subr.bf16.mxu0 0
    %3324 = vmatpush1.bf16.msra.mxu0 0
    %3325 = vmatprep.subr.bf16.mxu0 0
    %3326 = vmatpush1.bf16.msra.mxu0 0
    %3327 = vmatprep.subr.bf16.mxu0 0
    %3328 = vmatpush1.bf16.msra.mxu0 0
    %3329 = vmatprep.subr.bf16.mxu0 0
    %3330 = vmatpush1.bf16.msra.mxu0 0
    %3331 = vmatprep.subr.bf16.mxu0 0
    %3332 = vmatpush1.bf16.msra.mxu0 0
    %3333 = vmatprep.subr.bf16.mxu0 0
    %3334 = vmatpush1.bf16.msra.mxu0 0
    %3335 = vmatprep.subr.bf16.mxu0 0
    %3336 = vmatpush1.bf16.msra.mxu0 0
    %3337 = vmatprep.subr.bf16.mxu0 0
    %3338 = vmatpush1.bf16.msra.mxu0 0
    %3339 = vmatprep.subr.bf16.mxu0 0
    %3340 = vmatpush1.bf16.msra.mxu0 0
    %3341 = vmatprep.subr.bf16.mxu0 0
    %3342 = vmatpush1.bf16.msra.mxu0 0
    %3343 = vmatprep.mubr.bf16.mxu0 0
    %3344 = vmatmul.mubr.bf16.gmra.mrb[0].mxu0 %v2506
    %v3345 = vpop.f32.mrb[0].mxu0
    %v3346 = vadd.f32 0.0, %v3345
    %v3347 = vpop.f32.mrb[0].mxu0
    %v3348 = vpop.f32.mrb[0].mxu0
    %v3349 = vadd.f32 0.0, %v3348
    %v3350 = vpop.f32.mrb[0].mxu0
    %3351 = vmatprep.mubr.bf16.mxu0 0
    %3352 = vmatmul.mubr.bf16.gmra.mrb[0].mxu0 %v2509
    %v3353 = vpop.f32.mrb[0].mxu0
    %v3354 = vadd.f32 0.0, %v3353
    %v3355 = vpop.f32.mrb[0].mxu0
    %v3356 = vpop.f32.mrb[0].mxu0
    %v3357 = vadd.f32 0.0, %v3356
    %v3358 = vpop.f32.mrb[0].mxu0
    %3359 = vmatprep.mubr.bf16.mxu0 0
    %3360 = vmatmul.mubr.bf16.gmra.mrb[0].mxu0 %v2512
    %v3361 = vpop.f32.mrb[0].mxu0
    %v3362 = vadd.f32 0.0, %v3361
    %v3363 = vpop.f32.mrb[0].mxu0
    %v3364 = vpop.f32.mrb[0].mxu0
    %v3365 = vadd.f32 0.0, %v3364
    %v3366 = vpop.f32.mrb[0].mxu0
    %3367 = vmatprep.mubr.bf16.mxu0 0
    %3368 = vmatmul.mubr.bf16.gmra.mrb[0].mxu0 %v2515
    %v3369 = vpop.f32.mrb[0].mxu0
    %v3370 = vadd.f32 0.0, %v3369
    %v3371 = vpop.f32.mrb[0].mxu0
    %v3372 = vpop.f32.mrb[0].mxu0
    %v3373 = vadd.f32 0.0, %v3372
    %v3374 = vpop.f32.mrb[0].mxu0
    %3375 = vmatprep.mubr.bf16.mxu0 0
    %3376 = vmatmul.mubr.bf16.gmra.mrb[0].mxu0 %v2518
    %v3377 = vpop.f32.mrb[0].mxu0
    %v3378 = vadd.f32 0.0, %v3377
    %v3379 = vpop.f32.mrb[0].mxu0
    %v3380 = vpop.f32.mrb[0].mxu0
    %v3381 = vadd.f32 0.0, %v3380
    %v3382 = vpop.f32.mrb[0].mxu0
    %3383 = vmatprep.mubr.bf16.mxu0 0
    %3384 = vmatmul.mubr.bf16.gmra.mrb[0].mxu0 %v2521
    %v3385 = vpop.f32.mrb[0].mxu0
    %v3386 = vadd.f32 0.0, %v3385
    %v3387 = vpop.f32.mrb[0].mxu0
    %v3388 = vpop.f32.mrb[0].mxu0
    %v3389 = vadd.f32 0.0, %v3388
    %v3390 = vpop.f32.mrb[0].mxu0
    %3391 = vmatprep.mubr.bf16.mxu0 0
    %3392 = vmatmul.mubr.bf16.gmra.mrb[0].mxu0 %v2524
    %v3393 = vpop.f32.mrb[0].mxu0
    %v3394 = vadd.f32 0.0, %v3393
    %v3395 = vpop.f32.mrb[0].mxu0
    %v3396 = vpop.f32.mrb[0].mxu0
    %v3397 = vadd.f32 0.0, %v3396
    %v3398 = vpop.f32.mrb[0].mxu0
    %3399 = vmatprep.mubr.bf16.mxu0 0
    %3400 = vmatmul.mubr.bf16.gmra.mrb[0].mxu0 %v2527
    %v3401 = vpop.f32.mrb[0].mxu0
    %v3402 = vadd.f32 0.0, %v3401
    %v3403 = vpop.f32.mrb[0].mxu0
    %v3404 = vpop.f32.mrb[0].mxu0
    %v3405 = vadd.f32 0.0, %v3404
    %v3406 = vpop.f32.mrb[0].mxu0
    %3407 = vdwg.mxu0
    %v3408 = vmul.f32 %v3346, %v2377
    %v3409 = vmul.f32 %v3349, %v2380
    %v3410 = vmul.f32 %v3354, %v2385
    %v3411 = vmul.f32 %v3357, %v2388
    %v3412 = vmul.f32 %v3362, %v2393
    %v3413 = vmul.f32 %v3365, %v2396
    %v3414 = vmul.f32 %v3370, %v2401
    %v3415 = vmul.f32 %v3373, %v2404
    %v3416 = vmul.f32 %v3378, %v2409
    %v3417 = vmul.f32 %v3381, %v2412
    %v3418 = vmul.f32 %v3386, %v2417
    %v3419 = vmul.f32 %v3389, %v2420
    %v3420 = vmul.f32 %v3394, %v2425
    %v3421 = vmul.f32 %v3397, %v2428
    %v3422 = vmul.f32 %v3402, %v2433
    %v3423 = vmul.f32 %v3405, %v2436
    %v3424 = vpack.c.bf16 %v3409, %v3408
    %v3425 = vpack.c.bf16 %v3411, %v3410
    %v3426 = vpack.c.bf16 %v3413, %v3412
    %v3427 = vpack.c.bf16 %v3415, %v3414
    %v3428 = vpack.c.bf16 %v3417, %v3416
    %v3429 = vpack.c.bf16 %v3419, %v3418
    %v3430 = vpack.c.bf16 %v3421, %v3420
    %v3431 = vpack.c.bf16 %v3423, %v3422
    %3432 = vmatprep.subr.bf16.mxu0 0
    %3433 = vmatpush1.bf16.msra.mxu0 %v3424
    %3434 = vmatprep.subr.bf16.mxu0 0
    %3435 = vmatpush1.bf16.msra.mxu0 %v3425
    %3436 = vmatprep.subr.bf16.mxu0 0
    %3437 = vmatpush1.bf16.msra.mxu0 %v3426
    %3438 = vmatprep.subr.bf16.mxu0 0
    %3439 = vmatpush1.bf16.msra.mxu0 %v3427
    %3440 = vmatprep.subr.bf16.mxu0 0
    %3441 = vmatpush1.bf16.msra.mxu0 %v3428
    %3442 = vmatprep.subr.bf16.mxu0 0
    %3443 = vmatpush1.bf16.msra.mxu0 %v3429
    %3444 = vmatprep.subr.bf16.mxu0 0
    %3445 = vmatpush1.bf16.msra.mxu0 %v3430
    %3446 = vmatprep.subr.bf16.mxu0 0
    %3447 = vmatpush1.bf16.msra.mxu0 %v3431
    %3448 = vmatprep.subr.bf16.mxu0 0
    %3449 = vmatpush1.bf16.msra.mxu0 0
    %3450 = vmatprep.subr.bf16.mxu0 0
    %3451 = vmatpush1.bf16.msra.mxu0 0
    %3452 = vmatprep.subr.bf16.mxu0 0
    %3453 = vmatpush1.bf16.msra.mxu0 0
    %3454 = vmatprep.subr.bf16.mxu0 0
    %3455 = vmatpush1.bf16.msra.mxu0 0
    %3456 = vmatprep.subr.bf16.mxu0 0
    %3457 = vmatpush1.bf16.msra.mxu0 0
    %3458 = vmatprep.subr.bf16.mxu0 0
    %3459 = vmatpush1.bf16.msra.mxu0 0
    %3460 = vmatprep.subr.bf16.mxu0 0
    %3461 = vmatpush1.bf16.msra.mxu0 0
    %3462 = vmatprep.subr.bf16.mxu0 0
    %3463 = vmatpush1.bf16.msra.mxu0 0
    %3464 = vmatprep.mubr.bf16.mxu0 0
    %3465 = vmatmul.mubr.bf16.gmra.mrb[0].mxu0 %v829
    %v3466 = vpop.f32.mrb[0].mxu0
    %v3467 = vadd.f32 0.0, %v3466
    %v3468 = vpop.f32.mrb[0].mxu0
    %v3469 = vpop.f32.mrb[0].mxu0
    %v3470 = vadd.f32 0.0, %v3469
    %v3471 = vpop.f32.mrb[0].mxu0
    %3472 = vdwg.mxu0
    %v3473 = vpack.c.bf16 %v3470, %v3467
    %s3474 = scalar_lea.vmem %s7, 208
    %v3475 = vld [vmem:[%s3474] sm:$0xf]
    %v3476 = vld [vmem:[%s3474 + $0x4] sm:$0xf]
    %v3477 = vld [vmem:[%s3474 + $0x8] sm:$0xf]
    %v3478 = vld [vmem:[%s3474 + $0xc] sm:$0xf]
    %v3479 = vlaneseq
    %v3480 = vshrl.u32 %v3479, 7
    %v3481 = vsub.s32 2, %v3480
    %v3482 = vrot.slane %v1914, %v3481
    %v3487 = vunpack.c.l.b16 %v3475
    %v3488 = vunpack.c.l.b16 %v3476
    %v3489 = vunpack.c.l.b16 %v3477
    %v3490 = vunpack.c.l.b16 %v3478
    %v3491 = vpack.c.b16 %v3488, %v3487
    %v3492 = vpack.c.b16 %v3490, %v3489
    %v3496 = vsel %vm859, %v3473, 0
    %3498 = vmatprep.subr.bf16.mxu0 0
    %3499 = vmatpush1.bf16.msra.mxu0 %v3491
    %3500 = vmatprep.subr.bf16.mxu0 0
    %3501 = vmatpush1.bf16.msra.mxu0 %v3492
    %3502 = vmatprep.subr.bf16.mxu0 0
    %3503 = vmatpush1.bf16.msra.mxu0 0
    %3504 = vmatprep.subr.bf16.mxu0 0
    %3505 = vmatpush1.bf16.msra.mxu0 0
    %3506 = vmatprep.subr.bf16.mxu0 0
    %3507 = vmatpush1.bf16.msra.mxu0 0
    %3508 = vmatprep.subr.bf16.mxu0 0
    %3509 = vmatpush1.bf16.msra.mxu0 0
    %3510 = vmatprep.subr.bf16.mxu0 0
    %3511 = vmatpush1.bf16.msra.mxu0 0
    %3512 = vmatprep.subr.bf16.mxu0 0
    %3513 = vmatpush1.bf16.msra.mxu0 0
    %3514 = vmatprep.subr.bf16.mxu0 0
    %3515 = vmatpush1.bf16.msra.mxu0 0
    %3516 = vmatprep.subr.bf16.mxu0 0
    %3517 = vmatpush1.bf16.msra.mxu0 0
    %3518 = vmatprep.subr.bf16.mxu0 0
    %3519 = vmatpush1.bf16.msra.mxu0 0
    %3520 = vmatprep.subr.bf16.mxu0 0
    %3521 = vmatpush1.bf16.msra.mxu0 0
    %3522 = vmatprep.subr.bf16.mxu0 0
    %3523 = vmatpush1.bf16.msra.mxu0 0
    %3524 = vmatprep.subr.bf16.mxu0 0
    %3525 = vmatpush1.bf16.msra.mxu0 0
    %3526 = vmatprep.subr.bf16.mxu0 0
    %3527 = vmatpush1.bf16.msra.mxu0 0
    %3528 = vmatprep.subr.bf16.mxu0 0
    %3529 = vmatpush1.bf16.msra.mxu0 0
    %3530 = vmatprep.mubr.bf16.mxu0 0
    %3531 = vmatmul.mubr.bf16.gmra.mrb[0].mxu0 %v3496
    %v3532 = vpop.f32.mrb[0].mxu0
    %v3533 = vadd.f32 %v3482, %v3532
    %v3534 = vpop.f32.mrb[0].mxu0
    %v3535 = vpop.f32.mrb[0].mxu0
    %v3536 = vadd.f32 %v3482, %v3535
    %v3537 = vpop.f32.mrb[0].mxu0
    %3538 = vdwg.mxu0
    %v3539 = vmax.f32 %v3533, 0.0
    %v3540 = vmax.f32 %v3536, 0.0
    %v3541 = vand.u32 2147483647, %v3533
    %v3542 = vand.u32 2147483647, %v3536
    %v3543 = vsub.f32 0.0, %v3541
    %v3544 = vsub.f32 0.0, %v3542
    %v3545 = vmul.f32 %v3543, 1.442695
    %v3546 = vpow.pop %v3545
    %v3547 = vmul.f32 %v3544, 1.442695
    %v3548 = vpow.pop %v3547
    %v3549 = vadd.f32 %v3546, 1.0
    %v3550 = vlog2.pop %v3549
    %v3551 = vmul.f32 %v3550, 0.6931472
    %v3552 = vmul.f32 -0.5, %v3546
    %v3553 = vadd.f32 %v3552, 1.0
    %v3554 = vmul.f32 %v3553, %v3546
    %v3555 = vand.u32 2147483647, %v3546
    %vm3556 = vcmp.lt.f32.partialorder %v3555, 0.0004427343
    %v3557 = vsel %vm3556, %v3554, %v3551
    %v3558 = vadd.f32 %v3548, 1.0
    %v3559 = vlog2.pop %v3558
    %v3560 = vmul.f32 %v3559, 0.6931472
    %v3561 = vmul.f32 -0.5, %v3548
    %v3562 = vadd.f32 %v3561, 1.0
    %v3563 = vmul.f32 %v3562, %v3548
    %v3564 = vand.u32 2147483647, %v3548
    %vm3565 = vcmp.lt.f32.partialorder %v3564, 0.0004427343
    %v3566 = vsel %vm3565, %v3563, %v3560
    %v3567 = vadd.f32 %v3539, %v3557
    %v3568 = vadd.f32 %v3540, %v3566
    %v3569 = vsub.f32 %v3567, 0.6931472
    %v3570 = vsub.f32 %v3568, 0.6931472
    %v3571 = vpack.c.bf16 %v3570, %v3569
    %s3572 = scalar_lea.vmem %s7, 224
    %v3573 = vld [vmem:[%s3572] sm:$0xf]
    %v3574 = vld [vmem:[%s3572 + $0x4] sm:$0xf]
    %v3575 = vld [vmem:[%s3572 + $0x8] sm:$0xf]
    %v3576 = vld [vmem:[%s3572 + $0xc] sm:$0xf]
    %v3577 = vlaneseq
    %v3578 = vshrl.u32 %v3577, 7
    %v3579 = vsub.s32 3, %v3578
    %v3580 = vrot.slane %v1914, %v3579
    %v3585 = vunpack.c.l.b16 %v3573
    %v3586 = vunpack.c.l.b16 %v3574
    %v3587 = vunpack.c.l.b16 %v3575
    %v3588 = vunpack.c.l.b16 %v3576
    %v3589 = vpack.c.b16 %v3586, %v3585
    %v3590 = vpack.c.b16 %v3588, %v3587
    %v3594 = vsel %vm859, %v3571, 0
    %3596 = vmatprep.subr.bf16.mxu0 0
    %3597 = vmatpush1.bf16.msra.mxu0 %v3589
    %3598 = vmatprep.subr.bf16.mxu0 0
    %3599 = vmatpush1.bf16.msra.mxu0 %v3590
    %3600 = vmatprep.subr.bf16.mxu0 0
    %3601 = vmatpush1.bf16.msra.mxu0 0
    %3602 = vmatprep.subr.bf16.mxu0 0
    %3603 = vmatpush1.bf16.msra.mxu0 0
    %3604 = vmatprep.subr.bf16.mxu0 0
    %3605 = vmatpush1.bf16.msra.mxu0 0
    %3606 = vmatprep.subr.bf16.mxu0 0
    %3607 = vmatpush1.bf16.msra.mxu0 0
    %3608 = vmatprep.subr.bf16.mxu0 0
    %3609 = vmatpush1.bf16.msra.mxu0 0
    %3610 = vmatprep.subr.bf16.mxu0 0
    %3611 = vmatpush1.bf16.msra.mxu0 0
    %3612 = vmatprep.subr.bf16.mxu0 0
    %3613 = vmatpush1.bf16.msra.mxu0 0
    %3614 = vmatprep.subr.bf16.mxu0 0
    %3615 = vmatpush1.bf16.msra.mxu0 0
    %3616 = vmatprep.subr.bf16.mxu0 0
    %3617 = vmatpush1.bf16.msra.mxu0 0
    %3618 = vmatprep.subr.bf16.mxu0 0
    %3619 = vmatpush1.bf16.msra.mxu0 0
    %3620 = vmatprep.subr.bf16.mxu0 0
    %3621 = vmatpush1.bf16.msra.mxu0 0
    %3622 = vmatprep.subr.bf16.mxu0 0
    %3623 = vmatpush1.bf16.msra.mxu0 0
    %3624 = vmatprep.subr.bf16.mxu0 0
    %3625 = vmatpush1.bf16.msra.mxu0 0
    %3626 = vmatprep.subr.bf16.mxu0 0
    %3627 = vmatpush1.bf16.msra.mxu0 0
    %3628 = vmatprep.mubr.bf16.mxu0 0
    %3629 = vmatmul.mubr.bf16.gmra.mrb[0].mxu0 %v3594
    %v3630 = vpop.f32.mrb[0].mxu0
    %v3631 = vadd.f32 %v3580, %v3630
    %v3632 = vpop.f32.mrb[0].mxu0
    %v3633 = vpop.f32.mrb[0].mxu0
    %v3634 = vadd.f32 %v3580, %v3633
    %v3635 = vpop.f32.mrb[0].mxu0
    %3636 = vdwg.mxu0
    %v3637 = vadd.f32 %v3246, %v3631
    %v3638 = vadd.f32 %v3247, %v3634
    %3639 = vst.msk [vmem:[#allocation2] sm:$0xff] %vm859, %v3637
    %3640 = vst.msk [vmem:[#allocation2 + $0x8] sm:$0xff] %vm859, %v3638
    // Predicated region
    $region38: #{tpu_custom_call.1} parent=1 // pred_check
      _
    $region39: #{tpu_custom_call.1} parent=1 // pred_check_branch
      %3642 = sbr.rel (0) target = $region41
    $region40: #{tpu_custom_call.1} parent=1 // pred_region
      %s3644 = ssub.s32 256, 256
      %3645 = vsyncadd [#allocation3], %s3644
      %s3646 = sshll.u32 [#allocation2], 4
      %s3647 = int_to_ptr.vmem [resolvable:$true] %s3646
      %3652 = dma.vmem_to_hbm [thread:$0]  %s3647, 256, %s9, [#allocation3], 128, 128, 8
    $region41: #{tpu_custom_call.1} parent=1 // pred_fallthru
      _
    // Predicated region
    $region42: #{tpu_custom_call.1} parent=1 // pred_check
      _
    $region43: #{tpu_custom_call.1} parent=1 // pred_check_branch
      %3654 = sbr.rel (0) target = $region45
    $region44: #{tpu_custom_call.1} parent=1 // pred_region
      %3655 = dma.done [#allocation3], 256
    $region45: #{tpu_custom_call.1} parent=1 // pred_fallthru
      _
    %3656 = vsyncpa [#allocation3], 1

</llo_original>
